<compile_context>
chip_gen: v6e
topology: v6e:2x2x1
jax: 0.10.0
libtpu: 0.0.40
codegen_flags: <defaults>
</compile_context>

<pallas_src>
import functools
import math

import jax
import jax.numpy as jnp
import numpy as np
from jax.experimental import pallas as pl
from jax.experimental.pallas import tpu as pltpu


_WEIGHT_ORDER = (
    "kg_w1", "kg_b1", "kg_w2", "kg_b2", "kg_w3", "kg_b3",
    "vg_w1", "vg_b1", "vg_w2", "vg_b2", "vg_w3", "vg_b3",
    "qg_w1", "qg_b1", "qg_w2", "qg_b2", "qg_w3", "qg_b3",
    "wq", "wk", "wv", "bq", "bk", "bv", "wo", "bo",
)
_MATMUL_WEIGHTS = ("kg_w1", "kg_w2", "kg_w3", "vg_w1", "vg_w2", "vg_w3",
                   "qg_w1", "qg_w2", "qg_w3", "wq", "wk", "wv", "wo")


# ----------------------------- kernel ---------------------------------------

def _softmax_last(x, approx):
    # f32 softmax (v5e has no bf16 VPU/EUP); divide -> EUP reciprocal.
    m = jnp.max(x, axis=-1, keepdims=True)
    e = jnp.exp(x - m)
    denom = jnp.sum(e, axis=-1, keepdims=True)
    return e * pl.reciprocal(denom, approx=approx)


def attention_block_kernel(
    # batch-fused inputs for this grid step (rows = batch_tile * seq_len)
    keys_ref, values_ref, queries_ref,
    # key_gen MLP   (weights (in, out); biases (1, out), f32)
    kg_w1, kg_b1, kg_w2, kg_b2, kg_w3, kg_b3,
    # val_gen MLP
    vg_w1, vg_b1, vg_w2, vg_b2, vg_w3, vg_b3,
    # query_gen MLP
    qg_w1, qg_b1, qg_w2, qg_b2, qg_w3, qg_b3,
    # multihead attention in-proj / out-proj (wq/bq pre-scaled by 1/sqrt(Dh))
    wq_ref, wk_ref, wv_ref, bq_ref, bk_ref, bv_ref, wo_ref, bo_ref,
    # output: (batch_tile * Lq, hidden_dim)
    out_ref,
    *, num_heads, batch_tile, approx_softmax):

    f32 = jnp.float32
    mdt = wq_ref.dtype          # MXU operand dtype (bf16 if weights pre-cast)

    def mm(x, w):
        # MXU matmul; activation cast to the (possibly bf16) weight dtype,
        # accumulation kept in f32.
        return jnp.dot(x.astype(w.dtype), w, preferred_element_type=f32)

    def mlp(x, w1, b1, w2, b2, w3, b3, softmax_out):
        h = jnp.maximum(mm(x, w1[...]) + b1[...], 0.0)
        h = jnp.maximum(mm(h, w2[...]) + b2[...], 0.0)
        h = mm(h, w3[...]) + b3[...]
        return _softmax_last(h, approx_softmax) if softmax_out else jnp.maximum(h, 0.0)

    # Three 3-layer generator MLPs on batch-fused 2-D operands.
    key = mlp(keys_ref[...], kg_w1, kg_b1, kg_w2, kg_b2, kg_w3, kg_b3, False)     # (Bt*Lk, E)
    value = mlp(values_ref[...], vg_w1, vg_b1, vg_w2, vg_b2, vg_w3, vg_b3, False)  # (Bt*Lk, E)
    query = mlp(queries_ref[...], qg_w1, qg_b1, qg_w2, qg_b2, qg_w3, qg_b3, True)  # (Bt*Lq, E)

    # MultiheadAttention in-projections (batch-fused 2-D matmuls).
    # 1/sqrt(head_dim) already folded into wq/bq at parameter-prep time.
    q = mm(query, wq_ref[...]) + bq_ref[...]
    k = mm(key, wk_ref[...]) + bk_ref[...]
    v = mm(value, wv_ref[...]) + bv_ref[...]

    E = q.shape[-1]
    Dh = E // num_heads
    lq = q.shape[0] // batch_tile
    lk = k.shape[0] // batch_tile

    def split_heads(x, L):
        # (Bt*L, E) -> (H*Bt, L, Dh): head-major batch axis for ONE batched
        # matmul over all heads (attention never mixes blocks, so batch
        # elements and heads can share the einsum batch dim).
        return jnp.concatenate(
            [x[:, h * Dh:(h + 1) * Dh].reshape(batch_tile, L, Dh)
             for h in range(num_heads)],
            axis=0)

    qh = split_heads(q, lq)       # (H*Bt, Lq, Dh)
    kh = split_heads(k, lk)       # (H*Bt, Lk, Dh)
    vh = split_heads(v, lk)       # (H*Bt, Lk, Dh)

    # All heads in a single batched score matmul (contract last dims directly,
    # no materialized transpose), f32 softmax, single batched P @ V matmul.
    s = jnp.einsum("bqd,bkd->bqk", qh.astype(mdt), kh.astype(mdt),
                   preferred_element_type=f32)                  # (H*Bt, Lq, Lk)
    p = _softmax_last(s, approx_softmax)
    o = jnp.einsum("bqk,bkd->bqd", p.astype(mdt), vh.astype(mdt),
                   preferred_element_type=f32)                  # (H*Bt, Lq, Dh)

    # Reassemble head outputs into (Bt*Lq, E) and do ONE full out-projection
    # (K = hidden contraction) instead of per-head K=Dh matmuls + serial adds.
    o_cat = jnp.concatenate(
        [o[h * batch_tile:(h + 1) * batch_tile] for h in range(num_heads)],
        axis=-1)                                                # (Bt, Lq, E)
    out_ref[...] = mm(o_cat.reshape(batch_tile * lq, E), wo_ref[...]) + bo_ref[...]


# ----------------------------- param prep ------------------------------------

def prepare_attention_params(params, num_heads, matmul_dtype=jnp.float32):
    """One-time constant transforms for the kernel:
      * fold 1/sqrt(head_dim) into wq / bq,
      * optionally store MXU-facing weight matrices in bf16 (biases stay f32,
        so all softmax/bias/ReLU math remains f32 — required on v5e)."""
    p = dict(params)
    hidden = p["wo"].shape[0]
    scale = 1.0 / math.sqrt(hidden // num_heads)
    p["wq"] = p["wq"] * scale
    p["bq"] = p["bq"] * scale
    if np.dtype(matmul_dtype) != np.dtype(np.float32):
        for name in _MATMUL_WEIGHTS:
            p[name] = p[name].astype(matmul_dtype)
    return p


# ----------------------------- wrapper ---------------------------------------

def attention_block(keys, values, queries, params, num_heads,
                    batch_tile=None, weight_buffer_count=None,
                    vmem_limit_bytes=None, approx_softmax=False):
    """`params` must come from prepare_attention_params (scale pre-folded)."""
    B, Lk, key_dim = keys.shape
    _, Lq, query_dim = queries.shape
    val_dim = values.shape[-1]
    hidden_dim = params["wo"].shape[-1]
    assert hidden_dim % num_heads == 0, "hidden_dim must divide by num_heads"

    # Default batch_tile: largest divisor of B giving >= 2 grid steps (v7x dual
    # TC sharding + DMA/compute pipelining) while keeping row tiles a multiple
    # of 8 (Mosaic (8,128) rule).  Falls back to the whole batch otherwise.
    if batch_tile is None:
        batch_tile = B
        for cand in range(B // 2, 0, -1):
            if B % cand == 0 and (cand * Lk) % 8 == 0 and (cand * Lq) % 8 == 0:
                batch_tile = cand
                break
    assert B % batch_tile == 0, "batch_tile must divide B"
    num_tiles = B // batch_tile
    if num_tiles > 1:
        assert (batch_tile * Lk) % 8 == 0 and (batch_tile * Lq) % 8 == 0, (
            "sub-batch tiles need row counts that are multiples of 8 "
            "(Mosaic (8,128) block-shape rule)")

    # Flatten batch into rows wrapper-side (free) so the kernel sees
    # sublane-dense (Bt*L, D) operands and a lane/sublane-dense output slab.
    keys2 = keys.reshape(B * Lk, key_dim)
    values2 = values.reshape(B * Lk, val_dim)
    queries2 = queries.reshape(B * Lq, query_dim)

    weights = [params[name] for name in _WEIGHT_ORDER]

    def _full_spec(arr):
        """Whole weight resident in VMEM; same block index every grid step.
        weight_buffer_count=1 (pl.Buffered) is the v7x option to drop the
        redundant double-buffering of these constant blocks."""
        nd = arr.ndim
        idx = lambda b, _nd=nd: (0,) * _nd
        if weight_buffer_count is None:
            return pl.BlockSpec(arr.shape, idx)
        return pl.BlockSpec(arr.shape, idx,
                            pipeline_mode=pl.Buffered(weight_buffer_count))

    in_specs = [
        pl.BlockSpec((batch_tile * Lk, key_dim), lambda b: (b, 0)),
        pl.BlockSpec((batch_tile * Lk, val_dim), lambda b: (b, 0)),
        pl.BlockSpec((batch_tile * Lq, query_dim), lambda b: (b, 0)),
    ] + [_full_spec(w) for w in weights]

    out_spec = pl.BlockSpec((batch_tile * Lq, hidden_dim), lambda b: (b, 0))

    kernel = functools.partial(attention_block_kernel,
                               num_heads=num_heads,
                               batch_tile=batch_tile,
                               approx_softmax=approx_softmax)

    cp_kwargs = dict(dimension_semantics=("parallel",))
    if vmem_limit_bytes is not None:
        # Needed on v6e/v5e (and especially v7x, 64 MiB physical) when
        # hidden/attnFCdim scale past the default scoped-VMEM limit.
        cp_kwargs["vmem_limit_bytes"] = vmem_limit_bytes

    out2d = pl.pallas_call(
        kernel,
        out_shape=jax.ShapeDtypeStruct((B * Lq, hidden_dim), jnp.float32),
        grid_spec=pltpu.PrefetchScalarGridSpec(
            num_scalar_prefetch=0,
            grid=(num_tiles,),
            in_specs=in_specs,
            out_specs=out_spec,
        ),
        compiler_params=pltpu.CompilerParams(**cp_kwargs),
    )(keys2, values2, queries2, *weights)

    return out2d.reshape(B, Lq, hidden_dim)


# ----------------------------- pure-JAX reference ----------------------------

def attention_block_ref(keys, values, queries, params, num_heads):
    def mlp(x, w1, b1, w2, b2, w3, b3, softmax_out):
        h = jnp.maximum(x @ w1 + b1, 0.0)
        h = jnp.maximum(h @ w2 + b2, 0.0)
        h = h @ w3 + b3
        return jax.nn.softmax(h, axis=-1) if softmax_out else jnp.maximum(h, 0.0)

    key = mlp(keys, params["kg_w1"], params["kg_b1"], params["kg_w2"],
              params["kg_b2"], params["kg_w3"], params["kg_b3"], False)
    value = mlp(values, params["vg_w1"], params["vg_b1"], params["vg_w2"],
                params["vg_b2"], params["vg_w3"], params["vg_b3"], False)
    query = mlp(queries, params["qg_w1"], params["qg_b1"], params["qg_w2"],
                params["qg_b2"], params["qg_w3"], params["qg_b3"], True)

    q = query @ params["wq"] + params["bq"]
    k = key @ params["wk"] + params["bk"]
    v = value @ params["wv"] + params["bv"]

    B, Lq, E = q.shape
    Lk = k.shape[1]
    Dh = E // num_heads
    qh = q.reshape(B, Lq, num_heads, Dh).transpose(0, 2, 1, 3)
    kh = k.reshape(B, Lk, num_heads, Dh).transpose(0, 2, 1, 3)
    vh = v.reshape(B, Lk, num_heads, Dh).transpose(0, 2, 1, 3)
    s = jnp.einsum("bhqd,bhkd->bhqk", qh, kh) / math.sqrt(Dh)
    p = jax.nn.softmax(s, axis=-1)
    o = jnp.einsum("bhqk,bhkd->bhqd", p, vh)
    o = o.transpose(0, 2, 1, 3).reshape(B, Lq, E)
    return o @ params["wo"] + params["bo"]


# ----------------------------- main ------------------------------------------

def _init_params(key_dim, val_dim, query_dim, hidden_dim, attnFCdim, rng):
    """Deterministic synthetic weights; Linear weights stored as (in, out)."""
    params = {}

    def lin(r, fan_in, fan_out):
        kw, kb = jax.random.split(r)
        bound = 1.0 / math.sqrt(fan_in)
        w = jax.random.uniform(kw, (fan_in, fan_out), jnp.float32, -bound, bound)
        b = jax.random.uniform(kb, (1, fan_out), jnp.float32, -bound, bound)
        return w, b

    names_dims = [("kg", key_dim), ("vg", val_dim), ("qg", query_dim)]
    keys = jax.random.split(rng, 16)
    idx = 0
    for prefix, in_dim in names_dims:
        params[f"{prefix}_w1"], params[f"{prefix}_b1"] = lin(keys[idx], in_dim, attnFCdim); idx += 1
        params[f"{prefix}_w2"], params[f"{prefix}_b2"] = lin(keys[idx], attnFCdim, attnFCdim); idx += 1
        params[f"{prefix}_w3"], params[f"{prefix}_b3"] = lin(keys[idx], attnFCdim, hidden_dim); idx += 1

    # MultiheadAttention: in_proj (q,k,v) and out_proj, all hidden_dim x hidden_dim.
    params["wq"], params["bq"] = lin(keys[idx], hidden_dim, hidden_dim); idx += 1
    params["wk"], params["bk"] = lin(keys[idx], hidden_dim, hidden_dim); idx += 1
    params["wv"], params["bv"] = lin(keys[idx], hidden_dim, hidden_dim); idx += 1
    params["wo"], params["bo"] = lin(keys[idx], hidden_dim, hidden_dim); idx += 1
    return params


if __name__ == "__main__":
    B = 2
    Lk = 8          # key/value sequence length
    Lq = 8          # query sequence length
    key_dim, val_dim, query_dim = 6, 5, 7
    hidden_dim, num_heads, attnFCdim = 32, 4, 16
    # NOTE: for real configs keep hidden_dim / attnFCdim multiples of 128 so
    # every store is lane-dense (unmasked vst) and the MXU lanes are full.

    root = jax.random.PRNGKey(0)
    k_in, k_par = jax.random.split(root)
    kk, kv, kq = jax.random.split(k_in, 3)

    keys_x = jax.random.normal(kk, (B, Lk, key_dim), jnp.float32)
    values_x = jax.random.normal(kv, (B, Lk, val_dim), jnp.float32)
    queries_x = jax.random.normal(kq, (B, Lq, query_dim), jnp.float32)

    params = _init_params(key_dim, val_dim, query_dim, hidden_dim, attnFCdim, k_par)

    # Kernel-side params: 1/sqrt(head_dim) folded into wq/bq once.  For large
    # shapes pass matmul_dtype=jnp.bfloat16 here (bf16 MXU, f32 accumulation);
    # default f32 keeps the tight numerical check below.
    kparams = prepare_attention_params(params, num_heads, matmul_dtype=jnp.float32)

    out = attention_block(keys_x, values_x, queries_x, kparams, num_heads)
    out = jax.block_until_ready(out)

    ref = attention_block_ref(keys_x, values_x, queries_x, params, num_heads)
    np.testing.assert_allclose(np.asarray(out), np.asarray(ref), rtol=1e-4, atol=1e-5)

    print("KERNEL_OK")
</pallas_src>

<mosaic_0001>
module attributes {stable_mosaic.version = 11 : i64} {
  func.func @attention_block_kernel(%arg0: i32, %arg1: memref<8x6xf32, #tpu.memory_space<vmem>>, %arg2: memref<8x5xf32, #tpu.memory_space<vmem>>, %arg3: memref<8x7xf32, #tpu.memory_space<vmem>>, %arg4: memref<6x16xf32, #tpu.memory_space<vmem>>, %arg5: memref<1x16xf32, #tpu.memory_space<vmem>>, %arg6: memref<16x16xf32, #tpu.memory_space<vmem>>, %arg7: memref<1x16xf32, #tpu.memory_space<vmem>>, %arg8: memref<16x32xf32, #tpu.memory_space<vmem>>, %arg9: memref<1x32xf32, #tpu.memory_space<vmem>>, %arg10: memref<5x16xf32, #tpu.memory_space<vmem>>, %arg11: memref<1x16xf32, #tpu.memory_space<vmem>>, %arg12: memref<16x16xf32, #tpu.memory_space<vmem>>, %arg13: memref<1x16xf32, #tpu.memory_space<vmem>>, %arg14: memref<16x32xf32, #tpu.memory_space<vmem>>, %arg15: memref<1x32xf32, #tpu.memory_space<vmem>>, %arg16: memref<7x16xf32, #tpu.memory_space<vmem>>, %arg17: memref<1x16xf32, #tpu.memory_space<vmem>>, %arg18: memref<16x16xf32, #tpu.memory_space<vmem>>, %arg19: memref<1x16xf32, #tpu.memory_space<vmem>>, %arg20: memref<16x32xf32, #tpu.memory_space<vmem>>, %arg21: memref<1x32xf32, #tpu.memory_space<vmem>>, %arg22: memref<32x32xf32, #tpu.memory_space<vmem>>, %arg23: memref<32x32xf32, #tpu.memory_space<vmem>>, %arg24: memref<32x32xf32, #tpu.memory_space<vmem>>, %arg25: memref<1x32xf32, #tpu.memory_space<vmem>>, %arg26: memref<1x32xf32, #tpu.memory_space<vmem>>, %arg27: memref<1x32xf32, #tpu.memory_space<vmem>>, %arg28: memref<32x32xf32, #tpu.memory_space<vmem>>, %arg29: memref<1x32xf32, #tpu.memory_space<vmem>>, %arg30: memref<8x32xf32, #tpu.memory_space<vmem>>) attributes {dimension_semantics = [#tpu.dimension_semantics<parallel>], iteration_bounds = array<i64: 2>, scalar_prefetch = 0 : i64, scratch_operands = 0 : i64, tpu.core_type = #tpu.core_type<tc>, window_params = [{transform_indices = @transform_0, window_bounds = array<i64: 8, 6>}, {transform_indices = @transform_1, window_bounds = array<i64: 8, 5>}, {transform_indices = @transform_2, window_bounds = array<i64: 8, 7>}, {pipeline_mode = #tpu.pipeline_mode<synchronous>, transform_indices = @transform_3, window_bounds = array<i64: 6, 16>}, {pipeline_mode = #tpu.pipeline_mode<synchronous>, transform_indices = @transform_4, window_bounds = array<i64: 1, 16>}, {pipeline_mode = #tpu.pipeline_mode<synchronous>, transform_indices = @transform_5, window_bounds = array<i64: 16, 16>}, {pipeline_mode = #tpu.pipeline_mode<synchronous>, transform_indices = @transform_6, window_bounds = array<i64: 1, 16>}, {pipeline_mode = #tpu.pipeline_mode<synchronous>, transform_indices = @transform_7, window_bounds = array<i64: 16, 32>}, {pipeline_mode = #tpu.pipeline_mode<synchronous>, transform_indices = @transform_8, window_bounds = array<i64: 1, 32>}, {pipeline_mode = #tpu.pipeline_mode<synchronous>, transform_indices = @transform_9, window_bounds = array<i64: 5, 16>}, {pipeline_mode = #tpu.pipeline_mode<synchronous>, transform_indices = @transform_10, window_bounds = array<i64: 1, 16>}, {pipeline_mode = #tpu.pipeline_mode<synchronous>, transform_indices = @transform_11, window_bounds = array<i64: 16, 16>}, {pipeline_mode = #tpu.pipeline_mode<synchronous>, transform_indices = @transform_12, window_bounds = array<i64: 1, 16>}, {pipeline_mode = #tpu.pipeline_mode<synchronous>, transform_indices = @transform_13, window_bounds = array<i64: 16, 32>}, {pipeline_mode = #tpu.pipeline_mode<synchronous>, transform_indices = @transform_14, window_bounds = array<i64: 1, 32>}, {pipeline_mode = #tpu.pipeline_mode<synchronous>, transform_indices = @transform_15, window_bounds = array<i64: 7, 16>}, {pipeline_mode = #tpu.pipeline_mode<synchronous>, transform_indices = @transform_16, window_bounds = array<i64: 1, 16>}, {pipeline_mode = #tpu.pipeline_mode<synchronous>, transform_indices = @transform_17, window_bounds = array<i64: 16, 16>}, {pipeline_mode = #tpu.pipeline_mode<synchronous>, transform_indices = @transform_18, window_bounds = array<i64: 1, 16>}, {pipeline_mode = #tpu.pipeline_mode<synchronous>, transform_indices = @transform_19, window_bounds = array<i64: 16, 32>}, {pipeline_mode = #tpu.pipeline_mode<synchronous>, transform_indices = @transform_20, window_bounds = array<i64: 1, 32>}, {pipeline_mode = #tpu.pipeline_mode<synchronous>, transform_indices = @transform_21, window_bounds = array<i64: 32, 32>}, {pipeline_mode = #tpu.pipeline_mode<synchronous>, transform_indices = @transform_22, window_bounds = array<i64: 32, 32>}, {pipeline_mode = #tpu.pipeline_mode<synchronous>, transform_indices = @transform_23, window_bounds = array<i64: 32, 32>}, {pipeline_mode = #tpu.pipeline_mode<synchronous>, transform_indices = @transform_24, window_bounds = array<i64: 1, 32>}, {pipeline_mode = #tpu.pipeline_mode<synchronous>, transform_indices = @transform_25, window_bounds = array<i64: 1, 32>}, {pipeline_mode = #tpu.pipeline_mode<synchronous>, transform_indices = @transform_26, window_bounds = array<i64: 1, 32>}, {pipeline_mode = #tpu.pipeline_mode<synchronous>, transform_indices = @transform_27, window_bounds = array<i64: 32, 32>}, {pipeline_mode = #tpu.pipeline_mode<synchronous>, transform_indices = @transform_28, window_bounds = array<i64: 1, 32>}, {transform_indices = @transform_29, window_bounds = array<i64: 8, 32>}]} {
    %c0 = arith.constant 0 : index
    %c0_0 = arith.constant 0 : index
    %0 = vector.load %arg1[%c0, %c0_0] : memref<8x6xf32, #tpu.memory_space<vmem>>, vector<8x6xf32>
    %c0_1 = arith.constant 0 : index
    %c0_2 = arith.constant 0 : index
    %1 = vector.load %arg4[%c0_1, %c0_2] : memref<6x16xf32, #tpu.memory_space<vmem>>, vector<6x16xf32>
    %cst = arith.constant dense<0.000000e+00> : vector<8x16xf32>
    %2 = tpu.matmul %0, %1, %cst {dimension_numbers = #tpu.dot_dimension_numbers<[1], [0], [0], [1], [0, 0, 1, 1], [], []>} : vector<8x6xf32>, vector<6x16xf32>, vector<8x16xf32> -> vector<8x16xf32>
    %c0_3 = arith.constant 0 : index
    %c0_4 = arith.constant 0 : index
    %3 = vector.load %arg5[%c0_3, %c0_4] : memref<1x16xf32, #tpu.memory_space<vmem>>, vector<1x16xf32>
    %4 = vector.broadcast %3 : vector<1x16xf32> to vector<8x16xf32>
    %5 = arith.addf %2, %4 : vector<8x16xf32>
    %cst_5 = arith.constant 0.000000e+00 : f32
    %6 = vector.broadcast %cst_5 : f32 to vector<8x16xf32>
    %7 = arith.maximumf %5, %6 : vector<8x16xf32>
    %c0_6 = arith.constant 0 : index
    %c0_7 = arith.constant 0 : index
    %8 = vector.load %arg6[%c0_6, %c0_7] : memref<16x16xf32, #tpu.memory_space<vmem>>, vector<16x16xf32>
    %cst_8 = arith.constant dense<0.000000e+00> : vector<8x16xf32>
    %9 = tpu.matmul %7, %8, %cst_8 {dimension_numbers = #tpu.dot_dimension_numbers<[1], [0], [0], [1], [0, 0, 1, 1], [], []>} : vector<8x16xf32>, vector<16x16xf32>, vector<8x16xf32> -> vector<8x16xf32>
    %c0_9 = arith.constant 0 : index
    %c0_10 = arith.constant 0 : index
    %10 = vector.load %arg7[%c0_9, %c0_10] : memref<1x16xf32, #tpu.memory_space<vmem>>, vector<1x16xf32>
    %11 = vector.broadcast %10 : vector<1x16xf32> to vector<8x16xf32>
    %12 = arith.addf %9, %11 : vector<8x16xf32>
    %cst_11 = arith.constant 0.000000e+00 : f32
    %13 = vector.broadcast %cst_11 : f32 to vector<8x16xf32>
    %14 = arith.maximumf %12, %13 : vector<8x16xf32>
    %c0_12 = arith.constant 0 : index
    %c0_13 = arith.constant 0 : index
    %15 = vector.load %arg8[%c0_12, %c0_13] : memref<16x32xf32, #tpu.memory_space<vmem>>, vector<16x32xf32>
    %cst_14 = arith.constant dense<0.000000e+00> : vector<8x32xf32>
    %16 = tpu.matmul %14, %15, %cst_14 {dimension_numbers = #tpu.dot_dimension_numbers<[1], [0], [0], [1], [0, 0, 1, 1], [], []>} : vector<8x16xf32>, vector<16x32xf32>, vector<8x32xf32> -> vector<8x32xf32>
    %c0_15 = arith.constant 0 : index
    %c0_16 = arith.constant 0 : index
    %17 = vector.load %arg9[%c0_15, %c0_16] : memref<1x32xf32, #tpu.memory_space<vmem>>, vector<1x32xf32>
    %18 = vector.broadcast %17 : vector<1x32xf32> to vector<8x32xf32>
    %19 = arith.addf %16, %18 : vector<8x32xf32>
    %cst_17 = arith.constant 0.000000e+00 : f32
    %20 = vector.broadcast %cst_17 : f32 to vector<8x32xf32>
    %21 = arith.maximumf %19, %20 : vector<8x32xf32>
    %c0_18 = arith.constant 0 : index
    %c0_19 = arith.constant 0 : index
    %22 = vector.load %arg2[%c0_18, %c0_19] : memref<8x5xf32, #tpu.memory_space<vmem>>, vector<8x5xf32>
    %c0_20 = arith.constant 0 : index
    %c0_21 = arith.constant 0 : index
    %23 = vector.load %arg10[%c0_20, %c0_21] : memref<5x16xf32, #tpu.memory_space<vmem>>, vector<5x16xf32>
    %cst_22 = arith.constant dense<0.000000e+00> : vector<8x16xf32>
    %24 = tpu.matmul %22, %23, %cst_22 {dimension_numbers = #tpu.dot_dimension_numbers<[1], [0], [0], [1], [0, 0, 1, 1], [], []>} : vector<8x5xf32>, vector<5x16xf32>, vector<8x16xf32> -> vector<8x16xf32>
    %c0_23 = arith.constant 0 : index
    %c0_24 = arith.constant 0 : index
    %25 = vector.load %arg11[%c0_23, %c0_24] : memref<1x16xf32, #tpu.memory_space<vmem>>, vector<1x16xf32>
    %26 = vector.broadcast %25 : vector<1x16xf32> to vector<8x16xf32>
    %27 = arith.addf %24, %26 : vector<8x16xf32>
    %cst_25 = arith.constant 0.000000e+00 : f32
    %28 = vector.broadcast %cst_25 : f32 to vector<8x16xf32>
    %29 = arith.maximumf %27, %28 : vector<8x16xf32>
    %c0_26 = arith.constant 0 : index
    %c0_27 = arith.constant 0 : index
    %30 = vector.load %arg12[%c0_26, %c0_27] : memref<16x16xf32, #tpu.memory_space<vmem>>, vector<16x16xf32>
    %cst_28 = arith.constant dense<0.000000e+00> : vector<8x16xf32>
    %31 = tpu.matmul %29, %30, %cst_28 {dimension_numbers = #tpu.dot_dimension_numbers<[1], [0], [0], [1], [0, 0, 1, 1], [], []>} : vector<8x16xf32>, vector<16x16xf32>, vector<8x16xf32> -> vector<8x16xf32>
    %c0_29 = arith.constant 0 : index
    %c0_30 = arith.constant 0 : index
    %32 = vector.load %arg13[%c0_29, %c0_30] : memref<1x16xf32, #tpu.memory_space<vmem>>, vector<1x16xf32>
    %33 = vector.broadcast %32 : vector<1x16xf32> to vector<8x16xf32>
    %34 = arith.addf %31, %33 : vector<8x16xf32>
    %cst_31 = arith.constant 0.000000e+00 : f32
    %35 = vector.broadcast %cst_31 : f32 to vector<8x16xf32>
    %36 = arith.maximumf %34, %35 : vector<8x16xf32>
    %c0_32 = arith.constant 0 : index
    %c0_33 = arith.constant 0 : index
    %37 = vector.load %arg14[%c0_32, %c0_33] : memref<16x32xf32, #tpu.memory_space<vmem>>, vector<16x32xf32>
    %cst_34 = arith.constant dense<0.000000e+00> : vector<8x32xf32>
    %38 = tpu.matmul %36, %37, %cst_34 {dimension_numbers = #tpu.dot_dimension_numbers<[1], [0], [0], [1], [0, 0, 1, 1], [], []>} : vector<8x16xf32>, vector<16x32xf32>, vector<8x32xf32> -> vector<8x32xf32>
    %c0_35 = arith.constant 0 : index
    %c0_36 = arith.constant 0 : index
    %39 = vector.load %arg15[%c0_35, %c0_36] : memref<1x32xf32, #tpu.memory_space<vmem>>, vector<1x32xf32>
    %40 = vector.broadcast %39 : vector<1x32xf32> to vector<8x32xf32>
    %41 = arith.addf %38, %40 : vector<8x32xf32>
    %cst_37 = arith.constant 0.000000e+00 : f32
    %42 = vector.broadcast %cst_37 : f32 to vector<8x32xf32>
    %43 = arith.maximumf %41, %42 : vector<8x32xf32>
    %c0_38 = arith.constant 0 : index
    %c0_39 = arith.constant 0 : index
    %44 = vector.load %arg3[%c0_38, %c0_39] : memref<8x7xf32, #tpu.memory_space<vmem>>, vector<8x7xf32>
    %c0_40 = arith.constant 0 : index
    %c0_41 = arith.constant 0 : index
    %45 = vector.load %arg16[%c0_40, %c0_41] : memref<7x16xf32, #tpu.memory_space<vmem>>, vector<7x16xf32>
    %cst_42 = arith.constant dense<0.000000e+00> : vector<8x16xf32>
    %46 = tpu.matmul %44, %45, %cst_42 {dimension_numbers = #tpu.dot_dimension_numbers<[1], [0], [0], [1], [0, 0, 1, 1], [], []>} : vector<8x7xf32>, vector<7x16xf32>, vector<8x16xf32> -> vector<8x16xf32>
    %c0_43 = arith.constant 0 : index
    %c0_44 = arith.constant 0 : index
    %47 = vector.load %arg17[%c0_43, %c0_44] : memref<1x16xf32, #tpu.memory_space<vmem>>, vector<1x16xf32>
    %48 = vector.broadcast %47 : vector<1x16xf32> to vector<8x16xf32>
    %49 = arith.addf %46, %48 : vector<8x16xf32>
    %cst_45 = arith.constant 0.000000e+00 : f32
    %50 = vector.broadcast %cst_45 : f32 to vector<8x16xf32>
    %51 = arith.maximumf %49, %50 : vector<8x16xf32>
    %c0_46 = arith.constant 0 : index
    %c0_47 = arith.constant 0 : index
    %52 = vector.load %arg18[%c0_46, %c0_47] : memref<16x16xf32, #tpu.memory_space<vmem>>, vector<16x16xf32>
    %cst_48 = arith.constant dense<0.000000e+00> : vector<8x16xf32>
    %53 = tpu.matmul %51, %52, %cst_48 {dimension_numbers = #tpu.dot_dimension_numbers<[1], [0], [0], [1], [0, 0, 1, 1], [], []>} : vector<8x16xf32>, vector<16x16xf32>, vector<8x16xf32> -> vector<8x16xf32>
    %c0_49 = arith.constant 0 : index
    %c0_50 = arith.constant 0 : index
    %54 = vector.load %arg19[%c0_49, %c0_50] : memref<1x16xf32, #tpu.memory_space<vmem>>, vector<1x16xf32>
    %55 = vector.broadcast %54 : vector<1x16xf32> to vector<8x16xf32>
    %56 = arith.addf %53, %55 : vector<8x16xf32>
    %cst_51 = arith.constant 0.000000e+00 : f32
    %57 = vector.broadcast %cst_51 : f32 to vector<8x16xf32>
    %58 = arith.maximumf %56, %57 : vector<8x16xf32>
    %c0_52 = arith.constant 0 : index
    %c0_53 = arith.constant 0 : index
    %59 = vector.load %arg20[%c0_52, %c0_53] : memref<16x32xf32, #tpu.memory_space<vmem>>, vector<16x32xf32>
    %cst_54 = arith.constant dense<0.000000e+00> : vector<8x32xf32>
    %60 = tpu.matmul %58, %59, %cst_54 {dimension_numbers = #tpu.dot_dimension_numbers<[1], [0], [0], [1], [0, 0, 1, 1], [], []>} : vector<8x16xf32>, vector<16x32xf32>, vector<8x32xf32> -> vector<8x32xf32>
    %c0_55 = arith.constant 0 : index
    %c0_56 = arith.constant 0 : index
    %61 = vector.load %arg21[%c0_55, %c0_56] : memref<1x32xf32, #tpu.memory_space<vmem>>, vector<1x32xf32>
    %62 = vector.broadcast %61 : vector<1x32xf32> to vector<8x32xf32>
    %63 = arith.addf %60, %62 : vector<8x32xf32>
    %cst_57 = arith.constant dense<0xFF800000> : vector<8xf32>
    %64 = vector.multi_reduction <maximumf>, %63, %cst_57 [1] : vector<8x32xf32> to vector<8xf32>
    %65 = vector.shape_cast %64 : vector<8xf32> to vector<8x1xf32>
    %66 = vector.broadcast %65 : vector<8x1xf32> to vector<8x32xf32>
    %67 = arith.subf %63, %66 : vector<8x32xf32>
    %68 = math.exp %67 : vector<8x32xf32>
    %cst_58 = arith.constant dense<0.000000e+00> : vector<8xf32>
    %69 = vector.multi_reduction <add>, %68, %cst_58 [1] : vector<8x32xf32> to vector<8xf32>
    %70 = vector.shape_cast %69 : vector<8xf32> to vector<8x1xf32>
    %71 = tpu.reciprocal %70 : vector<8x1xf32> -> vector<8x1xf32>
    %72 = vector.broadcast %71 : vector<8x1xf32> to vector<8x32xf32>
    %73 = arith.mulf %68, %72 : vector<8x32xf32>
    %c0_59 = arith.constant 0 : index
    %c0_60 = arith.constant 0 : index
    %74 = vector.load %arg22[%c0_59, %c0_60] : memref<32x32xf32, #tpu.memory_space<vmem>>, vector<32x32xf32>
    %cst_61 = arith.constant dense<0.000000e+00> : vector<8x32xf32>
    %75 = tpu.matmul %73, %74, %cst_61 {dimension_numbers = #tpu.dot_dimension_numbers<[1], [0], [0], [1], [0, 0, 1, 1], [], []>} : vector<8x32xf32>, vector<32x32xf32>, vector<8x32xf32> -> vector<8x32xf32>
    %c0_62 = arith.constant 0 : index
    %c0_63 = arith.constant 0 : index
    %76 = vector.load %arg25[%c0_62, %c0_63] : memref<1x32xf32, #tpu.memory_space<vmem>>, vector<1x32xf32>
    %77 = vector.broadcast %76 : vector<1x32xf32> to vector<8x32xf32>
    %78 = arith.addf %75, %77 : vector<8x32xf32>
    %c0_64 = arith.constant 0 : index
    %c0_65 = arith.constant 0 : index
    %79 = vector.load %arg23[%c0_64, %c0_65] : memref<32x32xf32, #tpu.memory_space<vmem>>, vector<32x32xf32>
    %cst_66 = arith.constant dense<0.000000e+00> : vector<8x32xf32>
    %80 = tpu.matmul %21, %79, %cst_66 {dimension_numbers = #tpu.dot_dimension_numbers<[1], [0], [0], [1], [0, 0, 1, 1], [], []>} : vector<8x32xf32>, vector<32x32xf32>, vector<8x32xf32> -> vector<8x32xf32>
    %c0_67 = arith.constant 0 : index
    %c0_68 = arith.constant 0 : index
    %81 = vector.load %arg26[%c0_67, %c0_68] : memref<1x32xf32, #tpu.memory_space<vmem>>, vector<1x32xf32>
    %82 = vector.broadcast %81 : vector<1x32xf32> to vector<8x32xf32>
    %83 = arith.addf %80, %82 : vector<8x32xf32>
    %c0_69 = arith.constant 0 : index
    %c0_70 = arith.constant 0 : index
    %84 = vector.load %arg24[%c0_69, %c0_70] : memref<32x32xf32, #tpu.memory_space<vmem>>, vector<32x32xf32>
    %cst_71 = arith.constant dense<0.000000e+00> : vector<8x32xf32>
    %85 = tpu.matmul %43, %84, %cst_71 {dimension_numbers = #tpu.dot_dimension_numbers<[1], [0], [0], [1], [0, 0, 1, 1], [], []>} : vector<8x32xf32>, vector<32x32xf32>, vector<8x32xf32> -> vector<8x32xf32>
    %c0_72 = arith.constant 0 : index
    %c0_73 = arith.constant 0 : index
    %86 = vector.load %arg27[%c0_72, %c0_73] : memref<1x32xf32, #tpu.memory_space<vmem>>, vector<1x32xf32>
    %87 = vector.broadcast %86 : vector<1x32xf32> to vector<8x32xf32>
    %88 = arith.addf %85, %87 : vector<8x32xf32>
    %89 = vector.extract_strided_slice %78 {offsets = [0, 0], sizes = [8, 8], strides = [1, 1]} : vector<8x32xf32> to vector<8x8xf32>
    %90 = vector.shape_cast %89 : vector<8x8xf32> to vector<1x8x8xf32>
    %91 = vector.extract_strided_slice %78 {offsets = [0, 8], sizes = [8, 8], strides = [1, 1]} : vector<8x32xf32> to vector<8x8xf32>
    %92 = vector.shape_cast %91 : vector<8x8xf32> to vector<1x8x8xf32>
    %93 = vector.extract_strided_slice %78 {offsets = [0, 16], sizes = [8, 8], strides = [1, 1]} : vector<8x32xf32> to vector<8x8xf32>
    %94 = vector.shape_cast %93 : vector<8x8xf32> to vector<1x8x8xf32>
    %95 = vector.extract_strided_slice %78 {offsets = [0, 24], sizes = [8, 8], strides = [1, 1]} : vector<8x32xf32> to vector<8x8xf32>
    %96 = vector.shape_cast %95 : vector<8x8xf32> to vector<1x8x8xf32>
    %97 = tpu.concatenate %90, %92, %94, %96 in 0 : vector<1x8x8xf32>, vector<1x8x8xf32>, vector<1x8x8xf32>, vector<1x8x8xf32> -> vector<4x8x8xf32>
    %98 = vector.extract_strided_slice %83 {offsets = [0, 0], sizes = [8, 8], strides = [1, 1]} : vector<8x32xf32> to vector<8x8xf32>
    %99 = vector.shape_cast %98 : vector<8x8xf32> to vector<1x8x8xf32>
    %100 = vector.extract_strided_slice %83 {offsets = [0, 8], sizes = [8, 8], strides = [1, 1]} : vector<8x32xf32> to vector<8x8xf32>
    %101 = vector.shape_cast %100 : vector<8x8xf32> to vector<1x8x8xf32>
    %102 = vector.extract_strided_slice %83 {offsets = [0, 16], sizes = [8, 8], strides = [1, 1]} : vector<8x32xf32> to vector<8x8xf32>
    %103 = vector.shape_cast %102 : vector<8x8xf32> to vector<1x8x8xf32>
    %104 = vector.extract_strided_slice %83 {offsets = [0, 24], sizes = [8, 8], strides = [1, 1]} : vector<8x32xf32> to vector<8x8xf32>
    %105 = vector.shape_cast %104 : vector<8x8xf32> to vector<1x8x8xf32>
    %106 = tpu.concatenate %99, %101, %103, %105 in 0 : vector<1x8x8xf32>, vector<1x8x8xf32>, vector<1x8x8xf32>, vector<1x8x8xf32> -> vector<4x8x8xf32>
    %107 = vector.extract_strided_slice %88 {offsets = [0, 0], sizes = [8, 8], strides = [1, 1]} : vector<8x32xf32> to vector<8x8xf32>
    %108 = vector.shape_cast %107 : vector<8x8xf32> to vector<1x8x8xf32>
    %109 = vector.extract_strided_slice %88 {offsets = [0, 8], sizes = [8, 8], strides = [1, 1]} : vector<8x32xf32> to vector<8x8xf32>
    %110 = vector.shape_cast %109 : vector<8x8xf32> to vector<1x8x8xf32>
    %111 = vector.extract_strided_slice %88 {offsets = [0, 16], sizes = [8, 8], strides = [1, 1]} : vector<8x32xf32> to vector<8x8xf32>
    %112 = vector.shape_cast %111 : vector<8x8xf32> to vector<1x8x8xf32>
    %113 = vector.extract_strided_slice %88 {offsets = [0, 24], sizes = [8, 8], strides = [1, 1]} : vector<8x32xf32> to vector<8x8xf32>
    %114 = vector.shape_cast %113 : vector<8x8xf32> to vector<1x8x8xf32>
    %115 = tpu.concatenate %108, %110, %112, %114 in 0 : vector<1x8x8xf32>, vector<1x8x8xf32>, vector<1x8x8xf32>, vector<1x8x8xf32> -> vector<4x8x8xf32>
    "tpu.trace_start"() <{level = 10 : i32, message = "bqd,bkd->bqk"}> : () -> ()
    %cst_74 = arith.constant dense<0.000000e+00> : vector<4x8x8xf32>
    %116 = tpu.matmul %97, %106, %cst_74 {dimension_numbers = #tpu.dot_dimension_numbers<[2], [2], [1], [1], [0, 0, 0, 1, 1, 1], [0], [0]>} : vector<4x8x8xf32>, vector<4x8x8xf32>, vector<4x8x8xf32> -> vector<4x8x8xf32>
    "tpu.trace_stop"() : () -> ()
    %cst_75 = arith.constant dense<0xFF800000> : vector<4x8xf32>
    %117 = vector.multi_reduction <maximumf>, %116, %cst_75 [2] : vector<4x8x8xf32> to vector<4x8xf32>
    %118 = vector.shape_cast %117 : vector<4x8xf32> to vector<4x8x1xf32>
    %119 = vector.broadcast %118 : vector<4x8x1xf32> to vector<4x8x8xf32>
    %120 = arith.subf %116, %119 : vector<4x8x8xf32>
    %121 = math.exp %120 : vector<4x8x8xf32>
    %cst_76 = arith.constant dense<0.000000e+00> : vector<4x8xf32>
    %122 = vector.multi_reduction <add>, %121, %cst_76 [2] : vector<4x8x8xf32> to vector<4x8xf32>
    %123 = vector.shape_cast %122 : vector<4x8xf32> to vector<4x8x1xf32>
    %124 = tpu.reciprocal %123 : vector<4x8x1xf32> -> vector<4x8x1xf32>
    %125 = vector.broadcast %124 : vector<4x8x1xf32> to vector<4x8x8xf32>
    %126 = arith.mulf %121, %125 : vector<4x8x8xf32>
    "tpu.trace_start"() <{level = 10 : i32, message = "bqk,bkd->bqd"}> : () -> ()
    %cst_77 = arith.constant dense<0.000000e+00> : vector<4x8x8xf32>
    %127 = tpu.matmul %126, %115, %cst_77 {dimension_numbers = #tpu.dot_dimension_numbers<[2], [1], [1], [2], [0, 0, 0, 1, 1, 2], [0], [0]>} : vector<4x8x8xf32>, vector<4x8x8xf32>, vector<4x8x8xf32> -> vector<4x8x8xf32>
    "tpu.trace_stop"() : () -> ()
    %128 = vector.extract_strided_slice %127 {offsets = [0, 0, 0], sizes = [1, 8, 8], strides = [1, 1, 1]} : vector<4x8x8xf32> to vector<1x8x8xf32>
    %129 = vector.extract_strided_slice %127 {offsets = [1, 0, 0], sizes = [1, 8, 8], strides = [1, 1, 1]} : vector<4x8x8xf32> to vector<1x8x8xf32>
    %130 = vector.extract_strided_slice %127 {offsets = [2, 0, 0], sizes = [1, 8, 8], strides = [1, 1, 1]} : vector<4x8x8xf32> to vector<1x8x8xf32>
    %131 = vector.extract_strided_slice %127 {offsets = [3, 0, 0], sizes = [1, 8, 8], strides = [1, 1, 1]} : vector<4x8x8xf32> to vector<1x8x8xf32>
    %132 = tpu.concatenate %128, %129, %130, %131 in 2 : vector<1x8x8xf32>, vector<1x8x8xf32>, vector<1x8x8xf32>, vector<1x8x8xf32> -> vector<1x8x32xf32>
    %133 = vector.shape_cast %132 : vector<1x8x32xf32> to vector<8x32xf32>
    %c0_78 = arith.constant 0 : index
    %c0_79 = arith.constant 0 : index
    %134 = vector.load %arg28[%c0_78, %c0_79] : memref<32x32xf32, #tpu.memory_space<vmem>>, vector<32x32xf32>
    %cst_80 = arith.constant dense<0.000000e+00> : vector<8x32xf32>
    %135 = tpu.matmul %133, %134, %cst_80 {dimension_numbers = #tpu.dot_dimension_numbers<[1], [0], [0], [1], [0, 0, 1, 1], [], []>} : vector<8x32xf32>, vector<32x32xf32>, vector<8x32xf32> -> vector<8x32xf32>
    %c0_81 = arith.constant 0 : index
    %c0_82 = arith.constant 0 : index
    %136 = vector.load %arg29[%c0_81, %c0_82] : memref<1x32xf32, #tpu.memory_space<vmem>>, vector<1x32xf32>
    %137 = vector.broadcast %136 : vector<1x32xf32> to vector<8x32xf32>
    %138 = arith.addf %135, %137 : vector<8x32xf32>
    %c0_83 = arith.constant 0 : index
    %c0_84 = arith.constant 0 : index
    %139 = vector.load %arg30[%c0_83, %c0_84] : memref<8x32xf32, #tpu.memory_space<vmem>>, vector<8x32xf32>
    tpu.vector_store %arg30[%c0_83, %c0_84], %138 {strides = array<i32>} : memref<8x32xf32, #tpu.memory_space<vmem>>, vector<8x32xf32>,
    return
  }
  func.func @transform_0(%arg0: i32) -> (i32, i32) {
    %c0_i32 = arith.constant 0 : i32
    %c0_i32_0 = arith.constant 0 : i32
    return %arg0, %c0_i32 : i32, i32
  }
  func.func @transform_1(%arg0: i32) -> (i32, i32) {
    %c0_i32 = arith.constant 0 : i32
    %c0_i32_0 = arith.constant 0 : i32
    return %arg0, %c0_i32 : i32, i32
  }
  func.func @transform_2(%arg0: i32) -> (i32, i32) {
    %c0_i32 = arith.constant 0 : i32
    %c0_i32_0 = arith.constant 0 : i32
    return %arg0, %c0_i32 : i32, i32
  }
  func.func @transform_3(%arg0: i32) -> (i32, i32) {
    %c0_i32 = arith.constant 0 : i32
    %c0_i32_0 = arith.constant 0 : i32
    %c0_i32_1 = arith.constant 0 : i32
    return %c0_i32, %c0_i32_0 : i32, i32
  }
  func.func @transform_4(%arg0: i32) -> (i32, i32) {
    %c0_i32 = arith.constant 0 : i32
    %c0_i32_0 = arith.constant 0 : i32
    %c0_i32_1 = arith.constant 0 : i32
    return %c0_i32, %c0_i32_0 : i32, i32
  }
  func.func @transform_5(%arg0: i32) -> (i32, i32) {
    %c0_i32 = arith.constant 0 : i32
    %c0_i32_0 = arith.constant 0 : i32
    %c0_i32_1 = arith.constant 0 : i32
    return %c0_i32, %c0_i32_0 : i32, i32
  }
  func.func @transform_6(%arg0: i32) -> (i32, i32) {
    %c0_i32 = arith.constant 0 : i32
    %c0_i32_0 = arith.constant 0 : i32
    %c0_i32_1 = arith.constant 0 : i32
    return %c0_i32, %c0_i32_0 : i32, i32
  }
  func.func @transform_7(%arg0: i32) -> (i32, i32) {
    %c0_i32 = arith.constant 0 : i32
    %c0_i32_0 = arith.constant 0 : i32
    %c0_i32_1 = arith.constant 0 : i32
    return %c0_i32, %c0_i32_0 : i32, i32
  }
  func.func @transform_8(%arg0: i32) -> (i32, i32) {
    %c0_i32 = arith.constant 0 : i32
    %c0_i32_0 = arith.constant 0 : i32
    %c0_i32_1 = arith.constant 0 : i32
    return %c0_i32, %c0_i32_0 : i32, i32
  }
  func.func @transform_9(%arg0: i32) -> (i32, i32) {
    %c0_i32 = arith.constant 0 : i32
    %c0_i32_0 = arith.constant 0 : i32
    %c0_i32_1 = arith.constant 0 : i32
    return %c0_i32, %c0_i32_0 : i32, i32
  }
  func.func @transform_10(%arg0: i32) -> (i32, i32) {
    %c0_i32 = arith.constant 0 : i32
    %c0_i32_0 = arith.constant 0 : i32
    %c0_i32_1 = arith.constant 0 : i32
    return %c0_i32, %c0_i32_0 : i32, i32
  }
  func.func @transform_11(%arg0: i32) -> (i32, i32) {
    %c0_i32 = arith.constant 0 : i32
    %c0_i32_0 = arith.constant 0 : i32
    %c0_i32_1 = arith.constant 0 : i32
    return %c0_i32, %c0_i32_0 : i32, i32
  }
  func.func @transform_12(%arg0: i32) -> (i32, i32) {
    %c0_i32 = arith.constant 0 : i32
    %c0_i32_0 = arith.constant 0 : i32
    %c0_i32_1 = arith.constant 0 : i32
    return %c0_i32, %c0_i32_0 : i32, i32
  }
  func.func @transform_13(%arg0: i32) -> (i32, i32) {
    %c0_i32 = arith.constant 0 : i32
    %c0_i32_0 = arith.constant 0 : i32
    %c0_i32_1 = arith.constant 0 : i32
    return %c0_i32, %c0_i32_0 : i32, i32
  }
  func.func @transform_14(%arg0: i32) -> (i32, i32) {
    %c0_i32 = arith.constant 0 : i32
    %c0_i32_0 = arith.constant 0 : i32
    %c0_i32_1 = arith.constant 0 : i32
    return %c0_i32, %c0_i32_0 : i32, i32
  }
  func.func @transform_15(%arg0: i32) -> (i32, i32) {
    %c0_i32 = arith.constant 0 : i32
    %c0_i32_0 = arith.constant 0 : i32
    %c0_i32_1 = arith.constant 0 : i32
    return %c0_i32, %c0_i32_0 : i32, i32
  }
  func.func @transform_16(%arg0: i32) -> (i32, i32) {
    %c0_i32 = arith.constant 0 : i32
    %c0_i32_0 = arith.constant 0 : i32
    %c0_i32_1 = arith.constant 0 : i32
    return %c0_i32, %c0_i32_0 : i32, i32
  }
  func.func @transform_17(%arg0: i32) -> (i32, i32) {
    %c0_i32 = arith.constant 0 : i32
    %c0_i32_0 = arith.constant 0 : i32
    %c0_i32_1 = arith.constant 0 : i32
    return %c0_i32, %c0_i32_0 : i32, i32
  }
  func.func @transform_18(%arg0: i32) -> (i32, i32) {
    %c0_i32 = arith.constant 0 : i32
    %c0_i32_0 = arith.constant 0 : i32
    %c0_i32_1 = arith.constant 0 : i32
    return %c0_i32, %c0_i32_0 : i32, i32
  }
  func.func @transform_19(%arg0: i32) -> (i32, i32) {
    %c0_i32 = arith.constant 0 : i32
    %c0_i32_0 = arith.constant 0 : i32
    %c0_i32_1 = arith.constant 0 : i32
    return %c0_i32, %c0_i32_0 : i32, i32
  }
  func.func @transform_20(%arg0: i32) -> (i32, i32) {
    %c0_i32 = arith.constant 0 : i32
    %c0_i32_0 = arith.constant 0 : i32
    %c0_i32_1 = arith.constant 0 : i32
    return %c0_i32, %c0_i32_0 : i32, i32
  }
  func.func @transform_21(%arg0: i32) -> (i32, i32) {
    %c0_i32 = arith.constant 0 : i32
    %c0_i32_0 = arith.constant 0 : i32
    %c0_i32_1 = arith.constant 0 : i32
    return %c0_i32, %c0_i32_0 : i32, i32
  }
  func.func @transform_22(%arg0: i32) -> (i32, i32) {
    %c0_i32 = arith.constant 0 : i32
    %c0_i32_0 = arith.constant 0 : i32
    %c0_i32_1 = arith.constant 0 : i32
    return %c0_i32, %c0_i32_0 : i32, i32
  }
  func.func @transform_23(%arg0: i32) -> (i32, i32) {
    %c0_i32 = arith.constant 0 : i32
    %c0_i32_0 = arith.constant 0 : i32
    %c0_i32_1 = arith.constant 0 : i32
    return %c0_i32, %c0_i32_0 : i32, i32
  }
  func.func @transform_24(%arg0: i32) -> (i32, i32) {
    %c0_i32 = arith.constant 0 : i32
    %c0_i32_0 = arith.constant 0 : i32
    %c0_i32_1 = arith.constant 0 : i32
    return %c0_i32, %c0_i32_0 : i32, i32
  }
  func.func @transform_25(%arg0: i32) -> (i32, i32) {
    %c0_i32 = arith.constant 0 : i32
    %c0_i32_0 = arith.constant 0 : i32
    %c0_i32_1 = arith.constant 0 : i32
    return %c0_i32, %c0_i32_0 : i32, i32
  }
  func.func @transform_26(%arg0: i32) -> (i32, i32) {
    %c0_i32 = arith.constant 0 : i32
    %c0_i32_0 = arith.constant 0 : i32
    %c0_i32_1 = arith.constant 0 : i32
    return %c0_i32, %c0_i32_0 : i32, i32
  }
  func.func @transform_27(%arg0: i32) -> (i32, i32) {
    %c0_i32 = arith.constant 0 : i32
    %c0_i32_0 = arith.constant 0 : i32
    %c0_i32_1 = arith.constant 0 : i32
    return %c0_i32, %c0_i32_0 : i32, i32
  }
  func.func @transform_28(%arg0: i32) -> (i32, i32) {
    %c0_i32 = arith.constant 0 : i32
    %c0_i32_0 = arith.constant 0 : i32
    %c0_i32_1 = arith.constant 0 : i32
    return %c0_i32, %c0_i32_0 : i32, i32
  }
  func.func @transform_29(%arg0: i32) -> (i32, i32) {
    %c0_i32 = arith.constant 0 : i32
    %c0_i32_0 = arith.constant 0 : i32
    return %arg0, %c0_i32 : i32, i32
  }
}

</mosaic_0001>

<llo_original>
// kernel: tpu_custom_call.1
$region0: #{tpu_custom_call.1}
  #allocation0 [shape = 'u32[]', space=smem, size = 0x4, offset = 0x4, fixed_abs, tag = 'smem constant byte address 0x4 - core index']
  #allocation1 [shape = 'u32[144,128]{1,0:T(1,128)}', space=vmem, size = 0x12000, scoped, tag = 'internal scratch']
  %s0 = inlined_call_operand.smem [shape: u32[30], index: -1, kind: input, shape index: {}]
  %s1 = sld [smem:[%s0]]
  %s2 = scalar_lea.smem %s0, 1
  %s3 = sld [smem:[%s2]]
  %s4 = scalar_lea.smem %s0, 2
  %s5 = sld [smem:[%s4]]
  %s6 = scalar_lea.smem %s0, 3
  %s7 = sld [smem:[%s6]]
  %s8 = scalar_lea.smem %s0, 4
  %s9 = sld [smem:[%s8]]
  %s10 = scalar_lea.smem %s0, 5
  %s11 = sld [smem:[%s10]]
  %s12 = scalar_lea.smem %s0, 6
  %s13 = sld [smem:[%s12]]
  %s14 = scalar_lea.smem %s0, 7
  %s15 = sld [smem:[%s14]]
  %s16 = scalar_lea.smem %s0, 8
  %s17 = sld [smem:[%s16]]
  %s18 = scalar_lea.smem %s0, 9
  %s19 = sld [smem:[%s18]]
  %s20 = scalar_lea.smem %s0, 10
  %s21 = sld [smem:[%s20]]
  %s22 = scalar_lea.smem %s0, 11
  %s23 = sld [smem:[%s22]]
  %s24 = scalar_lea.smem %s0, 12
  %s25 = sld [smem:[%s24]]
  %s26 = scalar_lea.smem %s0, 13
  %s27 = sld [smem:[%s26]]
  %s28 = scalar_lea.smem %s0, 14
  %s29 = sld [smem:[%s28]]
  %s30 = scalar_lea.smem %s0, 15
  %s31 = sld [smem:[%s30]]
  %s32 = scalar_lea.smem %s0, 16
  %s33 = sld [smem:[%s32]]
  %s34 = scalar_lea.smem %s0, 17
  %s35 = sld [smem:[%s34]]
  %s36 = scalar_lea.smem %s0, 18
  %s37 = sld [smem:[%s36]]
  %s38 = scalar_lea.smem %s0, 19
  %s39 = sld [smem:[%s38]]
  %s40 = scalar_lea.smem %s0, 20
  %s41 = sld [smem:[%s40]]
  %s42 = scalar_lea.smem %s0, 21
  %s43 = sld [smem:[%s42]]
  %s44 = scalar_lea.smem %s0, 22
  %s45 = sld [smem:[%s44]]
  %s46 = scalar_lea.smem %s0, 23
  %s47 = sld [smem:[%s46]]
  %s48 = scalar_lea.smem %s0, 24
  %s49 = sld [smem:[%s48]]
  %s50 = scalar_lea.smem %s0, 25
  %s51 = sld [smem:[%s50]]
  %s52 = scalar_lea.smem %s0, 26
  %s53 = sld [smem:[%s52]]
  %s54 = scalar_lea.smem %s0, 27
  %s55 = sld [smem:[%s54]]
  %s56 = scalar_lea.smem %s0, 28
  %s57 = sld [smem:[%s56]]
  %s58 = scalar_lea.smem %s0, 29
  %s59 = sld [smem:[%s58]]
  %s60 = sld [smem:[#allocation0]]
  $region209: #{tpu_custom_call.1} parent=0
    _
  %s62 = ssub.s32 1, %s60
  %s63 = scalar_select 0, %s62, %s60
  $region1: #{tpu_custom_call.1} parent=0
    #allocation2 [shape = 'u8[4096]{0}', space=vmem, size = 0x1000, scoped, tag = 'input window, operand 3, single buffered']
    #allocation3 [shape = 's32[2]{0}', space=sflag, size = 0x8, scoped, tag = 'scoped memory for tpu_custom_call.1']
    #allocation4 [shape = 's32[2]{0}', space=sflag, size = 0x8, scoped, tag = 'scoped memory for tpu_custom_call.1']
    #allocation5 [shape = 'u8[8192]{0}', space=vmem, size = 0x2000, scoped, tag = 'input window, operand 5, single buffered']
    #allocation6 [shape = 's32[1]{0}', space=sflag, size = 0x4, scoped, tag = 'scoped memory for tpu_custom_call.1']
    #allocation7 [shape = 'u8[512]{0}', space=vmem, size = 0x400, scoped, tag = 'input window, operand 6, single buffered']
    #allocation8 [shape = 'u8[8192]{0}', space=vmem, size = 0x2000, scoped, tag = 'input window, operand 7, single buffered']
    #allocation9 [shape = 's32[1]{0}', space=sflag, size = 0x4, scoped, tag = 'scoped memory for tpu_custom_call.1']
    #allocation10 [shape = 'u8[512]{0}', space=vmem, size = 0x400, scoped, tag = 'input window, operand 8, single buffered']
    #allocation11 [shape = 'u8[4096]{0}', space=vmem, size = 0x1000, scoped, tag = 'input window, operand 9, single buffered']
    #allocation12 [shape = 's32[1]{0}', space=sflag, size = 0x4, scoped, tag = 'scoped memory for tpu_custom_call.1']
    #allocation13 [shape = 'u8[512]{0}', space=vmem, size = 0x400, scoped, tag = 'input window, operand 10, single buffered']
    #allocation14 [shape = 'u8[8192]{0}', space=vmem, size = 0x2000, scoped, tag = 'input window, operand 11, single buffered']
    #allocation15 [shape = 's32[1]{0}', space=sflag, size = 0x4, scoped, tag = 'scoped memory for tpu_custom_call.1']
    #allocation16 [shape = 'u8[512]{0}', space=vmem, size = 0x400, scoped, tag = 'input window, operand 12, single buffered']
    #allocation17 [shape = 'u8[8192]{0}', space=vmem, size = 0x2000, scoped, tag = 'input window, operand 13, single buffered']
    #allocation18 [shape = 's32[1]{0}', space=sflag, size = 0x4, scoped, tag = 'scoped memory for tpu_custom_call.1']
    #allocation19 [shape = 'u8[512]{0}', space=vmem, size = 0x400, scoped, tag = 'input window, operand 14, single buffered']
    #allocation20 [shape = 'u8[4096]{0}', space=vmem, size = 0x1000, scoped, tag = 'input window, operand 15, single buffered']
    #allocation21 [shape = 's32[1]{0}', space=sflag, size = 0x4, scoped, tag = 'scoped memory for tpu_custom_call.1']
    #allocation22 [shape = 'u8[8192]{0}', space=vmem, size = 0x2000, scoped, tag = 'input window, operand 17, single buffered']
    #allocation23 [shape = 'u8[8192]{0}', space=vmem, size = 0x2000, scoped, tag = 'input window, operand 19, single buffered']
    #allocation24 [shape = 's32[1]{0}', space=sflag, size = 0x4, scoped, tag = 'scoped memory for tpu_custom_call.1']
    #allocation25 [shape = 'u8[16384]{0}', space=vmem, size = 0x4000, scoped, tag = 'input window, operand 27, single buffered']
    #allocation26 [shape = 'u8[8192]{0}', space=vmem, size = 0x2000, scoped, tag = 'output window, operand 0']
    %64 = vsyncpa [#allocation3], 0
    %65 = vsyncpa [#allocation6], 0
    %66 = vsyncpa [#allocation9], 0
    %67 = vsyncpa [#allocation12], 0
    %68 = vsyncpa [#allocation15], 0
    %69 = vsyncpa [#allocation18], 0
    %70 = vsyncpa [#allocation21], 0
    %71 = vsyncpa [#allocation24], 0
    %72 = vsyncpa [#allocation4], 0
    %s73 = scalar_lea.sflag [#allocation4], 1
    %74 = vsyncpa %s73, 0
    loop: start=0, step=1, limit=4
    $region2: #{tpu_custom_call.1} parent=1 // loop_pre_header
      _
    $region3: #{tpu_custom_call.1} parent=1 // loop_header
      %s76 = sphi 0, %s80
      %p77 = scmp.ge.s32.totalorder %s76, 4
      %s86 = sphi 0, %s88
      %s89 = sphi 0, %s86
      %s90 = sphi 0, %s89
      %s106 = sphi 0, %s90
      %s112 = sphi 0, %s114
      %s115 = sphi 0, %s112
      %s116 = sphi 0, %s115
      %s132 = sphi 0, %s116
      %s138 = sphi 0, %s140
      %s141 = sphi 0, %s138
      %s142 = sphi 0, %s141
      %s158 = sphi 0, %s142
      %s162 = sphi 0, %s162
      %s164 = sphi 0, %s162
      %s165 = sphi 0, %s164
      %s179 = sphi 0, %s165
      %s183 = sphi 0, %s183
      %s185 = sphi 0, %s183
      %s186 = sphi 0, %s185
      %s200 = sphi 0, %s186
      %s204 = sphi 0, %s204
      %s206 = sphi 0, %s204
      %s207 = sphi 0, %s206
      %s221 = sphi 0, %s207
      %s225 = sphi 0, %s225
      %s227 = sphi 0, %s225
      %s228 = sphi 0, %s227
      %s242 = sphi 0, %s228
      %s246 = sphi 0, %s246
      %s248 = sphi 0, %s246
      %s249 = sphi 0, %s248
      %s263 = sphi 0, %s249
      %s267 = sphi 0, %s267
      %s269 = sphi 0, %s267
      %s270 = sphi 0, %s269
      %s284 = sphi 0, %s270
      %s288 = sphi 0, %s288
      %s290 = sphi 0, %s288
      %s291 = sphi 0, %s290
      %s305 = sphi 0, %s291
      %s309 = sphi 0, %s309
      %s311 = sphi 0, %s309
      %s312 = sphi 0, %s311
      %s326 = sphi 0, %s312
      %s330 = sphi 0, %s330
      %s332 = sphi 0, %s330
      %s333 = sphi 0, %s332
      %s347 = sphi 0, %s333
      %s351 = sphi 0, %s351
      %s353 = sphi 0, %s351
      %s354 = sphi 0, %s353
      %s368 = sphi 0, %s354
      %s372 = sphi 0, %s372
      %s374 = sphi 0, %s372
      %s375 = sphi 0, %s374
      %s389 = sphi 0, %s375
      %s393 = sphi 0, %s393
      %s395 = sphi 0, %s393
      %s396 = sphi 0, %s395
      %s410 = sphi 0, %s396
      %s414 = sphi 0, %s414
      %s416 = sphi 0, %s414
      %s417 = sphi 0, %s416
      %s431 = sphi 0, %s417
      %s435 = sphi 0, %s435
      %s437 = sphi 0, %s435
      %s438 = sphi 0, %s437
      %s452 = sphi 0, %s438
      %s456 = sphi 0, %s456
      %s458 = sphi 0, %s456
      %s459 = sphi 0, %s458
      %s473 = sphi 0, %s459
      %s477 = sphi 0, %s477
      %s479 = sphi 0, %s477
      %s480 = sphi 0, %s479
      %s494 = sphi 0, %s480
      %s498 = sphi 0, %s498
      %s500 = sphi 0, %s498
      %s501 = sphi 0, %s500
      %s515 = sphi 0, %s501
      %s519 = sphi 0, %s519
      %s521 = sphi 0, %s519
      %s522 = sphi 0, %s521
      %s536 = sphi 0, %s522
      %s540 = sphi 0, %s540
      %s542 = sphi 0, %s540
      %s543 = sphi 0, %s542
      %s557 = sphi 0, %s543
      %s561 = sphi 0, %s561
      %s563 = sphi 0, %s561
      %s564 = sphi 0, %s563
      %s578 = sphi 0, %s564
      %s582 = sphi 0, %s582
      %s584 = sphi 0, %s582
      %s585 = sphi 0, %s584
      %s599 = sphi 0, %s585
      %s603 = sphi 0, %s603
      %s605 = sphi 0, %s603
      %s606 = sphi 0, %s605
      %s620 = sphi 0, %s606
      %s624 = sphi 0, %s624
      %s626 = sphi 0, %s624
      %s627 = sphi 0, %s626
      %s641 = sphi 0, %s627
      %s645 = sphi 0, %s645
      %s647 = sphi 0, %s645
      %s648 = sphi 0, %s647
      %s662 = sphi 0, %s648
      %s666 = sphi 0, %s666
      %s668 = sphi 0, %s666
      %s669 = sphi 0, %s668
      %s683 = sphi 0, %s669
      %s687 = sphi 0, %s687
      %s689 = sphi 0, %s687
      %s690 = sphi 0, %s689
      %s704 = sphi 0, %s690
      %s710 = sphi 0, %s712
      %s713 = sphi 0, %s710
      %s714 = sphi 0, %s713
      %s730 = sphi 0, %s714
    $region4: #{tpu_custom_call.1} parent=1 // loop_header_branch
      %79 = sbr.rel (%p77) target = $region8
    $region5: #{tpu_custom_call.1} parent=1 // loop_body
      %s81 = ssub.s32 %s76, 1
      %s82 = ssub.s32 %s76, 2
      %s83 = sadd.s32 %s76, 1
      %s84 = ssub.s32 %s76, %s83
      %p85 = scmp.eq.s32.totalorder %s84, 0
      %s87 = sadd.s32 %s86, 1
      %s88 = scalar_select %p85, %s86, %s87
      %p91 = pneg %p85
      %p92 = scmp.eq.s32.totalorder %s76, 1
      %p93 = por %p91, %p92
      %p94 = scmp.ne.s32.totalorder %s86, %s89
      %p95 = scmp.eq.s32.totalorder %s76, 0
      %p96 = por %p94, %p95
      %p97 = scmp.ne.s32.totalorder %s86, %s89
      %p98 = scmp.eq.s32.totalorder %s81, 1
      %p99 = por %p97, %p98
      %p100 = scmp.ne.s32.totalorder %s89, %s90
      %p101 = scmp.eq.s32.totalorder %s81, 0
      %p102 = por %p100, %p101
      %p103 = scmp.ne.s32.totalorder %s89, %s90
      %p104 = scmp.eq.s32.totalorder %s82, 1
      %p105 = por %p103, %p104
      %p107 = scmp.ne.s32.totalorder %s90, %s106
      %p108 = scmp.eq.s32.totalorder %s82, 0
      %p109 = por %p107, %p108
      %s110 = ssub.s32 %s76, %s83
      %p111 = scmp.eq.s32.totalorder %s110, 0
      %s113 = sadd.s32 %s112, 1
      %s114 = scalar_select %p111, %s112, %s113
      %p117 = pneg %p111
      %p118 = scmp.eq.s32.totalorder %s76, 1
      %p119 = por %p117, %p118
      %p120 = scmp.ne.s32.totalorder %s112, %s115
      %p121 = scmp.eq.s32.totalorder %s76, 0
      %p122 = por %p120, %p121
      %p123 = scmp.ne.s32.totalorder %s112, %s115
      %p124 = scmp.eq.s32.totalorder %s81, 1
      %p125 = por %p123, %p124
      %p126 = scmp.ne.s32.totalorder %s115, %s116
      %p127 = scmp.eq.s32.totalorder %s81, 0
      %p128 = por %p126, %p127
      %p129 = scmp.ne.s32.totalorder %s115, %s116
      %p130 = scmp.eq.s32.totalorder %s82, 1
      %p131 = por %p129, %p130
      %p133 = scmp.ne.s32.totalorder %s116, %s132
      %p134 = scmp.eq.s32.totalorder %s82, 0
      %p135 = por %p133, %p134
      %s136 = ssub.s32 %s76, %s83
      %p137 = scmp.eq.s32.totalorder %s136, 0
      %s139 = sadd.s32 %s138, 1
      %s140 = scalar_select %p137, %s138, %s139
      %p143 = pneg %p137
      %p144 = scmp.eq.s32.totalorder %s76, 1
      %p145 = por %p143, %p144
      %p146 = scmp.ne.s32.totalorder %s138, %s141
      %p147 = scmp.eq.s32.totalorder %s76, 0
      %p148 = por %p146, %p147
      %p149 = scmp.ne.s32.totalorder %s138, %s141
      %p150 = scmp.eq.s32.totalorder %s81, 1
      %p151 = por %p149, %p150
      %p152 = scmp.ne.s32.totalorder %s141, %s142
      %p153 = scmp.eq.s32.totalorder %s81, 0
      %p154 = por %p152, %p153
      %p155 = scmp.ne.s32.totalorder %s141, %s142
      %p156 = scmp.eq.s32.totalorder %s82, 1
      %p157 = por %p155, %p156
      %p159 = scmp.ne.s32.totalorder %s142, %s158
      %p160 = scmp.eq.s32.totalorder %s82, 0
      %p161 = por %p159, %p160
      %s163 = sadd.s32 %s162, 1
      %p166 = scmp.eq.s32.totalorder %s76, 1
      %p167 = scmp.ne.s32.totalorder %s162, %s164
      %p168 = scmp.eq.s32.totalorder %s76, 0
      %p169 = por %p167, %p168
      %p170 = scmp.ne.s32.totalorder %s162, %s164
      %p171 = scmp.eq.s32.totalorder %s81, 1
      %p172 = por %p170, %p171
      %p173 = scmp.ne.s32.totalorder %s164, %s165
      %p174 = scmp.eq.s32.totalorder %s81, 0
      %p175 = por %p173, %p174
      %p176 = scmp.ne.s32.totalorder %s164, %s165
      %p177 = scmp.eq.s32.totalorder %s82, 1
      %p178 = por %p176, %p177
      %p180 = scmp.ne.s32.totalorder %s165, %s179
      %p181 = scmp.eq.s32.totalorder %s82, 0
      %p182 = por %p180, %p181
      %s184 = sadd.s32 %s183, 1
      %p187 = scmp.eq.s32.totalorder %s76, 1
      %p188 = scmp.ne.s32.totalorder %s183, %s185
      %p189 = scmp.eq.s32.totalorder %s76, 0
      %p190 = por %p188, %p189
      %p191 = scmp.ne.s32.totalorder %s183, %s185
      %p192 = scmp.eq.s32.totalorder %s81, 1
      %p193 = por %p191, %p192
      %p194 = scmp.ne.s32.totalorder %s185, %s186
      %p195 = scmp.eq.s32.totalorder %s81, 0
      %p196 = por %p194, %p195
      %p197 = scmp.ne.s32.totalorder %s185, %s186
      %p198 = scmp.eq.s32.totalorder %s82, 1
      %p199 = por %p197, %p198
      %p201 = scmp.ne.s32.totalorder %s186, %s200
      %p202 = scmp.eq.s32.totalorder %s82, 0
      %p203 = por %p201, %p202
      %s205 = sadd.s32 %s204, 1
      %p208 = scmp.eq.s32.totalorder %s76, 1
      %p209 = scmp.ne.s32.totalorder %s204, %s206
      %p210 = scmp.eq.s32.totalorder %s76, 0
      %p211 = por %p209, %p210
      %p212 = scmp.ne.s32.totalorder %s204, %s206
      %p213 = scmp.eq.s32.totalorder %s81, 1
      %p214 = por %p212, %p213
      %p215 = scmp.ne.s32.totalorder %s206, %s207
      %p216 = scmp.eq.s32.totalorder %s81, 0
      %p217 = por %p215, %p216
      %p218 = scmp.ne.s32.totalorder %s206, %s207
      %p219 = scmp.eq.s32.totalorder %s82, 1
      %p220 = por %p218, %p219
      %p222 = scmp.ne.s32.totalorder %s207, %s221
      %p223 = scmp.eq.s32.totalorder %s82, 0
      %p224 = por %p222, %p223
      %s226 = sadd.s32 %s225, 1
      %p229 = scmp.eq.s32.totalorder %s76, 1
      %p230 = scmp.ne.s32.totalorder %s225, %s227
      %p231 = scmp.eq.s32.totalorder %s76, 0
      %p232 = por %p230, %p231
      %p233 = scmp.ne.s32.totalorder %s225, %s227
      %p234 = scmp.eq.s32.totalorder %s81, 1
      %p235 = por %p233, %p234
      %p236 = scmp.ne.s32.totalorder %s227, %s228
      %p237 = scmp.eq.s32.totalorder %s81, 0
      %p238 = por %p236, %p237
      %p239 = scmp.ne.s32.totalorder %s227, %s228
      %p240 = scmp.eq.s32.totalorder %s82, 1
      %p241 = por %p239, %p240
      %p243 = scmp.ne.s32.totalorder %s228, %s242
      %p244 = scmp.eq.s32.totalorder %s82, 0
      %p245 = por %p243, %p244
      %s247 = sadd.s32 %s246, 1
      %p250 = scmp.eq.s32.totalorder %s76, 1
      %p251 = scmp.ne.s32.totalorder %s246, %s248
      %p252 = scmp.eq.s32.totalorder %s76, 0
      %p253 = por %p251, %p252
      %p254 = scmp.ne.s32.totalorder %s246, %s248
      %p255 = scmp.eq.s32.totalorder %s81, 1
      %p256 = por %p254, %p255
      %p257 = scmp.ne.s32.totalorder %s248, %s249
      %p258 = scmp.eq.s32.totalorder %s81, 0
      %p259 = por %p257, %p258
      %p260 = scmp.ne.s32.totalorder %s248, %s249
      %p261 = scmp.eq.s32.totalorder %s82, 1
      %p262 = por %p260, %p261
      %p264 = scmp.ne.s32.totalorder %s249, %s263
      %p265 = scmp.eq.s32.totalorder %s82, 0
      %p266 = por %p264, %p265
      %s268 = sadd.s32 %s267, 1
      %p271 = scmp.eq.s32.totalorder %s76, 1
      %p272 = scmp.ne.s32.totalorder %s267, %s269
      %p273 = scmp.eq.s32.totalorder %s76, 0
      %p274 = por %p272, %p273
      %p275 = scmp.ne.s32.totalorder %s267, %s269
      %p276 = scmp.eq.s32.totalorder %s81, 1
      %p277 = por %p275, %p276
      %p278 = scmp.ne.s32.totalorder %s269, %s270
      %p279 = scmp.eq.s32.totalorder %s81, 0
      %p280 = por %p278, %p279
      %p281 = scmp.ne.s32.totalorder %s269, %s270
      %p282 = scmp.eq.s32.totalorder %s82, 1
      %p283 = por %p281, %p282
      %p285 = scmp.ne.s32.totalorder %s270, %s284
      %p286 = scmp.eq.s32.totalorder %s82, 0
      %p287 = por %p285, %p286
      %s289 = sadd.s32 %s288, 1
      %p292 = scmp.eq.s32.totalorder %s76, 1
      %p293 = scmp.ne.s32.totalorder %s288, %s290
      %p294 = scmp.eq.s32.totalorder %s76, 0
      %p295 = por %p293, %p294
      %p296 = scmp.ne.s32.totalorder %s288, %s290
      %p297 = scmp.eq.s32.totalorder %s81, 1
      %p298 = por %p296, %p297
      %p299 = scmp.ne.s32.totalorder %s290, %s291
      %p300 = scmp.eq.s32.totalorder %s81, 0
      %p301 = por %p299, %p300
      %p302 = scmp.ne.s32.totalorder %s290, %s291
      %p303 = scmp.eq.s32.totalorder %s82, 1
      %p304 = por %p302, %p303
      %p306 = scmp.ne.s32.totalorder %s291, %s305
      %p307 = scmp.eq.s32.totalorder %s82, 0
      %p308 = por %p306, %p307
      %s310 = sadd.s32 %s309, 1
      %p313 = scmp.eq.s32.totalorder %s76, 1
      %p314 = scmp.ne.s32.totalorder %s309, %s311
      %p315 = scmp.eq.s32.totalorder %s76, 0
      %p316 = por %p314, %p315
      %p317 = scmp.ne.s32.totalorder %s309, %s311
      %p318 = scmp.eq.s32.totalorder %s81, 1
      %p319 = por %p317, %p318
      %p320 = scmp.ne.s32.totalorder %s311, %s312
      %p321 = scmp.eq.s32.totalorder %s81, 0
      %p322 = por %p320, %p321
      %p323 = scmp.ne.s32.totalorder %s311, %s312
      %p324 = scmp.eq.s32.totalorder %s82, 1
      %p325 = por %p323, %p324
      %p327 = scmp.ne.s32.totalorder %s312, %s326
      %p328 = scmp.eq.s32.totalorder %s82, 0
      %p329 = por %p327, %p328
      %s331 = sadd.s32 %s330, 1
      %p334 = scmp.eq.s32.totalorder %s76, 1
      %p335 = scmp.ne.s32.totalorder %s330, %s332
      %p336 = scmp.eq.s32.totalorder %s76, 0
      %p337 = por %p335, %p336
      %p338 = scmp.ne.s32.totalorder %s330, %s332
      %p339 = scmp.eq.s32.totalorder %s81, 1
      %p340 = por %p338, %p339
      %p341 = scmp.ne.s32.totalorder %s332, %s333
      %p342 = scmp.eq.s32.totalorder %s81, 0
      %p343 = por %p341, %p342
      %p344 = scmp.ne.s32.totalorder %s332, %s333
      %p345 = scmp.eq.s32.totalorder %s82, 1
      %p346 = por %p344, %p345
      %p348 = scmp.ne.s32.totalorder %s333, %s347
      %p349 = scmp.eq.s32.totalorder %s82, 0
      %p350 = por %p348, %p349
      %s352 = sadd.s32 %s351, 1
      %p355 = scmp.eq.s32.totalorder %s76, 1
      %p356 = scmp.ne.s32.totalorder %s351, %s353
      %p357 = scmp.eq.s32.totalorder %s76, 0
      %p358 = por %p356, %p357
      %p359 = scmp.ne.s32.totalorder %s351, %s353
      %p360 = scmp.eq.s32.totalorder %s81, 1
      %p361 = por %p359, %p360
      %p362 = scmp.ne.s32.totalorder %s353, %s354
      %p363 = scmp.eq.s32.totalorder %s81, 0
      %p364 = por %p362, %p363
      %p365 = scmp.ne.s32.totalorder %s353, %s354
      %p366 = scmp.eq.s32.totalorder %s82, 1
      %p367 = por %p365, %p366
      %p369 = scmp.ne.s32.totalorder %s354, %s368
      %p370 = scmp.eq.s32.totalorder %s82, 0
      %p371 = por %p369, %p370
      %s373 = sadd.s32 %s372, 1
      %p376 = scmp.eq.s32.totalorder %s76, 1
      %p377 = scmp.ne.s32.totalorder %s372, %s374
      %p378 = scmp.eq.s32.totalorder %s76, 0
      %p379 = por %p377, %p378
      %p380 = scmp.ne.s32.totalorder %s372, %s374
      %p381 = scmp.eq.s32.totalorder %s81, 1
      %p382 = por %p380, %p381
      %p383 = scmp.ne.s32.totalorder %s374, %s375
      %p384 = scmp.eq.s32.totalorder %s81, 0
      %p385 = por %p383, %p384
      %p386 = scmp.ne.s32.totalorder %s374, %s375
      %p387 = scmp.eq.s32.totalorder %s82, 1
      %p388 = por %p386, %p387
      %p390 = scmp.ne.s32.totalorder %s375, %s389
      %p391 = scmp.eq.s32.totalorder %s82, 0
      %p392 = por %p390, %p391
      %s394 = sadd.s32 %s393, 1
      %p397 = scmp.eq.s32.totalorder %s76, 1
      %p398 = scmp.ne.s32.totalorder %s393, %s395
      %p399 = scmp.eq.s32.totalorder %s76, 0
      %p400 = por %p398, %p399
      %p401 = scmp.ne.s32.totalorder %s393, %s395
      %p402 = scmp.eq.s32.totalorder %s81, 1
      %p403 = por %p401, %p402
      %p404 = scmp.ne.s32.totalorder %s395, %s396
      %p405 = scmp.eq.s32.totalorder %s81, 0
      %p406 = por %p404, %p405
      %p407 = scmp.ne.s32.totalorder %s395, %s396
      %p408 = scmp.eq.s32.totalorder %s82, 1
      %p409 = por %p407, %p408
      %p411 = scmp.ne.s32.totalorder %s396, %s410
      %p412 = scmp.eq.s32.totalorder %s82, 0
      %p413 = por %p411, %p412
      %s415 = sadd.s32 %s414, 1
      %p418 = scmp.eq.s32.totalorder %s76, 1
      %p419 = scmp.ne.s32.totalorder %s414, %s416
      %p420 = scmp.eq.s32.totalorder %s76, 0
      %p421 = por %p419, %p420
      %p422 = scmp.ne.s32.totalorder %s414, %s416
      %p423 = scmp.eq.s32.totalorder %s81, 1
      %p424 = por %p422, %p423
      %p425 = scmp.ne.s32.totalorder %s416, %s417
      %p426 = scmp.eq.s32.totalorder %s81, 0
      %p427 = por %p425, %p426
      %p428 = scmp.ne.s32.totalorder %s416, %s417
      %p429 = scmp.eq.s32.totalorder %s82, 1
      %p430 = por %p428, %p429
      %p432 = scmp.ne.s32.totalorder %s417, %s431
      %p433 = scmp.eq.s32.totalorder %s82, 0
      %p434 = por %p432, %p433
      %s436 = sadd.s32 %s435, 1
      %p439 = scmp.eq.s32.totalorder %s76, 1
      %p440 = scmp.ne.s32.totalorder %s435, %s437
      %p441 = scmp.eq.s32.totalorder %s76, 0
      %p442 = por %p440, %p441
      %p443 = scmp.ne.s32.totalorder %s435, %s437
      %p444 = scmp.eq.s32.totalorder %s81, 1
      %p445 = por %p443, %p444
      %p446 = scmp.ne.s32.totalorder %s437, %s438
      %p447 = scmp.eq.s32.totalorder %s81, 0
      %p448 = por %p446, %p447
      %p449 = scmp.ne.s32.totalorder %s437, %s438
      %p450 = scmp.eq.s32.totalorder %s82, 1
      %p451 = por %p449, %p450
      %p453 = scmp.ne.s32.totalorder %s438, %s452
      %p454 = scmp.eq.s32.totalorder %s82, 0
      %p455 = por %p453, %p454
      %s457 = sadd.s32 %s456, 1
      %p460 = scmp.eq.s32.totalorder %s76, 1
      %p461 = scmp.ne.s32.totalorder %s456, %s458
      %p462 = scmp.eq.s32.totalorder %s76, 0
      %p463 = por %p461, %p462
      %p464 = scmp.ne.s32.totalorder %s456, %s458
      %p465 = scmp.eq.s32.totalorder %s81, 1
      %p466 = por %p464, %p465
      %p467 = scmp.ne.s32.totalorder %s458, %s459
      %p468 = scmp.eq.s32.totalorder %s81, 0
      %p469 = por %p467, %p468
      %p470 = scmp.ne.s32.totalorder %s458, %s459
      %p471 = scmp.eq.s32.totalorder %s82, 1
      %p472 = por %p470, %p471
      %p474 = scmp.ne.s32.totalorder %s459, %s473
      %p475 = scmp.eq.s32.totalorder %s82, 0
      %p476 = por %p474, %p475
      %s478 = sadd.s32 %s477, 1
      %p481 = scmp.eq.s32.totalorder %s76, 1
      %p482 = scmp.ne.s32.totalorder %s477, %s479
      %p483 = scmp.eq.s32.totalorder %s76, 0
      %p484 = por %p482, %p483
      %p485 = scmp.ne.s32.totalorder %s477, %s479
      %p486 = scmp.eq.s32.totalorder %s81, 1
      %p487 = por %p485, %p486
      %p488 = scmp.ne.s32.totalorder %s479, %s480
      %p489 = scmp.eq.s32.totalorder %s81, 0
      %p490 = por %p488, %p489
      %p491 = scmp.ne.s32.totalorder %s479, %s480
      %p492 = scmp.eq.s32.totalorder %s82, 1
      %p493 = por %p491, %p492
      %p495 = scmp.ne.s32.totalorder %s480, %s494
      %p496 = scmp.eq.s32.totalorder %s82, 0
      %p497 = por %p495, %p496
      %s499 = sadd.s32 %s498, 1
      %p502 = scmp.eq.s32.totalorder %s76, 1
      %p503 = scmp.ne.s32.totalorder %s498, %s500
      %p504 = scmp.eq.s32.totalorder %s76, 0
      %p505 = por %p503, %p504
      %p506 = scmp.ne.s32.totalorder %s498, %s500
      %p507 = scmp.eq.s32.totalorder %s81, 1
      %p508 = por %p506, %p507
      %p509 = scmp.ne.s32.totalorder %s500, %s501
      %p510 = scmp.eq.s32.totalorder %s81, 0
      %p511 = por %p509, %p510
      %p512 = scmp.ne.s32.totalorder %s500, %s501
      %p513 = scmp.eq.s32.totalorder %s82, 1
      %p514 = por %p512, %p513
      %p516 = scmp.ne.s32.totalorder %s501, %s515
      %p517 = scmp.eq.s32.totalorder %s82, 0
      %p518 = por %p516, %p517
      %s520 = sadd.s32 %s519, 1
      %p523 = scmp.eq.s32.totalorder %s76, 1
      %p524 = scmp.ne.s32.totalorder %s519, %s521
      %p525 = scmp.eq.s32.totalorder %s76, 0
      %p526 = por %p524, %p525
      %p527 = scmp.ne.s32.totalorder %s519, %s521
      %p528 = scmp.eq.s32.totalorder %s81, 1
      %p529 = por %p527, %p528
      %p530 = scmp.ne.s32.totalorder %s521, %s522
      %p531 = scmp.eq.s32.totalorder %s81, 0
      %p532 = por %p530, %p531
      %p533 = scmp.ne.s32.totalorder %s521, %s522
      %p534 = scmp.eq.s32.totalorder %s82, 1
      %p535 = por %p533, %p534
      %p537 = scmp.ne.s32.totalorder %s522, %s536
      %p538 = scmp.eq.s32.totalorder %s82, 0
      %p539 = por %p537, %p538
      %s541 = sadd.s32 %s540, 1
      %p544 = scmp.eq.s32.totalorder %s76, 1
      %p545 = scmp.ne.s32.totalorder %s540, %s542
      %p546 = scmp.eq.s32.totalorder %s76, 0
      %p547 = por %p545, %p546
      %p548 = scmp.ne.s32.totalorder %s540, %s542
      %p549 = scmp.eq.s32.totalorder %s81, 1
      %p550 = por %p548, %p549
      %p551 = scmp.ne.s32.totalorder %s542, %s543
      %p552 = scmp.eq.s32.totalorder %s81, 0
      %p553 = por %p551, %p552
      %p554 = scmp.ne.s32.totalorder %s542, %s543
      %p555 = scmp.eq.s32.totalorder %s82, 1
      %p556 = por %p554, %p555
      %p558 = scmp.ne.s32.totalorder %s543, %s557
      %p559 = scmp.eq.s32.totalorder %s82, 0
      %p560 = por %p558, %p559
      %s562 = sadd.s32 %s561, 1
      %p565 = scmp.eq.s32.totalorder %s76, 1
      %p566 = scmp.ne.s32.totalorder %s561, %s563
      %p567 = scmp.eq.s32.totalorder %s76, 0
      %p568 = por %p566, %p567
      %p569 = scmp.ne.s32.totalorder %s561, %s563
      %p570 = scmp.eq.s32.totalorder %s81, 1
      %p571 = por %p569, %p570
      %p572 = scmp.ne.s32.totalorder %s563, %s564
      %p573 = scmp.eq.s32.totalorder %s81, 0
      %p574 = por %p572, %p573
      %p575 = scmp.ne.s32.totalorder %s563, %s564
      %p576 = scmp.eq.s32.totalorder %s82, 1
      %p577 = por %p575, %p576
      %p579 = scmp.ne.s32.totalorder %s564, %s578
      %p580 = scmp.eq.s32.totalorder %s82, 0
      %p581 = por %p579, %p580
      %s583 = sadd.s32 %s582, 1
      %p586 = scmp.eq.s32.totalorder %s76, 1
      %p587 = scmp.ne.s32.totalorder %s582, %s584
      %p588 = scmp.eq.s32.totalorder %s76, 0
      %p589 = por %p587, %p588
      %p590 = scmp.ne.s32.totalorder %s582, %s584
      %p591 = scmp.eq.s32.totalorder %s81, 1
      %p592 = por %p590, %p591
      %p593 = scmp.ne.s32.totalorder %s584, %s585
      %p594 = scmp.eq.s32.totalorder %s81, 0
      %p595 = por %p593, %p594
      %p596 = scmp.ne.s32.totalorder %s584, %s585
      %p597 = scmp.eq.s32.totalorder %s82, 1
      %p598 = por %p596, %p597
      %p600 = scmp.ne.s32.totalorder %s585, %s599
      %p601 = scmp.eq.s32.totalorder %s82, 0
      %p602 = por %p600, %p601
      %s604 = sadd.s32 %s603, 1
      %p607 = scmp.eq.s32.totalorder %s76, 1
      %p608 = scmp.ne.s32.totalorder %s603, %s605
      %p609 = scmp.eq.s32.totalorder %s76, 0
      %p610 = por %p608, %p609
      %p611 = scmp.ne.s32.totalorder %s603, %s605
      %p612 = scmp.eq.s32.totalorder %s81, 1
      %p613 = por %p611, %p612
      %p614 = scmp.ne.s32.totalorder %s605, %s606
      %p615 = scmp.eq.s32.totalorder %s81, 0
      %p616 = por %p614, %p615
      %p617 = scmp.ne.s32.totalorder %s605, %s606
      %p618 = scmp.eq.s32.totalorder %s82, 1
      %p619 = por %p617, %p618
      %p621 = scmp.ne.s32.totalorder %s606, %s620
      %p622 = scmp.eq.s32.totalorder %s82, 0
      %p623 = por %p621, %p622
      %s625 = sadd.s32 %s624, 1
      %p628 = scmp.eq.s32.totalorder %s76, 1
      %p629 = scmp.ne.s32.totalorder %s624, %s626
      %p630 = scmp.eq.s32.totalorder %s76, 0
      %p631 = por %p629, %p630
      %p632 = scmp.ne.s32.totalorder %s624, %s626
      %p633 = scmp.eq.s32.totalorder %s81, 1
      %p634 = por %p632, %p633
      %p635 = scmp.ne.s32.totalorder %s626, %s627
      %p636 = scmp.eq.s32.totalorder %s81, 0
      %p637 = por %p635, %p636
      %p638 = scmp.ne.s32.totalorder %s626, %s627
      %p639 = scmp.eq.s32.totalorder %s82, 1
      %p640 = por %p638, %p639
      %p642 = scmp.ne.s32.totalorder %s627, %s641
      %p643 = scmp.eq.s32.totalorder %s82, 0
      %p644 = por %p642, %p643
      %s646 = sadd.s32 %s645, 1
      %p649 = scmp.eq.s32.totalorder %s76, 1
      %p650 = scmp.ne.s32.totalorder %s645, %s647
      %p651 = scmp.eq.s32.totalorder %s76, 0
      %p652 = por %p650, %p651
      %p653 = scmp.ne.s32.totalorder %s645, %s647
      %p654 = scmp.eq.s32.totalorder %s81, 1
      %p655 = por %p653, %p654
      %p656 = scmp.ne.s32.totalorder %s647, %s648
      %p657 = scmp.eq.s32.totalorder %s81, 0
      %p658 = por %p656, %p657
      %p659 = scmp.ne.s32.totalorder %s647, %s648
      %p660 = scmp.eq.s32.totalorder %s82, 1
      %p661 = por %p659, %p660
      %p663 = scmp.ne.s32.totalorder %s648, %s662
      %p664 = scmp.eq.s32.totalorder %s82, 0
      %p665 = por %p663, %p664
      %s667 = sadd.s32 %s666, 1
      %p670 = scmp.eq.s32.totalorder %s76, 1
      %p671 = scmp.ne.s32.totalorder %s666, %s668
      %p672 = scmp.eq.s32.totalorder %s76, 0
      %p673 = por %p671, %p672
      %p674 = scmp.ne.s32.totalorder %s666, %s668
      %p675 = scmp.eq.s32.totalorder %s81, 1
      %p676 = por %p674, %p675
      %p677 = scmp.ne.s32.totalorder %s668, %s669
      %p678 = scmp.eq.s32.totalorder %s81, 0
      %p679 = por %p677, %p678
      %p680 = scmp.ne.s32.totalorder %s668, %s669
      %p681 = scmp.eq.s32.totalorder %s82, 1
      %p682 = por %p680, %p681
      %p684 = scmp.ne.s32.totalorder %s669, %s683
      %p685 = scmp.eq.s32.totalorder %s82, 0
      %p686 = por %p684, %p685
      %s688 = sadd.s32 %s687, 1
      %p691 = scmp.eq.s32.totalorder %s76, 1
      %p692 = scmp.ne.s32.totalorder %s687, %s689
      %p693 = scmp.eq.s32.totalorder %s76, 0
      %p694 = por %p692, %p693
      %p695 = scmp.ne.s32.totalorder %s687, %s689
      %p696 = scmp.eq.s32.totalorder %s81, 1
      %p697 = por %p695, %p696
      %p698 = scmp.ne.s32.totalorder %s689, %s690
      %p699 = scmp.eq.s32.totalorder %s81, 0
      %p700 = por %p698, %p699
      %p701 = scmp.ne.s32.totalorder %s689, %s690
      %p702 = scmp.eq.s32.totalorder %s82, 1
      %p703 = por %p701, %p702
      %p705 = scmp.ne.s32.totalorder %s690, %s704
      %p706 = scmp.eq.s32.totalorder %s82, 0
      %p707 = por %p705, %p706
      %s708 = ssub.s32 %s76, %s83
      %p709 = scmp.eq.s32.totalorder %s708, 0
      %s711 = sadd.s32 %s710, 1
      %s712 = scalar_select %p709, %s710, %s711
      %p715 = pneg %p709
      %p716 = scmp.eq.s32.totalorder %s76, 1
      %p717 = por %p715, %p716
      %p718 = scmp.ne.s32.totalorder %s710, %s713
      %p719 = scmp.eq.s32.totalorder %s76, 0
      %p720 = por %p718, %p719
      %p721 = scmp.ne.s32.totalorder %s710, %s713
      %p722 = scmp.eq.s32.totalorder %s81, 1
      %p723 = por %p721, %p722
      %p724 = scmp.ne.s32.totalorder %s713, %s714
      %p725 = scmp.eq.s32.totalorder %s81, 0
      %p726 = por %p724, %p725
      %p727 = scmp.ne.s32.totalorder %s713, %s714
      %p728 = scmp.eq.s32.totalorder %s82, 1
      %p729 = por %p727, %p728
      %p731 = scmp.ne.s32.totalorder %s714, %s730
      %p732 = scmp.eq.s32.totalorder %s82, 0
      %p733 = por %p731, %p732
      %p734 = scmp.le.s32.totalorder 1, %s76
      %p735 = scmp.lt.s32.totalorder %s76, 3
      %p736 = pnand %p734, %p735
      %p737 = pneg %p736
      // Predicated region
      $region9: #{tpu_custom_call.1} parent=5 // pred_check
        _
      $region10: #{tpu_custom_call.1} parent=5 // pred_check_branch
        %739 = sbr.rel (%p736) target = $region12
      $region11: #{tpu_custom_call.1} parent=5 // pred_region
        %s740 = ssub.s32 %s76, 1
        // Predicated region
        $region13: #{tpu_custom_call.1} parent=11 // pred_check
          %p741 = pneg %p175
        $region14: #{tpu_custom_call.1} parent=11 // pred_check_branch
          %743 = sbr.rel (%p741) target = $region16
        $region15: #{tpu_custom_call.1} parent=11 // pred_region
          %s745 = ssub.s32 128, 128
          %746 = vsyncadd [#allocation3], %s745
          %s748 = sshll.u32 [#allocation2], 4
          %s749 = int_to_ptr.vmem [resolvable:$true] %s748
          %751 = dma.hbm_to_vmem [thread:$0]  %s7, 128, %s749, [#allocation3]
        $region16: #{tpu_custom_call.1} parent=11 // pred_fallthru
          _
        // Predicated region
        $region17: #{tpu_custom_call.1} parent=11 // pred_check
          %p752 = pneg %p196
        $region18: #{tpu_custom_call.1} parent=11 // pred_check_branch
          %754 = sbr.rel (%p752) target = $region20
        $region19: #{tpu_custom_call.1} parent=11 // pred_region
          _
        $region20: #{tpu_custom_call.1} parent=11 // pred_fallthru
          _
        // Predicated region
        $region21: #{tpu_custom_call.1} parent=11 // pred_check
          %p755 = pneg %p217
        $region22: #{tpu_custom_call.1} parent=11 // pred_check_branch
          %757 = sbr.rel (%p755) target = $region24
        $region23: #{tpu_custom_call.1} parent=11 // pred_region
          %s759 = ssub.s32 256, 256
          %760 = vsyncadd [#allocation6], %s759
          %s761 = sshll.u32 [#allocation5], 4
          %s762 = int_to_ptr.vmem [resolvable:$true] %s761
          %767 = dma.hbm_to_vmem [thread:$0]  %s11, 256, %s762, [#allocation6], 128, 128, 8
        $region24: #{tpu_custom_call.1} parent=11 // pred_fallthru
          _
        // Predicated region
        $region25: #{tpu_custom_call.1} parent=11 // pred_check
          %p768 = pneg %p238
        $region26: #{tpu_custom_call.1} parent=11 // pred_check_branch
          %770 = sbr.rel (%p768) target = $region28
        $region27: #{tpu_custom_call.1} parent=11 // pred_region
          %s772 = ssub.s32 16, 16
          %773 = vsyncadd [#allocation6], %s772
          %s775 = sshll.u32 [#allocation7], 4
          %s776 = int_to_ptr.vmem [resolvable:$true] %s775
          %778 = dma.hbm_to_vmem [thread:$0]  %s13, 16, %s776, [#allocation6]
        $region28: #{tpu_custom_call.1} parent=11 // pred_fallthru
          _
        // Predicated region
        $region29: #{tpu_custom_call.1} parent=11 // pred_check
          %p779 = pneg %p259
        $region30: #{tpu_custom_call.1} parent=11 // pred_check_branch
          %781 = sbr.rel (%p779) target = $region32
        $region31: #{tpu_custom_call.1} parent=11 // pred_region
          %s783 = ssub.s32 256, 256
          %784 = vsyncadd [#allocation9], %s783
          %s785 = sshll.u32 [#allocation8], 4
          %s786 = int_to_ptr.vmem [resolvable:$true] %s785
          %791 = dma.hbm_to_vmem [thread:$0]  %s15, 256, %s786, [#allocation9], 128, 128, 8
        $region32: #{tpu_custom_call.1} parent=11 // pred_fallthru
          _
        // Predicated region
        $region33: #{tpu_custom_call.1} parent=11 // pred_check
          %p792 = pneg %p280
        $region34: #{tpu_custom_call.1} parent=11 // pred_check_branch
          %794 = sbr.rel (%p792) target = $region36
        $region35: #{tpu_custom_call.1} parent=11 // pred_region
          %s796 = ssub.s32 16, 16
          %797 = vsyncadd [#allocation9], %s796
          %s799 = sshll.u32 [#allocation10], 4
          %s800 = int_to_ptr.vmem [resolvable:$true] %s799
          %802 = dma.hbm_to_vmem [thread:$0]  %s17, 16, %s800, [#allocation9]
        $region36: #{tpu_custom_call.1} parent=11 // pred_fallthru
          _
        // Predicated region
        $region37: #{tpu_custom_call.1} parent=11 // pred_check
          %p803 = pneg %p301
        $region38: #{tpu_custom_call.1} parent=11 // pred_check_branch
          %805 = sbr.rel (%p803) target = $region40
        $region39: #{tpu_custom_call.1} parent=11 // pred_region
          %s807 = ssub.s32 128, 128
          %808 = vsyncadd [#allocation12], %s807
          %s810 = sshll.u32 [#allocation11], 4
          %s811 = int_to_ptr.vmem [resolvable:$true] %s810
          %813 = dma.hbm_to_vmem [thread:$0]  %s19, 128, %s811, [#allocation12]
        $region40: #{tpu_custom_call.1} parent=11 // pred_fallthru
          _
        // Predicated region
        $region41: #{tpu_custom_call.1} parent=11 // pred_check
          %p814 = pneg %p322
        $region42: #{tpu_custom_call.1} parent=11 // pred_check_branch
          %816 = sbr.rel (%p814) target = $region44
        $region43: #{tpu_custom_call.1} parent=11 // pred_region
          %s818 = ssub.s32 16, 16
          %819 = vsyncadd [#allocation12], %s818
          %s821 = sshll.u32 [#allocation13], 4
          %s822 = int_to_ptr.vmem [resolvable:$true] %s821
          %824 = dma.hbm_to_vmem [thread:$0]  %s21, 16, %s822, [#allocation12]
        $region44: #{tpu_custom_call.1} parent=11 // pred_fallthru
          _
        // Predicated region
        $region45: #{tpu_custom_call.1} parent=11 // pred_check
          %p825 = pneg %p343
        $region46: #{tpu_custom_call.1} parent=11 // pred_check_branch
          %827 = sbr.rel (%p825) target = $region48
        $region47: #{tpu_custom_call.1} parent=11 // pred_region
          %s829 = ssub.s32 256, 256
          %830 = vsyncadd [#allocation15], %s829
          %s831 = sshll.u32 [#allocation14], 4
          %s832 = int_to_ptr.vmem [resolvable:$true] %s831
          %837 = dma.hbm_to_vmem [thread:$0]  %s23, 256, %s832, [#allocation15], 128, 128, 8
        $region48: #{tpu_custom_call.1} parent=11 // pred_fallthru
          _
        // Predicated region
        $region49: #{tpu_custom_call.1} parent=11 // pred_check
          %p838 = pneg %p364
        $region50: #{tpu_custom_call.1} parent=11 // pred_check_branch
          %840 = sbr.rel (%p838) target = $region52
        $region51: #{tpu_custom_call.1} parent=11 // pred_region
          %s842 = ssub.s32 16, 16
          %843 = vsyncadd [#allocation15], %s842
          %s845 = sshll.u32 [#allocation16], 4
          %s846 = int_to_ptr.vmem [resolvable:$true] %s845
          %848 = dma.hbm_to_vmem [thread:$0]  %s25, 16, %s846, [#allocation15]
        $region52: #{tpu_custom_call.1} parent=11 // pred_fallthru
          _
        // Predicated region
        $region53: #{tpu_custom_call.1} parent=11 // pred_check
          %p849 = pneg %p385
        $region54: #{tpu_custom_call.1} parent=11 // pred_check_branch
          %851 = sbr.rel (%p849) target = $region56
        $region55: #{tpu_custom_call.1} parent=11 // pred_region
          %s853 = ssub.s32 256, 256
          %854 = vsyncadd [#allocation18], %s853
          %s855 = sshll.u32 [#allocation17], 4
          %s856 = int_to_ptr.vmem [resolvable:$true] %s855
          %861 = dma.hbm_to_vmem [thread:$0]  %s27, 256, %s856, [#allocation18], 128, 128, 8
        $region56: #{tpu_custom_call.1} parent=11 // pred_fallthru
          _
        // Predicated region
        $region57: #{tpu_custom_call.1} parent=11 // pred_check
          %p862 = pneg %p406
        $region58: #{tpu_custom_call.1} parent=11 // pred_check_branch
          %864 = sbr.rel (%p862) target = $region60
        $region59: #{tpu_custom_call.1} parent=11 // pred_region
          %s866 = ssub.s32 16, 16
          %867 = vsyncadd [#allocation18], %s866
          %s869 = sshll.u32 [#allocation19], 4
          %s870 = int_to_ptr.vmem [resolvable:$true] %s869
          %872 = dma.hbm_to_vmem [thread:$0]  %s29, 16, %s870, [#allocation18]
        $region60: #{tpu_custom_call.1} parent=11 // pred_fallthru
          _
        // Predicated region
        $region61: #{tpu_custom_call.1} parent=11 // pred_check
          %p873 = pneg %p427
        $region62: #{tpu_custom_call.1} parent=11 // pred_check_branch
          %875 = sbr.rel (%p873) target = $region64
        $region63: #{tpu_custom_call.1} parent=11 // pred_region
          %s877 = ssub.s32 128, 128
          %878 = vsyncadd [#allocation21], %s877
          %s880 = sshll.u32 [#allocation20], 4
          %s881 = int_to_ptr.vmem [resolvable:$true] %s880
          %883 = dma.hbm_to_vmem [thread:$0]  %s31, 128, %s881, [#allocation21]
        $region64: #{tpu_custom_call.1} parent=11 // pred_fallthru
          _
        // Predicated region
        $region65: #{tpu_custom_call.1} parent=11 // pred_check
          %p884 = pneg %p448
        $region66: #{tpu_custom_call.1} parent=11 // pred_check_branch
          %886 = sbr.rel (%p884) target = $region68
        $region67: #{tpu_custom_call.1} parent=11 // pred_region
          _
        $region68: #{tpu_custom_call.1} parent=11 // pred_fallthru
          _
        // Predicated region
        $region69: #{tpu_custom_call.1} parent=11 // pred_check
          %p887 = pneg %p469
        $region70: #{tpu_custom_call.1} parent=11 // pred_check_branch
          %889 = sbr.rel (%p887) target = $region72
        $region71: #{tpu_custom_call.1} parent=11 // pred_region
          %s891 = ssub.s32 256, 256
          %892 = vsyncadd [#allocation21], %s891
          %s893 = sshll.u32 [#allocation22], 4
          %s894 = int_to_ptr.vmem [resolvable:$true] %s893
          %899 = dma.hbm_to_vmem [thread:$0]  %s35, 256, %s894, [#allocation21], 128, 128, 8
        $region72: #{tpu_custom_call.1} parent=11 // pred_fallthru
          _
        // Predicated region
        $region73: #{tpu_custom_call.1} parent=11 // pred_check
          %p900 = pneg %p490
        $region74: #{tpu_custom_call.1} parent=11 // pred_check_branch
          %902 = sbr.rel (%p900) target = $region76
        $region75: #{tpu_custom_call.1} parent=11 // pred_region
          _
        $region76: #{tpu_custom_call.1} parent=11 // pred_fallthru
          _
        // Predicated region
        $region77: #{tpu_custom_call.1} parent=11 // pred_check
          %p903 = pneg %p511
        $region78: #{tpu_custom_call.1} parent=11 // pred_check_branch
          %905 = sbr.rel (%p903) target = $region80
        $region79: #{tpu_custom_call.1} parent=11 // pred_region
          %s907 = ssub.s32 256, 256
          %908 = vsyncadd [#allocation24], %s907
          %s909 = sshll.u32 [#allocation23], 4
          %s910 = int_to_ptr.vmem [resolvable:$true] %s909
          %915 = dma.hbm_to_vmem [thread:$0]  %s39, 256, %s910, [#allocation24], 128, 128, 8
        $region80: #{tpu_custom_call.1} parent=11 // pred_fallthru
          _
        // Predicated region
        $region81: #{tpu_custom_call.1} parent=11 // pred_check
          %p916 = pneg %p532
        $region82: #{tpu_custom_call.1} parent=11 // pred_check_branch
          %918 = sbr.rel (%p916) target = $region84
        $region83: #{tpu_custom_call.1} parent=11 // pred_region
          _
        $region84: #{tpu_custom_call.1} parent=11 // pred_fallthru
          _
        // Predicated region
        $region85: #{tpu_custom_call.1} parent=11 // pred_check
          %p919 = pneg %p553
        $region86: #{tpu_custom_call.1} parent=11 // pred_check_branch
          %921 = sbr.rel (%p919) target = $region88
        $region87: #{tpu_custom_call.1} parent=11 // pred_region
          _
        $region88: #{tpu_custom_call.1} parent=11 // pred_fallthru
          _
        // Predicated region
        $region89: #{tpu_custom_call.1} parent=11 // pred_check
          %p922 = pneg %p574
        $region90: #{tpu_custom_call.1} parent=11 // pred_check_branch
          %924 = sbr.rel (%p922) target = $region92
        $region91: #{tpu_custom_call.1} parent=11 // pred_region
          _
        $region92: #{tpu_custom_call.1} parent=11 // pred_fallthru
          _
        // Predicated region
        $region93: #{tpu_custom_call.1} parent=11 // pred_check
          %p925 = pneg %p595
        $region94: #{tpu_custom_call.1} parent=11 // pred_check_branch
          %927 = sbr.rel (%p925) target = $region96
        $region95: #{tpu_custom_call.1} parent=11 // pred_region
          _
        $region96: #{tpu_custom_call.1} parent=11 // pred_fallthru
          _
        // Predicated region
        $region97: #{tpu_custom_call.1} parent=11 // pred_check
          %p928 = pneg %p616
        $region98: #{tpu_custom_call.1} parent=11 // pred_check_branch
          %930 = sbr.rel (%p928) target = $region100
        $region99: #{tpu_custom_call.1} parent=11 // pred_region
          _
        $region100: #{tpu_custom_call.1} parent=11 // pred_fallthru
          _
        // Predicated region
        $region101: #{tpu_custom_call.1} parent=11 // pred_check
          %p931 = pneg %p637
        $region102: #{tpu_custom_call.1} parent=11 // pred_check_branch
          %933 = sbr.rel (%p931) target = $region104
        $region103: #{tpu_custom_call.1} parent=11 // pred_region
          _
        $region104: #{tpu_custom_call.1} parent=11 // pred_fallthru
          _
        // Predicated region
        $region105: #{tpu_custom_call.1} parent=11 // pred_check
          %p934 = pneg %p658
        $region106: #{tpu_custom_call.1} parent=11 // pred_check_branch
          %936 = sbr.rel (%p934) target = $region108
        $region107: #{tpu_custom_call.1} parent=11 // pred_region
          _
        $region108: #{tpu_custom_call.1} parent=11 // pred_fallthru
          _
        // Predicated region
        $region109: #{tpu_custom_call.1} parent=11 // pred_check
          %p937 = pneg %p679
        $region110: #{tpu_custom_call.1} parent=11 // pred_check_branch
          %939 = sbr.rel (%p937) target = $region112
        $region111: #{tpu_custom_call.1} parent=11 // pred_region
          %s941 = ssub.s32 512, 512
          %942 = vsyncadd [#allocation24], %s941
          %s943 = sshll.u32 [#allocation25], 4
          %s944 = int_to_ptr.vmem [resolvable:$true] %s943
          %949 = dma.hbm_to_vmem [thread:$0]  %s55, 512, %s944, [#allocation24], 128, 128, 8
        $region112: #{tpu_custom_call.1} parent=11 // pred_fallthru
          _
        // Predicated region
        $region113: #{tpu_custom_call.1} parent=11 // pred_check
          %p950 = pneg %p700
        $region114: #{tpu_custom_call.1} parent=11 // pred_check_branch
          %952 = sbr.rel (%p950) target = $region116
        $region115: #{tpu_custom_call.1} parent=11 // pred_region
          _
        $region116: #{tpu_custom_call.1} parent=11 // pred_fallthru
          _
      $region12: #{tpu_custom_call.1} parent=5 // pred_fallthru
        _
      %p953 = scmp.lt.s32.totalorder %s76, 2
      // Predicated region
      $region117: #{tpu_custom_call.1} parent=5 // pred_check
        %p954 = pneg %p953
      $region118: #{tpu_custom_call.1} parent=5 // pred_check_branch
        %956 = sbr.rel (%p954) target = $region120
      $region119: #{tpu_custom_call.1} parent=5 // pred_region
        // Predicated region
        $region121: #{tpu_custom_call.1} parent=119 // pred_check
          %p957 = pneg %p96
        $region122: #{tpu_custom_call.1} parent=119 // pred_check_branch
          %959 = sbr.rel (%p957) target = $region124
        $region123: #{tpu_custom_call.1} parent=119 // pred_region
          %p960 = scmp.lt.s32.totalorder %s76, 1
          %s961 = scalar_select %p960, %s76, 1
          %s962 = smul.addr %s961, 8
          %s963 = scalar_lea.vmem %s1, %s962
        $region124: #{tpu_custom_call.1} parent=119 // pred_fallthru
          _
        // Predicated region
        $region125: #{tpu_custom_call.1} parent=119 // pred_check
          %p964 = pneg %p122
        $region126: #{tpu_custom_call.1} parent=119 // pred_check_branch
          %966 = sbr.rel (%p964) target = $region128
        $region127: #{tpu_custom_call.1} parent=119 // pred_region
          %p967 = scmp.lt.s32.totalorder %s76, 1
          %s968 = scalar_select %p967, %s76, 1
          %s969 = smul.addr %s968, 8
          %s970 = scalar_lea.vmem %s3, %s969
        $region128: #{tpu_custom_call.1} parent=119 // pred_fallthru
          _
        // Predicated region
        $region129: #{tpu_custom_call.1} parent=119 // pred_check
          %p971 = pneg %p148
        $region130: #{tpu_custom_call.1} parent=119 // pred_check_branch
          %973 = sbr.rel (%p971) target = $region132
        $region131: #{tpu_custom_call.1} parent=119 // pred_region
          %p974 = scmp.lt.s32.totalorder %s76, 1
          %s975 = scalar_select %p974, %s76, 1
          %s976 = smul.addr %s975, 8
          %s977 = scalar_lea.vmem %s5, %s976
        $region132: #{tpu_custom_call.1} parent=119 // pred_fallthru
          _
      $region120: #{tpu_custom_call.1} parent=5 // pred_fallthru
        _
      %p978 = scmp.le.s32.totalorder 1, %s76
      %p979 = scmp.lt.s32.totalorder %s76, 3
      %p980 = pnand %p978, %p979
      %p981 = pneg %p980
      // Predicated region
      $region133: #{tpu_custom_call.1} parent=5 // pred_check
        _
      $region134: #{tpu_custom_call.1} parent=5 // pred_check_branch
        %983 = sbr.rel (%p980) target = $region136
      $region135: #{tpu_custom_call.1} parent=5 // pred_region
        %s984 = ssub.s32 %s76, 1
        // Predicated region
        $region137: #{tpu_custom_call.1} parent=135 // pred_check
          %p985 = pneg %p175
        $region138: #{tpu_custom_call.1} parent=135 // pred_check_branch
          %987 = sbr.rel (%p985) target = $region140
        $region139: #{tpu_custom_call.1} parent=135 // pred_region
          %988 = dma.done [#allocation3], 128
        $region140: #{tpu_custom_call.1} parent=135 // pred_fallthru
          _
        // Predicated region
        $region141: #{tpu_custom_call.1} parent=135 // pred_check
          %p989 = pneg %p217
        $region142: #{tpu_custom_call.1} parent=135 // pred_check_branch
          %991 = sbr.rel (%p989) target = $region144
        $region143: #{tpu_custom_call.1} parent=135 // pred_region
          %992 = dma.done [#allocation6], 256
        $region144: #{tpu_custom_call.1} parent=135 // pred_fallthru
          _
        // Predicated region
        $region145: #{tpu_custom_call.1} parent=135 // pred_check
          %p993 = pneg %p238
        $region146: #{tpu_custom_call.1} parent=135 // pred_check_branch
          %995 = sbr.rel (%p993) target = $region148
        $region147: #{tpu_custom_call.1} parent=135 // pred_region
          %996 = dma.done [#allocation6], 16
        $region148: #{tpu_custom_call.1} parent=135 // pred_fallthru
          _
        // Predicated region
        $region149: #{tpu_custom_call.1} parent=135 // pred_check
          %p997 = pneg %p259
        $region150: #{tpu_custom_call.1} parent=135 // pred_check_branch
          %999 = sbr.rel (%p997) target = $region152
        $region151: #{tpu_custom_call.1} parent=135 // pred_region
          %1000 = dma.done [#allocation9], 256
        $region152: #{tpu_custom_call.1} parent=135 // pred_fallthru
          _
        // Predicated region
        $region153: #{tpu_custom_call.1} parent=135 // pred_check
          %p1001 = pneg %p280
        $region154: #{tpu_custom_call.1} parent=135 // pred_check_branch
          %1003 = sbr.rel (%p1001) target = $region156
        $region155: #{tpu_custom_call.1} parent=135 // pred_region
          %1004 = dma.done [#allocation9], 16
        $region156: #{tpu_custom_call.1} parent=135 // pred_fallthru
          _
        // Predicated region
        $region157: #{tpu_custom_call.1} parent=135 // pred_check
          %p1005 = pneg %p301
        $region158: #{tpu_custom_call.1} parent=135 // pred_check_branch
          %1007 = sbr.rel (%p1005) target = $region160
        $region159: #{tpu_custom_call.1} parent=135 // pred_region
          %1008 = dma.done [#allocation12], 128
        $region160: #{tpu_custom_call.1} parent=135 // pred_fallthru
          _
        // Predicated region
        $region161: #{tpu_custom_call.1} parent=135 // pred_check
          %p1009 = pneg %p322
        $region162: #{tpu_custom_call.1} parent=135 // pred_check_branch
          %1011 = sbr.rel (%p1009) target = $region164
        $region163: #{tpu_custom_call.1} parent=135 // pred_region
          %1012 = dma.done [#allocation12], 16
        $region164: #{tpu_custom_call.1} parent=135 // pred_fallthru
          _
        // Predicated region
        $region165: #{tpu_custom_call.1} parent=135 // pred_check
          %p1013 = pneg %p343
        $region166: #{tpu_custom_call.1} parent=135 // pred_check_branch
          %1015 = sbr.rel (%p1013) target = $region168
        $region167: #{tpu_custom_call.1} parent=135 // pred_region
          %1016 = dma.done [#allocation15], 256
        $region168: #{tpu_custom_call.1} parent=135 // pred_fallthru
          _
        // Predicated region
        $region169: #{tpu_custom_call.1} parent=135 // pred_check
          %p1017 = pneg %p364
        $region170: #{tpu_custom_call.1} parent=135 // pred_check_branch
          %1019 = sbr.rel (%p1017) target = $region172
        $region171: #{tpu_custom_call.1} parent=135 // pred_region
          %1020 = dma.done [#allocation15], 16
        $region172: #{tpu_custom_call.1} parent=135 // pred_fallthru
          _
        // Predicated region
        $region173: #{tpu_custom_call.1} parent=135 // pred_check
          %p1021 = pneg %p385
        $region174: #{tpu_custom_call.1} parent=135 // pred_check_branch
          %1023 = sbr.rel (%p1021) target = $region176
        $region175: #{tpu_custom_call.1} parent=135 // pred_region
          %1024 = dma.done [#allocation18], 256
        $region176: #{tpu_custom_call.1} parent=135 // pred_fallthru
          _
        // Predicated region
        $region177: #{tpu_custom_call.1} parent=135 // pred_check
          %p1025 = pneg %p406
        $region178: #{tpu_custom_call.1} parent=135 // pred_check_branch
          %1027 = sbr.rel (%p1025) target = $region180
        $region179: #{tpu_custom_call.1} parent=135 // pred_region
          %1028 = dma.done [#allocation18], 16
        $region180: #{tpu_custom_call.1} parent=135 // pred_fallthru
          _
        // Predicated region
        $region181: #{tpu_custom_call.1} parent=135 // pred_check
          %p1029 = pneg %p427
        $region182: #{tpu_custom_call.1} parent=135 // pred_check_branch
          %1031 = sbr.rel (%p1029) target = $region184
        $region183: #{tpu_custom_call.1} parent=135 // pred_region
          %1032 = dma.done [#allocation21], 128
        $region184: #{tpu_custom_call.1} parent=135 // pred_fallthru
          _
        // Predicated region
        $region185: #{tpu_custom_call.1} parent=135 // pred_check
          %p1033 = pneg %p469
        $region186: #{tpu_custom_call.1} parent=135 // pred_check_branch
          %1035 = sbr.rel (%p1033) target = $region188
        $region187: #{tpu_custom_call.1} parent=135 // pred_region
          %1036 = dma.done [#allocation21], 256
        $region188: #{tpu_custom_call.1} parent=135 // pred_fallthru
          _
        // Predicated region
        $region189: #{tpu_custom_call.1} parent=135 // pred_check
          %p1037 = pneg %p511
        $region190: #{tpu_custom_call.1} parent=135 // pred_check_branch
          %1039 = sbr.rel (%p1037) target = $region192
        $region191: #{tpu_custom_call.1} parent=135 // pred_region
          %1040 = dma.done [#allocation24], 256
        $region192: #{tpu_custom_call.1} parent=135 // pred_fallthru
          _
        // Predicated region
        $region193: #{tpu_custom_call.1} parent=135 // pred_check
          %p1041 = pneg %p679
        $region194: #{tpu_custom_call.1} parent=135 // pred_check_branch
          %1043 = sbr.rel (%p1041) target = $region196
        $region195: #{tpu_custom_call.1} parent=135 // pred_region
          %1044 = dma.done [#allocation24], 512
        $region196: #{tpu_custom_call.1} parent=135 // pred_fallthru
          _
        %p1045 = scmp.lt.s32.totalorder %s81, 1
        %s1046 = scalar_select %p1045, %s81, 1
        %s1047 = smul.addr %s1046, 8
        %s1048 = scalar_lea.vmem %s1, %s1047
        %p1049 = pneg %p102
        %p1050 = pneg %p99
        %p1051 = scmp.lt.s32.totalorder %s81, 1
        %s1052 = scalar_select %p1051, %s81, 1
        %s1053 = smul.addr %s1052, 8
        %s1054 = scalar_lea.vmem %s3, %s1053
        %p1055 = pneg %p128
        %p1056 = pneg %p125
        %p1057 = scmp.lt.s32.totalorder %s81, 1
        %s1058 = scalar_select %p1057, %s81, 1
        %s1059 = smul.addr %s1058, 8
        %s1060 = scalar_lea.vmem %s5, %s1059
        %p1061 = pneg %p154
        %p1062 = pneg %p151
        %p1063 = pneg %p175
        %p1064 = pneg %p172
        %p1065 = pneg %p196
        %p1066 = pneg %p193
        %p1067 = pneg %p217
        %p1068 = pneg %p214
        %p1069 = pneg %p238
        %p1070 = pneg %p235
        %p1071 = pneg %p259
        %p1072 = pneg %p256
        %p1073 = pneg %p280
        %p1074 = pneg %p277
        %p1075 = pneg %p301
        %p1076 = pneg %p298
        %p1077 = pneg %p322
        %p1078 = pneg %p319
        %p1079 = pneg %p343
        %p1080 = pneg %p340
        %p1081 = pneg %p364
        %p1082 = pneg %p361
        %p1083 = pneg %p385
        %p1084 = pneg %p382
        %p1085 = pneg %p406
        %p1086 = pneg %p403
        %p1087 = pneg %p427
        %p1088 = pneg %p424
        %p1089 = pneg %p448
        %p1090 = pneg %p445
        %p1091 = pneg %p469
        %p1092 = pneg %p466
        %p1093 = pneg %p490
        %p1094 = pneg %p487
        %p1095 = pneg %p511
        %p1096 = pneg %p508
        %p1097 = pneg %p532
        %p1098 = pneg %p529
        %p1099 = pneg %p553
        %p1100 = pneg %p550
        %p1101 = pneg %p574
        %p1102 = pneg %p571
        %p1103 = pneg %p595
        %p1104 = pneg %p592
        %p1105 = pneg %p616
        %p1106 = pneg %p613
        %p1107 = pneg %p637
        %p1108 = pneg %p634
        %p1109 = pneg %p658
        %p1110 = pneg %p655
        %p1111 = pneg %p679
        %p1112 = pneg %p676
        %p1113 = pneg %p700
        %p1114 = pneg %p697
        %p1115 = pneg %p726
        %p1116 = pneg %p723
        %s1117 = sand.u32 %s713, 1
        %s1118 = scalar_lea.sflag [#allocation4], %s1117
        %s1119 = sand.u32 %s713, 1
        %s1120 = smul.addr %s1119, 8
        %s1121 = scalar_lea.vmem [#allocation26], %s1120
        %p1122 = scmp.lt.s32.totalorder %s81, 1
        %s1123 = scalar_select %p1122, %s81, 1
        %s1124 = smul.addr %s1123, 8
        %s1125 = scalar_lea.vmem %s1, %s1124
        %p1126 = scmp.lt.s32.totalorder %s81, 1
        %s1127 = scalar_select %p1126, %s81, 1
        %s1128 = smul.addr %s1127, 8
        %s1129 = scalar_lea.vmem %s3, %s1128
        %p1130 = scmp.lt.s32.totalorder %s81, 1
        %s1131 = scalar_select %p1130, %s81, 1
        %s1132 = smul.addr %s1131, 8
        %s1133 = scalar_lea.vmem %s5, %s1132
        %v1134 = vld [vmem:[%s1125] sm:$0xff]
        %v1135 = vld [vmem:[#allocation2] sm:$0x3f]
        %v1136 = vld [vmem:[%s9] sm:$0x1]
        %v1138 = vlaneseq
        %v1139 = vshrl.u32 %v1138, 7
        %v1140 = vsub.s32 0, %v1139
        %v1141 = vrot.slane %v1136, %v1140
        %vm1143 = vcmask 48128
        %v1145 = vsel %vm1143, %v1134, 0
        %vm1147 = vcmask 1045504
        %v1149 = vsel %vm1147, %v1135, 0
        %1151 = vmatprep.subr.mxu0 0.0
        %1152 = vmatpush1.msra.mxu0 0.0
        %1153 = vmatprep.subr.mxu0 0.0
        %1154 = vmatpush1.msra.mxu0 0.0
        %1155 = vmatprep.subr.mxu0 0.0
        %1156 = vmatpush1.msra.mxu0 0.0
        %1157 = vmatprep.subr.mxu0 0.0
        %1158 = vmatpush1.msra.mxu0 0.0
        %1159 = vmatprep.subr.mxu0 0.0
        %1160 = vmatpush1.msra.mxu0 0.0
        %1161 = vmatprep.subr.mxu0 0.0
        %1162 = vmatpush1.msra.mxu0 0.0
        %1163 = vmatprep.subr.mxu0 0.0
        %1164 = vmatpush1.msra.mxu0 0.0
        %1165 = vmatprep.subr.mxu0 0.0
        %1166 = vmatpush1.msra.mxu0 0.0
        %1167 = vmatprep.subr.mxu0 0.0
        %1168 = vmatpush1.msra.mxu0 0.0
        %1169 = vmatprep.subr.mxu0 0.0
        %1170 = vmatpush1.msra.mxu0 0.0
        %1171 = vmatprep.subr.mxu0 0.0
        %1172 = vmatpush1.msra.mxu0 0.0
        %1173 = vmatprep.subr.mxu0 0.0
        %1174 = vmatpush1.msra.mxu0 0.0
        %1175 = vmatprep.subr.mxu0 0.0
        %1176 = vmatpush1.msra.mxu0 0.0
        %1177 = vmatprep.subr.mxu0 0.0
        %1178 = vmatpush1.msra.mxu0 0.0
        %1179 = vmatprep.subr.mxu0 0.0
        %1180 = vmatpush1.msra.mxu0 0.0
        %1181 = vmatprep.subr.mxu0 0.0
        %1182 = vmatpush1.msra.mxu0 %v1149
        %1183 = vmatprep.subr.mxu0 0.0
        %1184 = vmatpush2.msra.mxu0 0.0
        %1185 = vmatprep.subr.mxu0 0.0
        %1186 = vmatpush2.msra.mxu0 0.0
        %1187 = vmatprep.subr.mxu0 0.0
        %1188 = vmatpush2.msra.mxu0 0.0
        %1189 = vmatprep.subr.mxu0 0.0
        %1190 = vmatpush2.msra.mxu0 0.0
        %1191 = vmatprep.subr.mxu0 0.0
        %1192 = vmatpush2.msra.mxu0 0.0
        %1193 = vmatprep.subr.mxu0 0.0
        %1194 = vmatpush2.msra.mxu0 0.0
        %1195 = vmatprep.subr.mxu0 0.0
        %1196 = vmatpush2.msra.mxu0 0.0
        %1197 = vmatprep.subr.mxu0 0.0
        %1198 = vmatpush2.msra.mxu0 0.0
        %1199 = vmatprep.subr.mxu0 0.0
        %1200 = vmatpush2.msra.mxu0 0.0
        %1201 = vmatprep.subr.mxu0 0.0
        %1202 = vmatpush2.msra.mxu0 0.0
        %1203 = vmatprep.subr.mxu0 0.0
        %1204 = vmatpush2.msra.mxu0 0.0
        %1205 = vmatprep.subr.mxu0 0.0
        %1206 = vmatpush2.msra.mxu0 0.0
        %1207 = vmatprep.subr.mxu0 0.0
        %1208 = vmatpush2.msra.mxu0 0.0
        %1209 = vmatprep.subr.mxu0 0.0
        %1210 = vmatpush2.msra.mxu0 0.0
        %1211 = vmatprep.subr.mxu0 0.0
        %1212 = vmatpush2.msra.mxu0 0.0
        %1213 = vmatprep.subr.mxu0 0.0
        %1214 = vmatpush2.msra.mxu0 0.0
        %1215 = vmatprep.mubr.f32.mxu0 0.0
        %1216 = vmatmul.mubr.f32.gmra.mxu0 %v1145
        %v1217 = vpop.f32.mrf.mxu0
        %v1218 = vadd.f32 %v1141, %v1217
        %v1219 = vpop.f32.mrf.mxu0
        %1220 = vdwg.mxu0
        %v1221 = vmax.f32 %v1218, 0.0
        %v1222 = vld [vmem:[#allocation5] sm:$0xff]
        %v1223 = vld [vmem:[#allocation5 + $0x8] sm:$0xff]
        %v1224 = vld [vmem:[#allocation7] sm:$0x1]
        %v1226 = vlaneseq
        %v1227 = vshrl.u32 %v1226, 7
        %v1228 = vsub.s32 0, %v1227
        %v1229 = vrot.slane %v1224, %v1228
        %vm1231 = vcmask 130048
        %v1233 = vsel %vm1231, %v1221, 0
        %1235 = vmatprep.subr.mxu0 0.0
        %1236 = vmatpush1.msra.mxu0 0.0
        %1237 = vmatprep.subr.mxu0 0.0
        %1238 = vmatpush1.msra.mxu0 0.0
        %1239 = vmatprep.subr.mxu0 0.0
        %1240 = vmatpush1.msra.mxu0 0.0
        %1241 = vmatprep.subr.mxu0 0.0
        %1242 = vmatpush1.msra.mxu0 0.0
        %1243 = vmatprep.subr.mxu0 0.0
        %1244 = vmatpush1.msra.mxu0 0.0
        %1245 = vmatprep.subr.mxu0 0.0
        %1246 = vmatpush1.msra.mxu0 0.0
        %1247 = vmatprep.subr.mxu0 0.0
        %1248 = vmatpush1.msra.mxu0 0.0
        %1249 = vmatprep.subr.mxu0 0.0
        %1250 = vmatpush1.msra.mxu0 0.0
        %1251 = vmatprep.subr.mxu0 0.0
        %1252 = vmatpush1.msra.mxu0 0.0
        %1253 = vmatprep.subr.mxu0 0.0
        %1254 = vmatpush1.msra.mxu0 0.0
        %1255 = vmatprep.subr.mxu0 0.0
        %1256 = vmatpush1.msra.mxu0 0.0
        %1257 = vmatprep.subr.mxu0 0.0
        %1258 = vmatpush1.msra.mxu0 0.0
        %1259 = vmatprep.subr.mxu0 0.0
        %1260 = vmatpush1.msra.mxu0 0.0
        %1261 = vmatprep.subr.mxu0 0.0
        %1262 = vmatpush1.msra.mxu0 0.0
        %1263 = vmatprep.subr.mxu0 0.0
        %1264 = vmatpush1.msra.mxu0 %v1223
        %1265 = vmatprep.subr.mxu0 0.0
        %1266 = vmatpush1.msra.mxu0 %v1222
        %1267 = vmatprep.subr.mxu0 0.0
        %1268 = vmatpush2.msra.mxu0 0.0
        %1269 = vmatprep.subr.mxu0 0.0
        %1270 = vmatpush2.msra.mxu0 0.0
        %1271 = vmatprep.subr.mxu0 0.0
        %1272 = vmatpush2.msra.mxu0 0.0
        %1273 = vmatprep.subr.mxu0 0.0
        %1274 = vmatpush2.msra.mxu0 0.0
        %1275 = vmatprep.subr.mxu0 0.0
        %1276 = vmatpush2.msra.mxu0 0.0
        %1277 = vmatprep.subr.mxu0 0.0
        %1278 = vmatpush2.msra.mxu0 0.0
        %1279 = vmatprep.subr.mxu0 0.0
        %1280 = vmatpush2.msra.mxu0 0.0
        %1281 = vmatprep.subr.mxu0 0.0
        %1282 = vmatpush2.msra.mxu0 0.0
        %1283 = vmatprep.subr.mxu0 0.0
        %1284 = vmatpush2.msra.mxu0 0.0
        %1285 = vmatprep.subr.mxu0 0.0
        %1286 = vmatpush2.msra.mxu0 0.0
        %1287 = vmatprep.subr.mxu0 0.0
        %1288 = vmatpush2.msra.mxu0 0.0
        %1289 = vmatprep.subr.mxu0 0.0
        %1290 = vmatpush2.msra.mxu0 0.0
        %1291 = vmatprep.subr.mxu0 0.0
        %1292 = vmatpush2.msra.mxu0 0.0
        %1293 = vmatprep.subr.mxu0 0.0
        %1294 = vmatpush2.msra.mxu0 0.0
        %1295 = vmatprep.subr.mxu0 0.0
        %1296 = vmatpush2.msra.mxu0 0.0
        %1297 = vmatprep.subr.mxu0 0.0
        %1298 = vmatpush2.msra.mxu0 0.0
        %1299 = vmatprep.mubr.f32.mxu0 0.0
        %1300 = vmatmul.mubr.f32.gmra.mxu0 %v1233
        %v1301 = vpop.f32.mrf.mxu0
        %v1302 = vadd.f32 %v1229, %v1301
        %v1303 = vpop.f32.mrf.mxu0
        %1304 = vdwg.mxu0
        %v1305 = vmax.f32 %v1302, 0.0
        %v1306 = vld [vmem:[#allocation8] sm:$0xff]
        %v1307 = vld [vmem:[#allocation8 + $0x8] sm:$0xff]
        %v1308 = vld [vmem:[#allocation10] sm:$0x1]
        %v1310 = vlaneseq
        %v1311 = vshrl.u32 %v1310, 7
        %v1312 = vsub.s32 0, %v1311
        %v1313 = vrot.slane %v1308, %v1312
        %v1316 = vsel %vm1231, %v1305, 0
        %1318 = vmatprep.subr.mxu0 0.0
        %1319 = vmatpush1.msra.mxu0 0.0
        %1320 = vmatprep.subr.mxu0 0.0
        %1321 = vmatpush1.msra.mxu0 0.0
        %1322 = vmatprep.subr.mxu0 0.0
        %1323 = vmatpush1.msra.mxu0 0.0
        %1324 = vmatprep.subr.mxu0 0.0
        %1325 = vmatpush1.msra.mxu0 0.0
        %1326 = vmatprep.subr.mxu0 0.0
        %1327 = vmatpush1.msra.mxu0 0.0
        %1328 = vmatprep.subr.mxu0 0.0
        %1329 = vmatpush1.msra.mxu0 0.0
        %1330 = vmatprep.subr.mxu0 0.0
        %1331 = vmatpush1.msra.mxu0 0.0
        %1332 = vmatprep.subr.mxu0 0.0
        %1333 = vmatpush1.msra.mxu0 0.0
        %1334 = vmatprep.subr.mxu0 0.0
        %1335 = vmatpush1.msra.mxu0 0.0
        %1336 = vmatprep.subr.mxu0 0.0
        %1337 = vmatpush1.msra.mxu0 0.0
        %1338 = vmatprep.subr.mxu0 0.0
        %1339 = vmatpush1.msra.mxu0 0.0
        %1340 = vmatprep.subr.mxu0 0.0
        %1341 = vmatpush1.msra.mxu0 0.0
        %1342 = vmatprep.subr.mxu0 0.0
        %1343 = vmatpush1.msra.mxu0 0.0
        %1344 = vmatprep.subr.mxu0 0.0
        %1345 = vmatpush1.msra.mxu0 0.0
        %1346 = vmatprep.subr.mxu0 0.0
        %1347 = vmatpush1.msra.mxu0 %v1307
        %1348 = vmatprep.subr.mxu0 0.0
        %1349 = vmatpush1.msra.mxu0 %v1306
        %1350 = vmatprep.subr.mxu0 0.0
        %1351 = vmatpush2.msra.mxu0 0.0
        %1352 = vmatprep.subr.mxu0 0.0
        %1353 = vmatpush2.msra.mxu0 0.0
        %1354 = vmatprep.subr.mxu0 0.0
        %1355 = vmatpush2.msra.mxu0 0.0
        %1356 = vmatprep.subr.mxu0 0.0
        %1357 = vmatpush2.msra.mxu0 0.0
        %1358 = vmatprep.subr.mxu0 0.0
        %1359 = vmatpush2.msra.mxu0 0.0
        %1360 = vmatprep.subr.mxu0 0.0
        %1361 = vmatpush2.msra.mxu0 0.0
        %1362 = vmatprep.subr.mxu0 0.0
        %1363 = vmatpush2.msra.mxu0 0.0
        %1364 = vmatprep.subr.mxu0 0.0
        %1365 = vmatpush2.msra.mxu0 0.0
        %1366 = vmatprep.subr.mxu0 0.0
        %1367 = vmatpush2.msra.mxu0 0.0
        %1368 = vmatprep.subr.mxu0 0.0
        %1369 = vmatpush2.msra.mxu0 0.0
        %1370 = vmatprep.subr.mxu0 0.0
        %1371 = vmatpush2.msra.mxu0 0.0
        %1372 = vmatprep.subr.mxu0 0.0
        %1373 = vmatpush2.msra.mxu0 0.0
        %1374 = vmatprep.subr.mxu0 0.0
        %1375 = vmatpush2.msra.mxu0 0.0
        %1376 = vmatprep.subr.mxu0 0.0
        %1377 = vmatpush2.msra.mxu0 0.0
        %1378 = vmatprep.subr.mxu0 0.0
        %1379 = vmatpush2.msra.mxu0 0.0
        %1380 = vmatprep.subr.mxu0 0.0
        %1381 = vmatpush2.msra.mxu0 0.0
        %1382 = vmatprep.mubr.f32.mxu0 0.0
        %1383 = vmatmul.mubr.f32.gmra.mxu0 %v1316
        %v1384 = vpop.f32.mrf.mxu0
        %v1385 = vadd.f32 %v1313, %v1384
        %v1386 = vpop.f32.mrf.mxu0
        %1387 = vdwg.mxu0
        %v1388 = vmax.f32 %v1385, 0.0
        %v1389 = vld [vmem:[%s1129] sm:$0xff]
        %v1390 = vld [vmem:[#allocation11] sm:$0x1f]
        %v1391 = vld [vmem:[#allocation13] sm:$0x1]
        %v1393 = vlaneseq
        %v1394 = vshrl.u32 %v1393, 7
        %v1395 = vsub.s32 0, %v1394
        %v1396 = vrot.slane %v1391, %v1395
        %vm1398 = vcmask 39936
        %v1400 = vsel %vm1398, %v1389, 0
        %vm1402 = vcmask 1044480
        %v1404 = vsel %vm1402, %v1390, 0
        %1406 = vmatprep.subr.mxu0 0.0
        %1407 = vmatpush1.msra.mxu0 0.0
        %1408 = vmatprep.subr.mxu0 0.0
        %1409 = vmatpush1.msra.mxu0 0.0
        %1410 = vmatprep.subr.mxu0 0.0
        %1411 = vmatpush1.msra.mxu0 0.0
        %1412 = vmatprep.subr.mxu0 0.0
        %1413 = vmatpush1.msra.mxu0 0.0
        %1414 = vmatprep.subr.mxu0 0.0
        %1415 = vmatpush1.msra.mxu0 0.0
        %1416 = vmatprep.subr.mxu0 0.0
        %1417 = vmatpush1.msra.mxu0 0.0
        %1418 = vmatprep.subr.mxu0 0.0
        %1419 = vmatpush1.msra.mxu0 0.0
        %1420 = vmatprep.subr.mxu0 0.0
        %1421 = vmatpush1.msra.mxu0 0.0
        %1422 = vmatprep.subr.mxu0 0.0
        %1423 = vmatpush1.msra.mxu0 0.0
        %1424 = vmatprep.subr.mxu0 0.0
        %1425 = vmatpush1.msra.mxu0 0.0
        %1426 = vmatprep.subr.mxu0 0.0
        %1427 = vmatpush1.msra.mxu0 0.0
        %1428 = vmatprep.subr.mxu0 0.0
        %1429 = vmatpush1.msra.mxu0 0.0
        %1430 = vmatprep.subr.mxu0 0.0
        %1431 = vmatpush1.msra.mxu0 0.0
        %1432 = vmatprep.subr.mxu0 0.0
        %1433 = vmatpush1.msra.mxu0 0.0
        %1434 = vmatprep.subr.mxu0 0.0
        %1435 = vmatpush1.msra.mxu0 0.0
        %1436 = vmatprep.subr.mxu0 0.0
        %1437 = vmatpush1.msra.mxu0 %v1404
        %1438 = vmatprep.subr.mxu0 0.0
        %1439 = vmatpush2.msra.mxu0 0.0
        %1440 = vmatprep.subr.mxu0 0.0
        %1441 = vmatpush2.msra.mxu0 0.0
        %1442 = vmatprep.subr.mxu0 0.0
        %1443 = vmatpush2.msra.mxu0 0.0
        %1444 = vmatprep.subr.mxu0 0.0
        %1445 = vmatpush2.msra.mxu0 0.0
        %1446 = vmatprep.subr.mxu0 0.0
        %1447 = vmatpush2.msra.mxu0 0.0
        %1448 = vmatprep.subr.mxu0 0.0
        %1449 = vmatpush2.msra.mxu0 0.0
        %1450 = vmatprep.subr.mxu0 0.0
        %1451 = vmatpush2.msra.mxu0 0.0
        %1452 = vmatprep.subr.mxu0 0.0
        %1453 = vmatpush2.msra.mxu0 0.0
        %1454 = vmatprep.subr.mxu0 0.0
        %1455 = vmatpush2.msra.mxu0 0.0
        %1456 = vmatprep.subr.mxu0 0.0
        %1457 = vmatpush2.msra.mxu0 0.0
        %1458 = vmatprep.subr.mxu0 0.0
        %1459 = vmatpush2.msra.mxu0 0.0
        %1460 = vmatprep.subr.mxu0 0.0
        %1461 = vmatpush2.msra.mxu0 0.0
        %1462 = vmatprep.subr.mxu0 0.0
        %1463 = vmatpush2.msra.mxu0 0.0
        %1464 = vmatprep.subr.mxu0 0.0
        %1465 = vmatpush2.msra.mxu0 0.0
        %1466 = vmatprep.subr.mxu0 0.0
        %1467 = vmatpush2.msra.mxu0 0.0
        %1468 = vmatprep.subr.mxu0 0.0
        %1469 = vmatpush2.msra.mxu0 0.0
        %1470 = vmatprep.mubr.f32.mxu0 0.0
        %1471 = vmatmul.mubr.f32.gmra.mxu0 %v1400
        %v1472 = vpop.f32.mrf.mxu0
        %v1473 = vadd.f32 %v1396, %v1472
        %v1474 = vpop.f32.mrf.mxu0
        %1475 = vdwg.mxu0
        %v1476 = vmax.f32 %v1473, 0.0
        %v1477 = vld [vmem:[#allocation14] sm:$0xff]
        %v1478 = vld [vmem:[#allocation14 + $0x8] sm:$0xff]
        %v1479 = vld [vmem:[#allocation16] sm:$0x1]
        %v1481 = vlaneseq
        %v1482 = vshrl.u32 %v1481, 7
        %v1483 = vsub.s32 0, %v1482
        %v1484 = vrot.slane %v1479, %v1483
        %v1487 = vsel %vm1231, %v1476, 0
        %1489 = vmatprep.subr.mxu0 0.0
        %1490 = vmatpush1.msra.mxu0 0.0
        %1491 = vmatprep.subr.mxu0 0.0
        %1492 = vmatpush1.msra.mxu0 0.0
        %1493 = vmatprep.subr.mxu0 0.0
        %1494 = vmatpush1.msra.mxu0 0.0
        %1495 = vmatprep.subr.mxu0 0.0
        %1496 = vmatpush1.msra.mxu0 0.0
        %1497 = vmatprep.subr.mxu0 0.0
        %1498 = vmatpush1.msra.mxu0 0.0
        %1499 = vmatprep.subr.mxu0 0.0
        %1500 = vmatpush1.msra.mxu0 0.0
        %1501 = vmatprep.subr.mxu0 0.0
        %1502 = vmatpush1.msra.mxu0 0.0
        %1503 = vmatprep.subr.mxu0 0.0
        %1504 = vmatpush1.msra.mxu0 0.0
        %1505 = vmatprep.subr.mxu0 0.0
        %1506 = vmatpush1.msra.mxu0 0.0
        %1507 = vmatprep.subr.mxu0 0.0
        %1508 = vmatpush1.msra.mxu0 0.0
        %1509 = vmatprep.subr.mxu0 0.0
        %1510 = vmatpush1.msra.mxu0 0.0
        %1511 = vmatprep.subr.mxu0 0.0
        %1512 = vmatpush1.msra.mxu0 0.0
        %1513 = vmatprep.subr.mxu0 0.0
        %1514 = vmatpush1.msra.mxu0 0.0
        %1515 = vmatprep.subr.mxu0 0.0
        %1516 = vmatpush1.msra.mxu0 0.0
        %1517 = vmatprep.subr.mxu0 0.0
        %1518 = vmatpush1.msra.mxu0 %v1478
        %1519 = vmatprep.subr.mxu0 0.0
        %1520 = vmatpush1.msra.mxu0 %v1477
        %1521 = vmatprep.subr.mxu0 0.0
        %1522 = vmatpush2.msra.mxu0 0.0
        %1523 = vmatprep.subr.mxu0 0.0
        %1524 = vmatpush2.msra.mxu0 0.0
        %1525 = vmatprep.subr.mxu0 0.0
        %1526 = vmatpush2.msra.mxu0 0.0
        %1527 = vmatprep.subr.mxu0 0.0
        %1528 = vmatpush2.msra.mxu0 0.0
        %1529 = vmatprep.subr.mxu0 0.0
        %1530 = vmatpush2.msra.mxu0 0.0
        %1531 = vmatprep.subr.mxu0 0.0
        %1532 = vmatpush2.msra.mxu0 0.0
        %1533 = vmatprep.subr.mxu0 0.0
        %1534 = vmatpush2.msra.mxu0 0.0
        %1535 = vmatprep.subr.mxu0 0.0
        %1536 = vmatpush2.msra.mxu0 0.0
        %1537 = vmatprep.subr.mxu0 0.0
        %1538 = vmatpush2.msra.mxu0 0.0
        %1539 = vmatprep.subr.mxu0 0.0
        %1540 = vmatpush2.msra.mxu0 0.0
        %1541 = vmatprep.subr.mxu0 0.0
        %1542 = vmatpush2.msra.mxu0 0.0
        %1543 = vmatprep.subr.mxu0 0.0
        %1544 = vmatpush2.msra.mxu0 0.0
        %1545 = vmatprep.subr.mxu0 0.0
        %1546 = vmatpush2.msra.mxu0 0.0
        %1547 = vmatprep.subr.mxu0 0.0
        %1548 = vmatpush2.msra.mxu0 0.0
        %1549 = vmatprep.subr.mxu0 0.0
        %1550 = vmatpush2.msra.mxu0 0.0
        %1551 = vmatprep.subr.mxu0 0.0
        %1552 = vmatpush2.msra.mxu0 0.0
        %1553 = vmatprep.mubr.f32.mxu0 0.0
        %1554 = vmatmul.mubr.f32.gmra.mxu0 %v1487
        %v1555 = vpop.f32.mrf.mxu0
        %v1556 = vadd.f32 %v1484, %v1555
        %v1557 = vpop.f32.mrf.mxu0
        %1558 = vdwg.mxu0
        %v1559 = vmax.f32 %v1556, 0.0
        %v1560 = vld [vmem:[#allocation17] sm:$0xff]
        %v1561 = vld [vmem:[#allocation17 + $0x8] sm:$0xff]
        %v1562 = vld [vmem:[#allocation19] sm:$0x1]
        %v1564 = vlaneseq
        %v1565 = vshrl.u32 %v1564, 7
        %v1566 = vsub.s32 0, %v1565
        %v1567 = vrot.slane %v1562, %v1566
        %v1570 = vsel %vm1231, %v1559, 0
        %1572 = vmatprep.subr.mxu0 0.0
        %1573 = vmatpush1.msra.mxu0 0.0
        %1574 = vmatprep.subr.mxu0 0.0
        %1575 = vmatpush1.msra.mxu0 0.0
        %1576 = vmatprep.subr.mxu0 0.0
        %1577 = vmatpush1.msra.mxu0 0.0
        %1578 = vmatprep.subr.mxu0 0.0
        %1579 = vmatpush1.msra.mxu0 0.0
        %1580 = vmatprep.subr.mxu0 0.0
        %1581 = vmatpush1.msra.mxu0 0.0
        %1582 = vmatprep.subr.mxu0 0.0
        %1583 = vmatpush1.msra.mxu0 0.0
        %1584 = vmatprep.subr.mxu0 0.0
        %1585 = vmatpush1.msra.mxu0 0.0
        %1586 = vmatprep.subr.mxu0 0.0
        %1587 = vmatpush1.msra.mxu0 0.0
        %1588 = vmatprep.subr.mxu0 0.0
        %1589 = vmatpush1.msra.mxu0 0.0
        %1590 = vmatprep.subr.mxu0 0.0
        %1591 = vmatpush1.msra.mxu0 0.0
        %1592 = vmatprep.subr.mxu0 0.0
        %1593 = vmatpush1.msra.mxu0 0.0
        %1594 = vmatprep.subr.mxu0 0.0
        %1595 = vmatpush1.msra.mxu0 0.0
        %1596 = vmatprep.subr.mxu0 0.0
        %1597 = vmatpush1.msra.mxu0 0.0
        %1598 = vmatprep.subr.mxu0 0.0
        %1599 = vmatpush1.msra.mxu0 0.0
        %1600 = vmatprep.subr.mxu0 0.0
        %1601 = vmatpush1.msra.mxu0 %v1561
        %1602 = vmatprep.subr.mxu0 0.0
        %1603 = vmatpush1.msra.mxu0 %v1560
        %1604 = vmatprep.subr.mxu0 0.0
        %1605 = vmatpush2.msra.mxu0 0.0
        %1606 = vmatprep.subr.mxu0 0.0
        %1607 = vmatpush2.msra.mxu0 0.0
        %1608 = vmatprep.subr.mxu0 0.0
        %1609 = vmatpush2.msra.mxu0 0.0
        %1610 = vmatprep.subr.mxu0 0.0
        %1611 = vmatpush2.msra.mxu0 0.0
        %1612 = vmatprep.subr.mxu0 0.0
        %1613 = vmatpush2.msra.mxu0 0.0
        %1614 = vmatprep.subr.mxu0 0.0
        %1615 = vmatpush2.msra.mxu0 0.0
        %1616 = vmatprep.subr.mxu0 0.0
        %1617 = vmatpush2.msra.mxu0 0.0
        %1618 = vmatprep.subr.mxu0 0.0
        %1619 = vmatpush2.msra.mxu0 0.0
        %1620 = vmatprep.subr.mxu0 0.0
        %1621 = vmatpush2.msra.mxu0 0.0
        %1622 = vmatprep.subr.mxu0 0.0
        %1623 = vmatpush2.msra.mxu0 0.0
        %1624 = vmatprep.subr.mxu0 0.0
        %1625 = vmatpush2.msra.mxu0 0.0
        %1626 = vmatprep.subr.mxu0 0.0
        %1627 = vmatpush2.msra.mxu0 0.0
        %1628 = vmatprep.subr.mxu0 0.0
        %1629 = vmatpush2.msra.mxu0 0.0
        %1630 = vmatprep.subr.mxu0 0.0
        %1631 = vmatpush2.msra.mxu0 0.0
        %1632 = vmatprep.subr.mxu0 0.0
        %1633 = vmatpush2.msra.mxu0 0.0
        %1634 = vmatprep.subr.mxu0 0.0
        %1635 = vmatpush2.msra.mxu0 0.0
        %1636 = vmatprep.mubr.f32.mxu0 0.0
        %1637 = vmatmul.mubr.f32.gmra.mxu0 %v1570
        %v1638 = vpop.f32.mrf.mxu0
        %v1639 = vadd.f32 %v1567, %v1638
        %v1640 = vpop.f32.mrf.mxu0
        %1641 = vdwg.mxu0
        %v1642 = vmax.f32 %v1639, 0.0
        %v1643 = vld [vmem:[%s1133] sm:$0xff]
        %v1644 = vld [vmem:[#allocation20] sm:$0x7f]
        %v1645 = vld [vmem:[%s33] sm:$0x1]
        %v1647 = vlaneseq
        %v1648 = vshrl.u32 %v1647, 7
        %v1649 = vsub.s32 0, %v1648
        %v1650 = vrot.slane %v1645, %v1649
        %vm1652 = vcmask 56320
        %v1654 = vsel %vm1652, %v1643, 0
        %vm1656 = vcmask 1046528
        %v1658 = vsel %vm1656, %v1644, 0
        %1660 = vmatprep.subr.mxu0 0.0
        %1661 = vmatpush1.msra.mxu0 0.0
        %1662 = vmatprep.subr.mxu0 0.0
        %1663 = vmatpush1.msra.mxu0 0.0
        %1664 = vmatprep.subr.mxu0 0.0
        %1665 = vmatpush1.msra.mxu0 0.0
        %1666 = vmatprep.subr.mxu0 0.0
        %1667 = vmatpush1.msra.mxu0 0.0
        %1668 = vmatprep.subr.mxu0 0.0
        %1669 = vmatpush1.msra.mxu0 0.0
        %1670 = vmatprep.subr.mxu0 0.0
        %1671 = vmatpush1.msra.mxu0 0.0
        %1672 = vmatprep.subr.mxu0 0.0
        %1673 = vmatpush1.msra.mxu0 0.0
        %1674 = vmatprep.subr.mxu0 0.0
        %1675 = vmatpush1.msra.mxu0 0.0
        %1676 = vmatprep.subr.mxu0 0.0
        %1677 = vmatpush1.msra.mxu0 0.0
        %1678 = vmatprep.subr.mxu0 0.0
        %1679 = vmatpush1.msra.mxu0 0.0
        %1680 = vmatprep.subr.mxu0 0.0
        %1681 = vmatpush1.msra.mxu0 0.0
        %1682 = vmatprep.subr.mxu0 0.0
        %1683 = vmatpush1.msra.mxu0 0.0
        %1684 = vmatprep.subr.mxu0 0.0
        %1685 = vmatpush1.msra.mxu0 0.0
        %1686 = vmatprep.subr.mxu0 0.0
        %1687 = vmatpush1.msra.mxu0 0.0
        %1688 = vmatprep.subr.mxu0 0.0
        %1689 = vmatpush1.msra.mxu0 0.0
        %1690 = vmatprep.subr.mxu0 0.0
        %1691 = vmatpush1.msra.mxu0 %v1658
        %1692 = vmatprep.subr.mxu0 0.0
        %1693 = vmatpush2.msra.mxu0 0.0
        %1694 = vmatprep.subr.mxu0 0.0
        %1695 = vmatpush2.msra.mxu0 0.0
        %1696 = vmatprep.subr.mxu0 0.0
        %1697 = vmatpush2.msra.mxu0 0.0
        %1698 = vmatprep.subr.mxu0 0.0
        %1699 = vmatpush2.msra.mxu0 0.0
        %1700 = vmatprep.subr.mxu0 0.0
        %1701 = vmatpush2.msra.mxu0 0.0
        %1702 = vmatprep.subr.mxu0 0.0
        %1703 = vmatpush2.msra.mxu0 0.0
        %1704 = vmatprep.subr.mxu0 0.0
        %1705 = vmatpush2.msra.mxu0 0.0
        %1706 = vmatprep.subr.mxu0 0.0
        %1707 = vmatpush2.msra.mxu0 0.0
        %1708 = vmatprep.subr.mxu0 0.0
        %1709 = vmatpush2.msra.mxu0 0.0
        %1710 = vmatprep.subr.mxu0 0.0
        %1711 = vmatpush2.msra.mxu0 0.0
        %1712 = vmatprep.subr.mxu0 0.0
        %1713 = vmatpush2.msra.mxu0 0.0
        %1714 = vmatprep.subr.mxu0 0.0
        %1715 = vmatpush2.msra.mxu0 0.0
        %1716 = vmatprep.subr.mxu0 0.0
        %1717 = vmatpush2.msra.mxu0 0.0
        %1718 = vmatprep.subr.mxu0 0.0
        %1719 = vmatpush2.msra.mxu0 0.0
        %1720 = vmatprep.subr.mxu0 0.0
        %1721 = vmatpush2.msra.mxu0 0.0
        %1722 = vmatprep.subr.mxu0 0.0
        %1723 = vmatpush2.msra.mxu0 0.0
        %1724 = vmatprep.mubr.f32.mxu0 0.0
        %1725 = vmatmul.mubr.f32.gmra.mxu0 %v1654
        %v1726 = vpop.f32.mrf.mxu0
        %v1727 = vadd.f32 %v1650, %v1726
        %v1728 = vpop.f32.mrf.mxu0
        %1729 = vdwg.mxu0
        %v1730 = vmax.f32 %v1727, 0.0
        %v1731 = vld [vmem:[#allocation22] sm:$0xff]
        %v1732 = vld [vmem:[#allocation22 + $0x8] sm:$0xff]
        %v1733 = vld [vmem:[%s37] sm:$0x1]
        %v1735 = vlaneseq
        %v1736 = vshrl.u32 %v1735, 7
        %v1737 = vsub.s32 0, %v1736
        %v1738 = vrot.slane %v1733, %v1737
        %v1741 = vsel %vm1231, %v1730, 0
        %1743 = vmatprep.subr.mxu0 0.0
        %1744 = vmatpush1.msra.mxu0 0.0
        %1745 = vmatprep.subr.mxu0 0.0
        %1746 = vmatpush1.msra.mxu0 0.0
        %1747 = vmatprep.subr.mxu0 0.0
        %1748 = vmatpush1.msra.mxu0 0.0
        %1749 = vmatprep.subr.mxu0 0.0
        %1750 = vmatpush1.msra.mxu0 0.0
        %1751 = vmatprep.subr.mxu0 0.0
        %1752 = vmatpush1.msra.mxu0 0.0
        %1753 = vmatprep.subr.mxu0 0.0
        %1754 = vmatpush1.msra.mxu0 0.0
        %1755 = vmatprep.subr.mxu0 0.0
        %1756 = vmatpush1.msra.mxu0 0.0
        %1757 = vmatprep.subr.mxu0 0.0
        %1758 = vmatpush1.msra.mxu0 0.0
        %1759 = vmatprep.subr.mxu0 0.0
        %1760 = vmatpush1.msra.mxu0 0.0
        %1761 = vmatprep.subr.mxu0 0.0
        %1762 = vmatpush1.msra.mxu0 0.0
        %1763 = vmatprep.subr.mxu0 0.0
        %1764 = vmatpush1.msra.mxu0 0.0
        %1765 = vmatprep.subr.mxu0 0.0
        %1766 = vmatpush1.msra.mxu0 0.0
        %1767 = vmatprep.subr.mxu0 0.0
        %1768 = vmatpush1.msra.mxu0 0.0
        %1769 = vmatprep.subr.mxu0 0.0
        %1770 = vmatpush1.msra.mxu0 0.0
        %1771 = vmatprep.subr.mxu0 0.0
        %1772 = vmatpush1.msra.mxu0 %v1732
        %1773 = vmatprep.subr.mxu0 0.0
        %1774 = vmatpush1.msra.mxu0 %v1731
        %1775 = vmatprep.subr.mxu0 0.0
        %1776 = vmatpush2.msra.mxu0 0.0
        %1777 = vmatprep.subr.mxu0 0.0
        %1778 = vmatpush2.msra.mxu0 0.0
        %1779 = vmatprep.subr.mxu0 0.0
        %1780 = vmatpush2.msra.mxu0 0.0
        %1781 = vmatprep.subr.mxu0 0.0
        %1782 = vmatpush2.msra.mxu0 0.0
        %1783 = vmatprep.subr.mxu0 0.0
        %1784 = vmatpush2.msra.mxu0 0.0
        %1785 = vmatprep.subr.mxu0 0.0
        %1786 = vmatpush2.msra.mxu0 0.0
        %1787 = vmatprep.subr.mxu0 0.0
        %1788 = vmatpush2.msra.mxu0 0.0
        %1789 = vmatprep.subr.mxu0 0.0
        %1790 = vmatpush2.msra.mxu0 0.0
        %1791 = vmatprep.subr.mxu0 0.0
        %1792 = vmatpush2.msra.mxu0 0.0
        %1793 = vmatprep.subr.mxu0 0.0
        %1794 = vmatpush2.msra.mxu0 0.0
        %1795 = vmatprep.subr.mxu0 0.0
        %1796 = vmatpush2.msra.mxu0 0.0
        %1797 = vmatprep.subr.mxu0 0.0
        %1798 = vmatpush2.msra.mxu0 0.0
        %1799 = vmatprep.subr.mxu0 0.0
        %1800 = vmatpush2.msra.mxu0 0.0
        %1801 = vmatprep.subr.mxu0 0.0
        %1802 = vmatpush2.msra.mxu0 0.0
        %1803 = vmatprep.subr.mxu0 0.0
        %1804 = vmatpush2.msra.mxu0 0.0
        %1805 = vmatprep.subr.mxu0 0.0
        %1806 = vmatpush2.msra.mxu0 0.0
        %1807 = vmatprep.mubr.f32.mxu0 0.0
        %1808 = vmatmul.mubr.f32.gmra.mxu0 %v1741
        %v1809 = vpop.f32.mrf.mxu0
        %v1810 = vadd.f32 %v1738, %v1809
        %v1811 = vpop.f32.mrf.mxu0
        %1812 = vdwg.mxu0
        %v1813 = vmax.f32 %v1810, 0.0
        %v1814 = vld [vmem:[#allocation23] sm:$0xff]
        %v1815 = vld [vmem:[#allocation23 + $0x8] sm:$0xff]
        %v1816 = vld [vmem:[%s41] sm:$0x1]
        %v1818 = vlaneseq
        %v1819 = vshrl.u32 %v1818, 7
        %v1820 = vsub.s32 0, %v1819
        %v1821 = vrot.slane %v1816, %v1820
        %v1824 = vsel %vm1231, %v1813, 0
        %1826 = vmatprep.subr.mxu0 0.0
        %1827 = vmatpush1.msra.mxu0 0.0
        %1828 = vmatprep.subr.mxu0 0.0
        %1829 = vmatpush1.msra.mxu0 0.0
        %1830 = vmatprep.subr.mxu0 0.0
        %1831 = vmatpush1.msra.mxu0 0.0
        %1832 = vmatprep.subr.mxu0 0.0
        %1833 = vmatpush1.msra.mxu0 0.0
        %1834 = vmatprep.subr.mxu0 0.0
        %1835 = vmatpush1.msra.mxu0 0.0
        %1836 = vmatprep.subr.mxu0 0.0
        %1837 = vmatpush1.msra.mxu0 0.0
        %1838 = vmatprep.subr.mxu0 0.0
        %1839 = vmatpush1.msra.mxu0 0.0
        %1840 = vmatprep.subr.mxu0 0.0
        %1841 = vmatpush1.msra.mxu0 0.0
        %1842 = vmatprep.subr.mxu0 0.0
        %1843 = vmatpush1.msra.mxu0 0.0
        %1844 = vmatprep.subr.mxu0 0.0
        %1845 = vmatpush1.msra.mxu0 0.0
        %1846 = vmatprep.subr.mxu0 0.0
        %1847 = vmatpush1.msra.mxu0 0.0
        %1848 = vmatprep.subr.mxu0 0.0
        %1849 = vmatpush1.msra.mxu0 0.0
        %1850 = vmatprep.subr.mxu0 0.0
        %1851 = vmatpush1.msra.mxu0 0.0
        %1852 = vmatprep.subr.mxu0 0.0
        %1853 = vmatpush1.msra.mxu0 0.0
        %1854 = vmatprep.subr.mxu0 0.0
        %1855 = vmatpush1.msra.mxu0 %v1815
        %1856 = vmatprep.subr.mxu0 0.0
        %1857 = vmatpush1.msra.mxu0 %v1814
        %1858 = vmatprep.subr.mxu0 0.0
        %1859 = vmatpush2.msra.mxu0 0.0
        %1860 = vmatprep.subr.mxu0 0.0
        %1861 = vmatpush2.msra.mxu0 0.0
        %1862 = vmatprep.subr.mxu0 0.0
        %1863 = vmatpush2.msra.mxu0 0.0
        %1864 = vmatprep.subr.mxu0 0.0
        %1865 = vmatpush2.msra.mxu0 0.0
        %1866 = vmatprep.subr.mxu0 0.0
        %1867 = vmatpush2.msra.mxu0 0.0
        %1868 = vmatprep.subr.mxu0 0.0
        %1869 = vmatpush2.msra.mxu0 0.0
        %1870 = vmatprep.subr.mxu0 0.0
        %1871 = vmatpush2.msra.mxu0 0.0
        %1872 = vmatprep.subr.mxu0 0.0
        %1873 = vmatpush2.msra.mxu0 0.0
        %1874 = vmatprep.subr.mxu0 0.0
        %1875 = vmatpush2.msra.mxu0 0.0
        %1876 = vmatprep.subr.mxu0 0.0
        %1877 = vmatpush2.msra.mxu0 0.0
        %1878 = vmatprep.subr.mxu0 0.0
        %1879 = vmatpush2.msra.mxu0 0.0
        %1880 = vmatprep.subr.mxu0 0.0
        %1881 = vmatpush2.msra.mxu0 0.0
        %1882 = vmatprep.subr.mxu0 0.0
        %1883 = vmatpush2.msra.mxu0 0.0
        %1884 = vmatprep.subr.mxu0 0.0
        %1885 = vmatpush2.msra.mxu0 0.0
        %1886 = vmatprep.subr.mxu0 0.0
        %1887 = vmatpush2.msra.mxu0 0.0
        %1888 = vmatprep.subr.mxu0 0.0
        %1889 = vmatpush2.msra.mxu0 0.0
        %1890 = vmatprep.mubr.f32.mxu0 0.0
        %1891 = vmatmul.mubr.f32.gmra.mxu0 %v1824
        %v1892 = vpop.f32.mrf.mxu0
        %v1893 = vadd.f32 %v1821, %v1892
        %v1894 = vpop.f32.mrf.mxu0
        %1895 = vdwg.mxu0
        %vm1896 = vcmask 261120
        %v1897 = vsel %vm1896, %v1893, -inf
        %1898 = vmax.xlane.f32.xlu0 %v1897
        %v1899 = vpop.xlane.xlu0 %1898
        %v1900 = vsub.f32 %v1893, %v1899
        %v1901 = vmul.f32 %v1900, 1.442695
        %v1902 = vpow.pop %v1901
        %v1903 = vsel %vm1896, %v1902, 0.0
        %1904 = vadd.xlane.f32.xlu0 %v1903
        %v1905 = vpop.xlane.xlu0 %1904
        %v1906 = vrcp.pop %v1905
        %v1907 = vmul.f32 %v1902, %v1906
        %v1908 = vld [vmem:[%s43] sm:$0xff]
        %v1909 = vld [vmem:[%s43 + $0x8] sm:$0xff]
        %v1910 = vld [vmem:[%s43 + $0x10] sm:$0xff]
        %v1911 = vld [vmem:[%s43 + $0x18] sm:$0xff]
        %v1912 = vld [vmem:[%s49] sm:$0x1]
        %v1914 = vlaneseq
        %v1915 = vshrl.u32 %v1914, 7
        %v1916 = vsub.s32 0, %v1915
        %v1917 = vrot.slane %v1912, %v1916
        %v1920 = vsel %vm1896, %v1907, 0
        %1922 = vmatprep.subr.mxu0 0.0
        %1923 = vmatpush1.msra.mxu0 0.0
        %1924 = vmatprep.subr.mxu0 0.0
        %1925 = vmatpush1.msra.mxu0 0.0
        %1926 = vmatprep.subr.mxu0 0.0
        %1927 = vmatpush1.msra.mxu0 0.0
        %1928 = vmatprep.subr.mxu0 0.0
        %1929 = vmatpush1.msra.mxu0 0.0
        %1930 = vmatprep.subr.mxu0 0.0
        %1931 = vmatpush1.msra.mxu0 0.0
        %1932 = vmatprep.subr.mxu0 0.0
        %1933 = vmatpush1.msra.mxu0 0.0
        %1934 = vmatprep.subr.mxu0 0.0
        %1935 = vmatpush1.msra.mxu0 0.0
        %1936 = vmatprep.subr.mxu0 0.0
        %1937 = vmatpush1.msra.mxu0 0.0
        %1938 = vmatprep.subr.mxu0 0.0
        %1939 = vmatpush1.msra.mxu0 0.0
        %1940 = vmatprep.subr.mxu0 0.0
        %1941 = vmatpush1.msra.mxu0 0.0
        %1942 = vmatprep.subr.mxu0 0.0
        %1943 = vmatpush1.msra.mxu0 0.0
        %1944 = vmatprep.subr.mxu0 0.0
        %1945 = vmatpush1.msra.mxu0 0.0
        %1946 = vmatprep.subr.mxu0 0.0
        %1947 = vmatpush1.msra.mxu0 %v1911
        %1948 = vmatprep.subr.mxu0 0.0
        %1949 = vmatpush1.msra.mxu0 %v1910
        %1950 = vmatprep.subr.mxu0 0.0
        %1951 = vmatpush1.msra.mxu0 %v1909
        %1952 = vmatprep.subr.mxu0 0.0
        %1953 = vmatpush1.msra.mxu0 %v1908
        %1954 = vmatprep.subr.mxu0 0.0
        %1955 = vmatpush2.msra.mxu0 0.0
        %1956 = vmatprep.subr.mxu0 0.0
        %1957 = vmatpush2.msra.mxu0 0.0
        %1958 = vmatprep.subr.mxu0 0.0
        %1959 = vmatpush2.msra.mxu0 0.0
        %1960 = vmatprep.subr.mxu0 0.0
        %1961 = vmatpush2.msra.mxu0 0.0
        %1962 = vmatprep.subr.mxu0 0.0
        %1963 = vmatpush2.msra.mxu0 0.0
        %1964 = vmatprep.subr.mxu0 0.0
        %1965 = vmatpush2.msra.mxu0 0.0
        %1966 = vmatprep.subr.mxu0 0.0
        %1967 = vmatpush2.msra.mxu0 0.0
        %1968 = vmatprep.subr.mxu0 0.0
        %1969 = vmatpush2.msra.mxu0 0.0
        %1970 = vmatprep.subr.mxu0 0.0
        %1971 = vmatpush2.msra.mxu0 0.0
        %1972 = vmatprep.subr.mxu0 0.0
        %1973 = vmatpush2.msra.mxu0 0.0
        %1974 = vmatprep.subr.mxu0 0.0
        %1975 = vmatpush2.msra.mxu0 0.0
        %1976 = vmatprep.subr.mxu0 0.0
        %1977 = vmatpush2.msra.mxu0 0.0
        %1978 = vmatprep.subr.mxu0 0.0
        %1979 = vmatpush2.msra.mxu0 0.0
        %1980 = vmatprep.subr.mxu0 0.0
        %1981 = vmatpush2.msra.mxu0 0.0
        %1982 = vmatprep.subr.mxu0 0.0
        %1983 = vmatpush2.msra.mxu0 0.0
        %1984 = vmatprep.subr.mxu0 0.0
        %1985 = vmatpush2.msra.mxu0 0.0
        %1986 = vmatprep.mubr.f32.mxu0 0.0
        %1987 = vmatmul.mubr.f32.gmra.mxu0 %v1920
        %v1988 = vpop.f32.mrf.mxu0
        %v1989 = vadd.f32 %v1917, %v1988
        %v1990 = vpop.f32.mrf.mxu0
        %1991 = vdwg.mxu0
        %v1992 = vld [vmem:[%s45] sm:$0xff]
        %v1993 = vld [vmem:[%s45 + $0x8] sm:$0xff]
        %v1994 = vld [vmem:[%s45 + $0x10] sm:$0xff]
        %v1995 = vld [vmem:[%s45 + $0x18] sm:$0xff]
        %v1996 = vld [vmem:[%s51] sm:$0x1]
        %v1998 = vlaneseq
        %v1999 = vshrl.u32 %v1998, 7
        %v2000 = vsub.s32 0, %v1999
        %v2001 = vrot.slane %v1996, %v2000
        %v2004 = vsel %vm1896, %v1388, 0
        %2006 = vmatprep.subr.mxu0 0.0
        %2007 = vmatpush1.msra.mxu0 0.0
        %2008 = vmatprep.subr.mxu0 0.0
        %2009 = vmatpush1.msra.mxu0 0.0
        %2010 = vmatprep.subr.mxu0 0.0
        %2011 = vmatpush1.msra.mxu0 0.0
        %2012 = vmatprep.subr.mxu0 0.0
        %2013 = vmatpush1.msra.mxu0 0.0
        %2014 = vmatprep.subr.mxu0 0.0
        %2015 = vmatpush1.msra.mxu0 0.0
        %2016 = vmatprep.subr.mxu0 0.0
        %2017 = vmatpush1.msra.mxu0 0.0
        %2018 = vmatprep.subr.mxu0 0.0
        %2019 = vmatpush1.msra.mxu0 0.0
        %2020 = vmatprep.subr.mxu0 0.0
        %2021 = vmatpush1.msra.mxu0 0.0
        %2022 = vmatprep.subr.mxu0 0.0
        %2023 = vmatpush1.msra.mxu0 0.0
        %2024 = vmatprep.subr.mxu0 0.0
        %2025 = vmatpush1.msra.mxu0 0.0
        %2026 = vmatprep.subr.mxu0 0.0
        %2027 = vmatpush1.msra.mxu0 0.0
        %2028 = vmatprep.subr.mxu0 0.0
        %2029 = vmatpush1.msra.mxu0 0.0
        %2030 = vmatprep.subr.mxu0 0.0
        %2031 = vmatpush1.msra.mxu0 %v1995
        %2032 = vmatprep.subr.mxu0 0.0
        %2033 = vmatpush1.msra.mxu0 %v1994
        %2034 = vmatprep.subr.mxu0 0.0
        %2035 = vmatpush1.msra.mxu0 %v1993
        %2036 = vmatprep.subr.mxu0 0.0
        %2037 = vmatpush1.msra.mxu0 %v1992
        %2038 = vmatprep.subr.mxu0 0.0
        %2039 = vmatpush2.msra.mxu0 0.0
        %2040 = vmatprep.subr.mxu0 0.0
        %2041 = vmatpush2.msra.mxu0 0.0
        %2042 = vmatprep.subr.mxu0 0.0
        %2043 = vmatpush2.msra.mxu0 0.0
        %2044 = vmatprep.subr.mxu0 0.0
        %2045 = vmatpush2.msra.mxu0 0.0
        %2046 = vmatprep.subr.mxu0 0.0
        %2047 = vmatpush2.msra.mxu0 0.0
        %2048 = vmatprep.subr.mxu0 0.0
        %2049 = vmatpush2.msra.mxu0 0.0
        %2050 = vmatprep.subr.mxu0 0.0
        %2051 = vmatpush2.msra.mxu0 0.0
        %2052 = vmatprep.subr.mxu0 0.0
        %2053 = vmatpush2.msra.mxu0 0.0
        %2054 = vmatprep.subr.mxu0 0.0
        %2055 = vmatpush2.msra.mxu0 0.0
        %2056 = vmatprep.subr.mxu0 0.0
        %2057 = vmatpush2.msra.mxu0 0.0
        %2058 = vmatprep.subr.mxu0 0.0
        %2059 = vmatpush2.msra.mxu0 0.0
        %2060 = vmatprep.subr.mxu0 0.0
        %2061 = vmatpush2.msra.mxu0 0.0
        %2062 = vmatprep.subr.mxu0 0.0
        %2063 = vmatpush2.msra.mxu0 0.0
        %2064 = vmatprep.subr.mxu0 0.0
        %2065 = vmatpush2.msra.mxu0 0.0
        %2066 = vmatprep.subr.mxu0 0.0
        %2067 = vmatpush2.msra.mxu0 0.0
        %2068 = vmatprep.subr.mxu0 0.0
        %2069 = vmatpush2.msra.mxu0 0.0
        %2070 = vmatprep.mubr.f32.mxu0 0.0
        %2071 = vmatmul.mubr.f32.gmra.mxu0 %v2004
        %v2072 = vpop.f32.mrf.mxu0
        %v2073 = vadd.f32 %v2001, %v2072
        %v2074 = vpop.f32.mrf.mxu0
        %2075 = vdwg.mxu0
        %v2076 = vld [vmem:[%s47] sm:$0xff]
        %v2077 = vld [vmem:[%s47 + $0x8] sm:$0xff]
        %v2078 = vld [vmem:[%s47 + $0x10] sm:$0xff]
        %v2079 = vld [vmem:[%s47 + $0x18] sm:$0xff]
        %v2080 = vld [vmem:[%s53] sm:$0x1]
        %v2082 = vlaneseq
        %v2083 = vshrl.u32 %v2082, 7
        %v2084 = vsub.s32 0, %v2083
        %v2085 = vrot.slane %v2080, %v2084
        %v2088 = vsel %vm1896, %v1642, 0
        %2090 = vmatprep.subr.mxu0 0.0
        %2091 = vmatpush1.msra.mxu0 0.0
        %2092 = vmatprep.subr.mxu0 0.0
        %2093 = vmatpush1.msra.mxu0 0.0
        %2094 = vmatprep.subr.mxu0 0.0
        %2095 = vmatpush1.msra.mxu0 0.0
        %2096 = vmatprep.subr.mxu0 0.0
        %2097 = vmatpush1.msra.mxu0 0.0
        %2098 = vmatprep.subr.mxu0 0.0
        %2099 = vmatpush1.msra.mxu0 0.0
        %2100 = vmatprep.subr.mxu0 0.0
        %2101 = vmatpush1.msra.mxu0 0.0
        %2102 = vmatprep.subr.mxu0 0.0
        %2103 = vmatpush1.msra.mxu0 0.0
        %2104 = vmatprep.subr.mxu0 0.0
        %2105 = vmatpush1.msra.mxu0 0.0
        %2106 = vmatprep.subr.mxu0 0.0
        %2107 = vmatpush1.msra.mxu0 0.0
        %2108 = vmatprep.subr.mxu0 0.0
        %2109 = vmatpush1.msra.mxu0 0.0
        %2110 = vmatprep.subr.mxu0 0.0
        %2111 = vmatpush1.msra.mxu0 0.0
        %2112 = vmatprep.subr.mxu0 0.0
        %2113 = vmatpush1.msra.mxu0 0.0
        %2114 = vmatprep.subr.mxu0 0.0
        %2115 = vmatpush1.msra.mxu0 %v2079
        %2116 = vmatprep.subr.mxu0 0.0
        %2117 = vmatpush1.msra.mxu0 %v2078
        %2118 = vmatprep.subr.mxu0 0.0
        %2119 = vmatpush1.msra.mxu0 %v2077
        %2120 = vmatprep.subr.mxu0 0.0
        %2121 = vmatpush1.msra.mxu0 %v2076
        %2122 = vmatprep.subr.mxu0 0.0
        %2123 = vmatpush2.msra.mxu0 0.0
        %2124 = vmatprep.subr.mxu0 0.0
        %2125 = vmatpush2.msra.mxu0 0.0
        %2126 = vmatprep.subr.mxu0 0.0
        %2127 = vmatpush2.msra.mxu0 0.0
        %2128 = vmatprep.subr.mxu0 0.0
        %2129 = vmatpush2.msra.mxu0 0.0
        %2130 = vmatprep.subr.mxu0 0.0
        %2131 = vmatpush2.msra.mxu0 0.0
        %2132 = vmatprep.subr.mxu0 0.0
        %2133 = vmatpush2.msra.mxu0 0.0
        %2134 = vmatprep.subr.mxu0 0.0
        %2135 = vmatpush2.msra.mxu0 0.0
        %2136 = vmatprep.subr.mxu0 0.0
        %2137 = vmatpush2.msra.mxu0 0.0
        %2138 = vmatprep.subr.mxu0 0.0
        %2139 = vmatpush2.msra.mxu0 0.0
        %2140 = vmatprep.subr.mxu0 0.0
        %2141 = vmatpush2.msra.mxu0 0.0
        %2142 = vmatprep.subr.mxu0 0.0
        %2143 = vmatpush2.msra.mxu0 0.0
        %2144 = vmatprep.subr.mxu0 0.0
        %2145 = vmatpush2.msra.mxu0 0.0
        %2146 = vmatprep.subr.mxu0 0.0
        %2147 = vmatpush2.msra.mxu0 0.0
        %2148 = vmatprep.subr.mxu0 0.0
        %2149 = vmatpush2.msra.mxu0 0.0
        %2150 = vmatprep.subr.mxu0 0.0
        %2151 = vmatpush2.msra.mxu0 0.0
        %2152 = vmatprep.subr.mxu0 0.0
        %2153 = vmatpush2.msra.mxu0 0.0
        %2154 = vmatprep.mubr.f32.mxu0 0.0
        %2155 = vmatmul.mubr.f32.gmra.mxu0 %v2088
        %v2156 = vpop.f32.mrf.mxu0
        %v2157 = vadd.f32 %v2085, %v2156
        %v2158 = vpop.f32.mrf.mxu0
        %2159 = vdwg.mxu0
        %2161 = vrot.lane.b32.xlu0 %v1989, 120
        %v2162 = vpop.permute.xlu0 %2161
        %2163 = vrot.lane.b32.xlu0 %v1989, 112
        %v2164 = vpop.permute.xlu0 %2163
        %2165 = vrot.lane.b32.xlu0 %v1989, 104
        %v2166 = vpop.permute.xlu0 %2165
        %2168 = vrot.lane.b32.xlu0 %v2073, 120
        %v2169 = vpop.permute.xlu0 %2168
        %2170 = vrot.lane.b32.xlu0 %v2073, 112
        %v2171 = vpop.permute.xlu0 %2170
        %2172 = vrot.lane.b32.xlu0 %v2073, 104
        %v2173 = vpop.permute.xlu0 %2172
        %2175 = vrot.lane.b32.xlu0 %v2157, 120
        %v2176 = vpop.permute.xlu0 %2175
        %2178 = vrot.lane.b32.xlu0 %v2157, 112
        %v2179 = vpop.permute.xlu0 %2178
        %2181 = vrot.lane.b32.xlu0 %v2157, 104
        %v2182 = vpop.permute.xlu0 %2181
        %vm2184 = vcmask 64512
        %v2185 = vsel %vm2184, %v1989, 0
        %v2187 = vsel %vm2184, %v2073, 0
        %2189 = vmatprep.subr.mxu0 0.0
        %2190 = vmatpush1.xpose.msra.mxu0 0.0
        %2191 = vmatprep.subr.mxu0 0.0
        %2192 = vmatpush1.xpose.msra.mxu0 0.0
        %2193 = vmatprep.subr.mxu0 0.0
        %2194 = vmatpush1.xpose.msra.mxu0 0.0
        %2195 = vmatprep.subr.mxu0 0.0
        %2196 = vmatpush1.xpose.msra.mxu0 0.0
        %2197 = vmatprep.subr.mxu0 0.0
        %2198 = vmatpush1.xpose.msra.mxu0 0.0
        %2199 = vmatprep.subr.mxu0 0.0
        %2200 = vmatpush1.xpose.msra.mxu0 0.0
        %2201 = vmatprep.subr.mxu0 0.0
        %2202 = vmatpush1.xpose.msra.mxu0 0.0
        %2203 = vmatprep.subr.mxu0 0.0
        %2204 = vmatpush1.xpose.msra.mxu0 0.0
        %2205 = vmatprep.subr.mxu0 0.0
        %2206 = vmatpush1.xpose.msra.mxu0 0.0
        %2207 = vmatprep.subr.mxu0 0.0
        %2208 = vmatpush1.xpose.msra.mxu0 0.0
        %2209 = vmatprep.subr.mxu0 0.0
        %2210 = vmatpush1.xpose.msra.mxu0 0.0
        %2211 = vmatprep.subr.mxu0 0.0
        %2212 = vmatpush1.xpose.msra.mxu0 0.0
        %2213 = vmatprep.subr.mxu0 0.0
        %2214 = vmatpush1.xpose.msra.mxu0 0.0
        %2215 = vmatprep.subr.mxu0 0.0
        %2216 = vmatpush1.xpose.msra.mxu0 0.0
        %2217 = vmatprep.subr.mxu0 0.0
        %2218 = vmatpush1.xpose.msra.mxu0 0.0
        %2219 = vmatprep.subr.mxu0 0.0
        %2220 = vmatpush1.xpose.msra.mxu0 %v2187
        %2221 = vmatprep.subr.mxu0 0.0
        %2222 = vmatpush2.xpose.msra.mxu0 0.0
        %2223 = vmatprep.subr.mxu0 0.0
        %2224 = vmatpush2.xpose.msra.mxu0 0.0
        %2225 = vmatprep.subr.mxu0 0.0
        %2226 = vmatpush2.xpose.msra.mxu0 0.0
        %2227 = vmatprep.subr.mxu0 0.0
        %2228 = vmatpush2.xpose.msra.mxu0 0.0
        %2229 = vmatprep.subr.mxu0 0.0
        %2230 = vmatpush2.xpose.msra.mxu0 0.0
        %2231 = vmatprep.subr.mxu0 0.0
        %2232 = vmatpush2.xpose.msra.mxu0 0.0
        %2233 = vmatprep.subr.mxu0 0.0
        %2234 = vmatpush2.xpose.msra.mxu0 0.0
        %2235 = vmatprep.subr.mxu0 0.0
        %2236 = vmatpush2.xpose.msra.mxu0 0.0
        %2237 = vmatprep.subr.mxu0 0.0
        %2238 = vmatpush2.xpose.msra.mxu0 0.0
        %2239 = vmatprep.subr.mxu0 0.0
        %2240 = vmatpush2.xpose.msra.mxu0 0.0
        %2241 = vmatprep.subr.mxu0 0.0
        %2242 = vmatpush2.xpose.msra.mxu0 0.0
        %2243 = vmatprep.subr.mxu0 0.0
        %2244 = vmatpush2.xpose.msra.mxu0 0.0
        %2245 = vmatprep.subr.mxu0 0.0
        %2246 = vmatpush2.xpose.msra.mxu0 0.0
        %2247 = vmatprep.subr.mxu0 0.0
        %2248 = vmatpush2.xpose.msra.mxu0 0.0
        %2249 = vmatprep.subr.mxu0 0.0
        %2250 = vmatpush2.xpose.msra.mxu0 0.0
        %2251 = vmatprep.subr.mxu0 0.0
        %2252 = vmatpush2.xpose.msra.mxu0 0.0
        %2253 = vmatprep.mubr.f32.mxu0 0.0
        %2254 = vmatmul.mubr.f32.gmra.mxu0 %v2185
        %v2255 = vpop.f32.mrf.mxu0
        %v2256 = vadd.f32 0.0, %v2255
        %v2257 = vpop.f32.mrf.mxu0
        %2258 = vdwg.mxu0
        %v2259 = vsel %vm2184, %v2162, 0
        %v2261 = vsel %vm2184, %v2169, 0
        %2263 = vmatprep.subr.mxu0 0.0
        %2264 = vmatpush1.xpose.msra.mxu0 0.0
        %2265 = vmatprep.subr.mxu0 0.0
        %2266 = vmatpush1.xpose.msra.mxu0 0.0
        %2267 = vmatprep.subr.mxu0 0.0
        %2268 = vmatpush1.xpose.msra.mxu0 0.0
        %2269 = vmatprep.subr.mxu0 0.0
        %2270 = vmatpush1.xpose.msra.mxu0 0.0
        %2271 = vmatprep.subr.mxu0 0.0
        %2272 = vmatpush1.xpose.msra.mxu0 0.0
        %2273 = vmatprep.subr.mxu0 0.0
        %2274 = vmatpush1.xpose.msra.mxu0 0.0
        %2275 = vmatprep.subr.mxu0 0.0
        %2276 = vmatpush1.xpose.msra.mxu0 0.0
        %2277 = vmatprep.subr.mxu0 0.0
        %2278 = vmatpush1.xpose.msra.mxu0 0.0
        %2279 = vmatprep.subr.mxu0 0.0
        %2280 = vmatpush1.xpose.msra.mxu0 0.0
        %2281 = vmatprep.subr.mxu0 0.0
        %2282 = vmatpush1.xpose.msra.mxu0 0.0
        %2283 = vmatprep.subr.mxu0 0.0
        %2284 = vmatpush1.xpose.msra.mxu0 0.0
        %2285 = vmatprep.subr.mxu0 0.0
        %2286 = vmatpush1.xpose.msra.mxu0 0.0
        %2287 = vmatprep.subr.mxu0 0.0
        %2288 = vmatpush1.xpose.msra.mxu0 0.0
        %2289 = vmatprep.subr.mxu0 0.0
        %2290 = vmatpush1.xpose.msra.mxu0 0.0
        %2291 = vmatprep.subr.mxu0 0.0
        %2292 = vmatpush1.xpose.msra.mxu0 0.0
        %2293 = vmatprep.subr.mxu0 0.0
        %2294 = vmatpush1.xpose.msra.mxu0 %v2261
        %2295 = vmatprep.subr.mxu0 0.0
        %2296 = vmatpush2.xpose.msra.mxu0 0.0
        %2297 = vmatprep.subr.mxu0 0.0
        %2298 = vmatpush2.xpose.msra.mxu0 0.0
        %2299 = vmatprep.subr.mxu0 0.0
        %2300 = vmatpush2.xpose.msra.mxu0 0.0
        %2301 = vmatprep.subr.mxu0 0.0
        %2302 = vmatpush2.xpose.msra.mxu0 0.0
        %2303 = vmatprep.subr.mxu0 0.0
        %2304 = vmatpush2.xpose.msra.mxu0 0.0
        %2305 = vmatprep.subr.mxu0 0.0
        %2306 = vmatpush2.xpose.msra.mxu0 0.0
        %2307 = vmatprep.subr.mxu0 0.0
        %2308 = vmatpush2.xpose.msra.mxu0 0.0
        %2309 = vmatprep.subr.mxu0 0.0
        %2310 = vmatpush2.xpose.msra.mxu0 0.0
        %2311 = vmatprep.subr.mxu0 0.0
        %2312 = vmatpush2.xpose.msra.mxu0 0.0
        %2313 = vmatprep.subr.mxu0 0.0
        %2314 = vmatpush2.xpose.msra.mxu0 0.0
        %2315 = vmatprep.subr.mxu0 0.0
        %2316 = vmatpush2.xpose.msra.mxu0 0.0
        %2317 = vmatprep.subr.mxu0 0.0
        %2318 = vmatpush2.xpose.msra.mxu0 0.0
        %2319 = vmatprep.subr.mxu0 0.0
        %2320 = vmatpush2.xpose.msra.mxu0 0.0
        %2321 = vmatprep.subr.mxu0 0.0
        %2322 = vmatpush2.xpose.msra.mxu0 0.0
        %2323 = vmatprep.subr.mxu0 0.0
        %2324 = vmatpush2.xpose.msra.mxu0 0.0
        %2325 = vmatprep.subr.mxu0 0.0
        %2326 = vmatpush2.xpose.msra.mxu0 0.0
        %2327 = vmatprep.mubr.f32.mxu0 0.0
        %2328 = vmatmul.mubr.f32.gmra.mxu0 %v2259
        %v2329 = vpop.f32.mrf.mxu0
        %v2330 = vadd.f32 0.0, %v2329
        %v2331 = vpop.f32.mrf.mxu0
        %2332 = vdwg.mxu0
        %v2333 = vsel %vm2184, %v2164, 0
        %v2335 = vsel %vm2184, %v2171, 0
        %2337 = vmatprep.subr.mxu0 0.0
        %2338 = vmatpush1.xpose.msra.mxu0 0.0
        %2339 = vmatprep.subr.mxu0 0.0
        %2340 = vmatpush1.xpose.msra.mxu0 0.0
        %2341 = vmatprep.subr.mxu0 0.0
        %2342 = vmatpush1.xpose.msra.mxu0 0.0
        %2343 = vmatprep.subr.mxu0 0.0
        %2344 = vmatpush1.xpose.msra.mxu0 0.0
        %2345 = vmatprep.subr.mxu0 0.0
        %2346 = vmatpush1.xpose.msra.mxu0 0.0
        %2347 = vmatprep.subr.mxu0 0.0
        %2348 = vmatpush1.xpose.msra.mxu0 0.0
        %2349 = vmatprep.subr.mxu0 0.0
        %2350 = vmatpush1.xpose.msra.mxu0 0.0
        %2351 = vmatprep.subr.mxu0 0.0
        %2352 = vmatpush1.xpose.msra.mxu0 0.0
        %2353 = vmatprep.subr.mxu0 0.0
        %2354 = vmatpush1.xpose.msra.mxu0 0.0
        %2355 = vmatprep.subr.mxu0 0.0
        %2356 = vmatpush1.xpose.msra.mxu0 0.0
        %2357 = vmatprep.subr.mxu0 0.0
        %2358 = vmatpush1.xpose.msra.mxu0 0.0
        %2359 = vmatprep.subr.mxu0 0.0
        %2360 = vmatpush1.xpose.msra.mxu0 0.0
        %2361 = vmatprep.subr.mxu0 0.0
        %2362 = vmatpush1.xpose.msra.mxu0 0.0
        %2363 = vmatprep.subr.mxu0 0.0
        %2364 = vmatpush1.xpose.msra.mxu0 0.0
        %2365 = vmatprep.subr.mxu0 0.0
        %2366 = vmatpush1.xpose.msra.mxu0 0.0
        %2367 = vmatprep.subr.mxu0 0.0
        %2368 = vmatpush1.xpose.msra.mxu0 %v2335
        %2369 = vmatprep.subr.mxu0 0.0
        %2370 = vmatpush2.xpose.msra.mxu0 0.0
        %2371 = vmatprep.subr.mxu0 0.0
        %2372 = vmatpush2.xpose.msra.mxu0 0.0
        %2373 = vmatprep.subr.mxu0 0.0
        %2374 = vmatpush2.xpose.msra.mxu0 0.0
        %2375 = vmatprep.subr.mxu0 0.0
        %2376 = vmatpush2.xpose.msra.mxu0 0.0
        %2377 = vmatprep.subr.mxu0 0.0
        %2378 = vmatpush2.xpose.msra.mxu0 0.0
        %2379 = vmatprep.subr.mxu0 0.0
        %2380 = vmatpush2.xpose.msra.mxu0 0.0
        %2381 = vmatprep.subr.mxu0 0.0
        %2382 = vmatpush2.xpose.msra.mxu0 0.0
        %2383 = vmatprep.subr.mxu0 0.0
        %2384 = vmatpush2.xpose.msra.mxu0 0.0
        %2385 = vmatprep.subr.mxu0 0.0
        %2386 = vmatpush2.xpose.msra.mxu0 0.0
        %2387 = vmatprep.subr.mxu0 0.0
        %2388 = vmatpush2.xpose.msra.mxu0 0.0
        %2389 = vmatprep.subr.mxu0 0.0
        %2390 = vmatpush2.xpose.msra.mxu0 0.0
        %2391 = vmatprep.subr.mxu0 0.0
        %2392 = vmatpush2.xpose.msra.mxu0 0.0
        %2393 = vmatprep.subr.mxu0 0.0
        %2394 = vmatpush2.xpose.msra.mxu0 0.0
        %2395 = vmatprep.subr.mxu0 0.0
        %2396 = vmatpush2.xpose.msra.mxu0 0.0
        %2397 = vmatprep.subr.mxu0 0.0
        %2398 = vmatpush2.xpose.msra.mxu0 0.0
        %2399 = vmatprep.subr.mxu0 0.0
        %2400 = vmatpush2.xpose.msra.mxu0 0.0
        %2401 = vmatprep.mubr.f32.mxu0 0.0
        %2402 = vmatmul.mubr.f32.gmra.mxu0 %v2333
        %v2403 = vpop.f32.mrf.mxu0
        %v2404 = vadd.f32 0.0, %v2403
        %v2405 = vpop.f32.mrf.mxu0
        %2406 = vdwg.mxu0
        %v2407 = vsel %vm2184, %v2166, 0
        %v2409 = vsel %vm2184, %v2173, 0
        %2411 = vmatprep.subr.mxu0 0.0
        %2412 = vmatpush1.xpose.msra.mxu0 0.0
        %2413 = vmatprep.subr.mxu0 0.0
        %2414 = vmatpush1.xpose.msra.mxu0 0.0
        %2415 = vmatprep.subr.mxu0 0.0
        %2416 = vmatpush1.xpose.msra.mxu0 0.0
        %2417 = vmatprep.subr.mxu0 0.0
        %2418 = vmatpush1.xpose.msra.mxu0 0.0
        %2419 = vmatprep.subr.mxu0 0.0
        %2420 = vmatpush1.xpose.msra.mxu0 0.0
        %2421 = vmatprep.subr.mxu0 0.0
        %2422 = vmatpush1.xpose.msra.mxu0 0.0
        %2423 = vmatprep.subr.mxu0 0.0
        %2424 = vmatpush1.xpose.msra.mxu0 0.0
        %2425 = vmatprep.subr.mxu0 0.0
        %2426 = vmatpush1.xpose.msra.mxu0 0.0
        %2427 = vmatprep.subr.mxu0 0.0
        %2428 = vmatpush1.xpose.msra.mxu0 0.0
        %2429 = vmatprep.subr.mxu0 0.0
        %2430 = vmatpush1.xpose.msra.mxu0 0.0
        %2431 = vmatprep.subr.mxu0 0.0
        %2432 = vmatpush1.xpose.msra.mxu0 0.0
        %2433 = vmatprep.subr.mxu0 0.0
        %2434 = vmatpush1.xpose.msra.mxu0 0.0
        %2435 = vmatprep.subr.mxu0 0.0
        %2436 = vmatpush1.xpose.msra.mxu0 0.0
        %2437 = vmatprep.subr.mxu0 0.0
        %2438 = vmatpush1.xpose.msra.mxu0 0.0
        %2439 = vmatprep.subr.mxu0 0.0
        %2440 = vmatpush1.xpose.msra.mxu0 0.0
        %2441 = vmatprep.subr.mxu0 0.0
        %2442 = vmatpush1.xpose.msra.mxu0 %v2409
        %2443 = vmatprep.subr.mxu0 0.0
        %2444 = vmatpush2.xpose.msra.mxu0 0.0
        %2445 = vmatprep.subr.mxu0 0.0
        %2446 = vmatpush2.xpose.msra.mxu0 0.0
        %2447 = vmatprep.subr.mxu0 0.0
        %2448 = vmatpush2.xpose.msra.mxu0 0.0
        %2449 = vmatprep.subr.mxu0 0.0
        %2450 = vmatpush2.xpose.msra.mxu0 0.0
        %2451 = vmatprep.subr.mxu0 0.0
        %2452 = vmatpush2.xpose.msra.mxu0 0.0
        %2453 = vmatprep.subr.mxu0 0.0
        %2454 = vmatpush2.xpose.msra.mxu0 0.0
        %2455 = vmatprep.subr.mxu0 0.0
        %2456 = vmatpush2.xpose.msra.mxu0 0.0
        %2457 = vmatprep.subr.mxu0 0.0
        %2458 = vmatpush2.xpose.msra.mxu0 0.0
        %2459 = vmatprep.subr.mxu0 0.0
        %2460 = vmatpush2.xpose.msra.mxu0 0.0
        %2461 = vmatprep.subr.mxu0 0.0
        %2462 = vmatpush2.xpose.msra.mxu0 0.0
        %2463 = vmatprep.subr.mxu0 0.0
        %2464 = vmatpush2.xpose.msra.mxu0 0.0
        %2465 = vmatprep.subr.mxu0 0.0
        %2466 = vmatpush2.xpose.msra.mxu0 0.0
        %2467 = vmatprep.subr.mxu0 0.0
        %2468 = vmatpush2.xpose.msra.mxu0 0.0
        %2469 = vmatprep.subr.mxu0 0.0
        %2470 = vmatpush2.xpose.msra.mxu0 0.0
        %2471 = vmatprep.subr.mxu0 0.0
        %2472 = vmatpush2.xpose.msra.mxu0 0.0
        %2473 = vmatprep.subr.mxu0 0.0
        %2474 = vmatpush2.xpose.msra.mxu0 0.0
        %2475 = vmatprep.mubr.f32.mxu0 0.0
        %2476 = vmatmul.mubr.f32.gmra.mxu0 %v2407
        %v2477 = vpop.f32.mrf.mxu0
        %v2478 = vadd.f32 0.0, %v2477
        %v2479 = vpop.f32.mrf.mxu0
        %2480 = vdwg.mxu0
        %v2481 = vsel %vm2184, %v2256, -inf
        %2482 = vmax.xlane.f32.xlu0 %v2481
        %v2483 = vpop.xlane.xlu0 %2482
        %v2484 = vsel %vm2184, %v2330, -inf
        %2485 = vmax.xlane.f32.xlu0 %v2484
        %v2486 = vpop.xlane.xlu0 %2485
        %v2487 = vsel %vm2184, %v2404, -inf
        %2488 = vmax.xlane.f32.xlu0 %v2487
        %v2489 = vpop.xlane.xlu0 %2488
        %v2490 = vsel %vm2184, %v2478, -inf
        %2491 = vmax.xlane.f32.xlu0 %v2490
        %v2492 = vpop.xlane.xlu0 %2491
        %v2493 = vsub.f32 %v2256, %v2483
        %v2494 = vsub.f32 %v2330, %v2486
        %v2495 = vsub.f32 %v2404, %v2489
        %v2496 = vsub.f32 %v2478, %v2492
        %v2497 = vmul.f32 %v2493, 1.442695
        %v2498 = vpow.pop %v2497
        %v2499 = vmul.f32 %v2494, 1.442695
        %v2500 = vpow.pop %v2499
        %v2501 = vmul.f32 %v2495, 1.442695
        %v2502 = vpow.pop %v2501
        %v2503 = vmul.f32 %v2496, 1.442695
        %v2504 = vpow.pop %v2503
        %v2505 = vsel %vm2184, %v2498, 0.0
        %2506 = vadd.xlane.f32.xlu0 %v2505
        %v2507 = vpop.xlane.xlu0 %2506
        %v2508 = vsel %vm2184, %v2500, 0.0
        %2509 = vadd.xlane.f32.xlu0 %v2508
        %v2510 = vpop.xlane.xlu0 %2509
        %v2511 = vsel %vm2184, %v2502, 0.0
        %2512 = vadd.xlane.f32.xlu0 %v2511
        %v2513 = vpop.xlane.xlu0 %2512
        %v2514 = vsel %vm2184, %v2504, 0.0
        %2515 = vadd.xlane.f32.xlu0 %v2514
        %v2516 = vpop.xlane.xlu0 %2515
        %v2517 = vrcp.pop %v2507
        %v2518 = vrcp.pop %v2510
        %v2519 = vrcp.pop %v2513
        %v2520 = vrcp.pop %v2516
        %v2521 = vmul.f32 %v2498, %v2517
        %v2522 = vmul.f32 %v2500, %v2518
        %v2523 = vmul.f32 %v2502, %v2519
        %v2524 = vmul.f32 %v2504, %v2520
        %v2526 = vsel %vm2184, %v2521, 0
        %2528 = vmatprep.subr.mxu0 0.0
        %2529 = vmatpush1.msra.mxu0 0.0
        %2530 = vmatprep.subr.mxu0 0.0
        %2531 = vmatpush1.msra.mxu0 0.0
        %2532 = vmatprep.subr.mxu0 0.0
        %2533 = vmatpush1.msra.mxu0 0.0
        %2534 = vmatprep.subr.mxu0 0.0
        %2535 = vmatpush1.msra.mxu0 0.0
        %2536 = vmatprep.subr.mxu0 0.0
        %2537 = vmatpush1.msra.mxu0 0.0
        %2538 = vmatprep.subr.mxu0 0.0
        %2539 = vmatpush1.msra.mxu0 0.0
        %2540 = vmatprep.subr.mxu0 0.0
        %2541 = vmatpush1.msra.mxu0 0.0
        %2542 = vmatprep.subr.mxu0 0.0
        %2543 = vmatpush1.msra.mxu0 0.0
        %2544 = vmatprep.subr.mxu0 0.0
        %2545 = vmatpush1.msra.mxu0 0.0
        %2546 = vmatprep.subr.mxu0 0.0
        %2547 = vmatpush1.msra.mxu0 0.0
        %2548 = vmatprep.subr.mxu0 0.0
        %2549 = vmatpush1.msra.mxu0 0.0
        %2550 = vmatprep.subr.mxu0 0.0
        %2551 = vmatpush1.msra.mxu0 0.0
        %2552 = vmatprep.subr.mxu0 0.0
        %2553 = vmatpush1.msra.mxu0 0.0
        %2554 = vmatprep.subr.mxu0 0.0
        %2555 = vmatpush1.msra.mxu0 0.0
        %2556 = vmatprep.subr.mxu0 0.0
        %2557 = vmatpush1.msra.mxu0 0.0
        %2558 = vmatprep.subr.mxu0 0.0
        %2559 = vmatpush1.msra.mxu0 %v2157
        %2560 = vmatprep.subr.mxu0 0.0
        %2561 = vmatpush2.msra.mxu0 0.0
        %2562 = vmatprep.subr.mxu0 0.0
        %2563 = vmatpush2.msra.mxu0 0.0
        %2564 = vmatprep.subr.mxu0 0.0
        %2565 = vmatpush2.msra.mxu0 0.0
        %2566 = vmatprep.subr.mxu0 0.0
        %2567 = vmatpush2.msra.mxu0 0.0
        %2568 = vmatprep.subr.mxu0 0.0
        %2569 = vmatpush2.msra.mxu0 0.0
        %2570 = vmatprep.subr.mxu0 0.0
        %2571 = vmatpush2.msra.mxu0 0.0
        %2572 = vmatprep.subr.mxu0 0.0
        %2573 = vmatpush2.msra.mxu0 0.0
        %2574 = vmatprep.subr.mxu0 0.0
        %2575 = vmatpush2.msra.mxu0 0.0
        %2576 = vmatprep.subr.mxu0 0.0
        %2577 = vmatpush2.msra.mxu0 0.0
        %2578 = vmatprep.subr.mxu0 0.0
        %2579 = vmatpush2.msra.mxu0 0.0
        %2580 = vmatprep.subr.mxu0 0.0
        %2581 = vmatpush2.msra.mxu0 0.0
        %2582 = vmatprep.subr.mxu0 0.0
        %2583 = vmatpush2.msra.mxu0 0.0
        %2584 = vmatprep.subr.mxu0 0.0
        %2585 = vmatpush2.msra.mxu0 0.0
        %2586 = vmatprep.subr.mxu0 0.0
        %2587 = vmatpush2.msra.mxu0 0.0
        %2588 = vmatprep.subr.mxu0 0.0
        %2589 = vmatpush2.msra.mxu0 0.0
        %2590 = vmatprep.subr.mxu0 0.0
        %2591 = vmatpush2.msra.mxu0 0.0
        %2592 = vmatprep.mubr.f32.mxu0 0.0
        %2593 = vmatmul.mubr.f32.gmra.mxu0 %v2526
        %v2594 = vpop.f32.mrf.mxu0
        %v2595 = vadd.f32 0.0, %v2594
        %v2596 = vpop.f32.mrf.mxu0
        %2597 = vdwg.mxu0
        %v2599 = vsel %vm2184, %v2522, 0
        %2601 = vmatprep.subr.mxu0 0.0
        %2602 = vmatpush1.msra.mxu0 0.0
        %2603 = vmatprep.subr.mxu0 0.0
        %2604 = vmatpush1.msra.mxu0 0.0
        %2605 = vmatprep.subr.mxu0 0.0
        %2606 = vmatpush1.msra.mxu0 0.0
        %2607 = vmatprep.subr.mxu0 0.0
        %2608 = vmatpush1.msra.mxu0 0.0
        %2609 = vmatprep.subr.mxu0 0.0
        %2610 = vmatpush1.msra.mxu0 0.0
        %2611 = vmatprep.subr.mxu0 0.0
        %2612 = vmatpush1.msra.mxu0 0.0
        %2613 = vmatprep.subr.mxu0 0.0
        %2614 = vmatpush1.msra.mxu0 0.0
        %2615 = vmatprep.subr.mxu0 0.0
        %2616 = vmatpush1.msra.mxu0 0.0
        %2617 = vmatprep.subr.mxu0 0.0
        %2618 = vmatpush1.msra.mxu0 0.0
        %2619 = vmatprep.subr.mxu0 0.0
        %2620 = vmatpush1.msra.mxu0 0.0
        %2621 = vmatprep.subr.mxu0 0.0
        %2622 = vmatpush1.msra.mxu0 0.0
        %2623 = vmatprep.subr.mxu0 0.0
        %2624 = vmatpush1.msra.mxu0 0.0
        %2625 = vmatprep.subr.mxu0 0.0
        %2626 = vmatpush1.msra.mxu0 0.0
        %2627 = vmatprep.subr.mxu0 0.0
        %2628 = vmatpush1.msra.mxu0 0.0
        %2629 = vmatprep.subr.mxu0 0.0
        %2630 = vmatpush1.msra.mxu0 0.0
        %2631 = vmatprep.subr.mxu0 0.0
        %2632 = vmatpush1.msra.mxu0 %v2176
        %2633 = vmatprep.subr.mxu0 0.0
        %2634 = vmatpush2.msra.mxu0 0.0
        %2635 = vmatprep.subr.mxu0 0.0
        %2636 = vmatpush2.msra.mxu0 0.0
        %2637 = vmatprep.subr.mxu0 0.0
        %2638 = vmatpush2.msra.mxu0 0.0
        %2639 = vmatprep.subr.mxu0 0.0
        %2640 = vmatpush2.msra.mxu0 0.0
        %2641 = vmatprep.subr.mxu0 0.0
        %2642 = vmatpush2.msra.mxu0 0.0
        %2643 = vmatprep.subr.mxu0 0.0
        %2644 = vmatpush2.msra.mxu0 0.0
        %2645 = vmatprep.subr.mxu0 0.0
        %2646 = vmatpush2.msra.mxu0 0.0
        %2647 = vmatprep.subr.mxu0 0.0
        %2648 = vmatpush2.msra.mxu0 0.0
        %2649 = vmatprep.subr.mxu0 0.0
        %2650 = vmatpush2.msra.mxu0 0.0
        %2651 = vmatprep.subr.mxu0 0.0
        %2652 = vmatpush2.msra.mxu0 0.0
        %2653 = vmatprep.subr.mxu0 0.0
        %2654 = vmatpush2.msra.mxu0 0.0
        %2655 = vmatprep.subr.mxu0 0.0
        %2656 = vmatpush2.msra.mxu0 0.0
        %2657 = vmatprep.subr.mxu0 0.0
        %2658 = vmatpush2.msra.mxu0 0.0
        %2659 = vmatprep.subr.mxu0 0.0
        %2660 = vmatpush2.msra.mxu0 0.0
        %2661 = vmatprep.subr.mxu0 0.0
        %2662 = vmatpush2.msra.mxu0 0.0
        %2663 = vmatprep.subr.mxu0 0.0
        %2664 = vmatpush2.msra.mxu0 0.0
        %2665 = vmatprep.mubr.f32.mxu0 0.0
        %2666 = vmatmul.mubr.f32.gmra.mxu0 %v2599
        %v2667 = vpop.f32.mrf.mxu0
        %v2668 = vadd.f32 0.0, %v2667
        %v2669 = vpop.f32.mrf.mxu0
        %2670 = vdwg.mxu0
        %v2672 = vsel %vm2184, %v2523, 0
        %2674 = vmatprep.subr.mxu0 0.0
        %2675 = vmatpush1.msra.mxu0 0.0
        %2676 = vmatprep.subr.mxu0 0.0
        %2677 = vmatpush1.msra.mxu0 0.0
        %2678 = vmatprep.subr.mxu0 0.0
        %2679 = vmatpush1.msra.mxu0 0.0
        %2680 = vmatprep.subr.mxu0 0.0
        %2681 = vmatpush1.msra.mxu0 0.0
        %2682 = vmatprep.subr.mxu0 0.0
        %2683 = vmatpush1.msra.mxu0 0.0
        %2684 = vmatprep.subr.mxu0 0.0
        %2685 = vmatpush1.msra.mxu0 0.0
        %2686 = vmatprep.subr.mxu0 0.0
        %2687 = vmatpush1.msra.mxu0 0.0
        %2688 = vmatprep.subr.mxu0 0.0
        %2689 = vmatpush1.msra.mxu0 0.0
        %2690 = vmatprep.subr.mxu0 0.0
        %2691 = vmatpush1.msra.mxu0 0.0
        %2692 = vmatprep.subr.mxu0 0.0
        %2693 = vmatpush1.msra.mxu0 0.0
        %2694 = vmatprep.subr.mxu0 0.0
        %2695 = vmatpush1.msra.mxu0 0.0
        %2696 = vmatprep.subr.mxu0 0.0
        %2697 = vmatpush1.msra.mxu0 0.0
        %2698 = vmatprep.subr.mxu0 0.0
        %2699 = vmatpush1.msra.mxu0 0.0
        %2700 = vmatprep.subr.mxu0 0.0
        %2701 = vmatpush1.msra.mxu0 0.0
        %2702 = vmatprep.subr.mxu0 0.0
        %2703 = vmatpush1.msra.mxu0 0.0
        %2704 = vmatprep.subr.mxu0 0.0
        %2705 = vmatpush1.msra.mxu0 %v2179
        %2706 = vmatprep.subr.mxu0 0.0
        %2707 = vmatpush2.msra.mxu0 0.0
        %2708 = vmatprep.subr.mxu0 0.0
        %2709 = vmatpush2.msra.mxu0 0.0
        %2710 = vmatprep.subr.mxu0 0.0
        %2711 = vmatpush2.msra.mxu0 0.0
        %2712 = vmatprep.subr.mxu0 0.0
        %2713 = vmatpush2.msra.mxu0 0.0
        %2714 = vmatprep.subr.mxu0 0.0
        %2715 = vmatpush2.msra.mxu0 0.0
        %2716 = vmatprep.subr.mxu0 0.0
        %2717 = vmatpush2.msra.mxu0 0.0
        %2718 = vmatprep.subr.mxu0 0.0
        %2719 = vmatpush2.msra.mxu0 0.0
        %2720 = vmatprep.subr.mxu0 0.0
        %2721 = vmatpush2.msra.mxu0 0.0
        %2722 = vmatprep.subr.mxu0 0.0
        %2723 = vmatpush2.msra.mxu0 0.0
        %2724 = vmatprep.subr.mxu0 0.0
        %2725 = vmatpush2.msra.mxu0 0.0
        %2726 = vmatprep.subr.mxu0 0.0
        %2727 = vmatpush2.msra.mxu0 0.0
        %2728 = vmatprep.subr.mxu0 0.0
        %2729 = vmatpush2.msra.mxu0 0.0
        %2730 = vmatprep.subr.mxu0 0.0
        %2731 = vmatpush2.msra.mxu0 0.0
        %2732 = vmatprep.subr.mxu0 0.0
        %2733 = vmatpush2.msra.mxu0 0.0
        %2734 = vmatprep.subr.mxu0 0.0
        %2735 = vmatpush2.msra.mxu0 0.0
        %2736 = vmatprep.subr.mxu0 0.0
        %2737 = vmatpush2.msra.mxu0 0.0
        %2738 = vmatprep.mubr.f32.mxu0 0.0
        %2739 = vmatmul.mubr.f32.gmra.mxu0 %v2672
        %v2740 = vpop.f32.mrf.mxu0
        %v2741 = vadd.f32 0.0, %v2740
        %v2742 = vpop.f32.mrf.mxu0
        %2743 = vdwg.mxu0
        %v2745 = vsel %vm2184, %v2524, 0
        %2747 = vmatprep.subr.mxu0 0.0
        %2748 = vmatpush1.msra.mxu0 0.0
        %2749 = vmatprep.subr.mxu0 0.0
        %2750 = vmatpush1.msra.mxu0 0.0
        %2751 = vmatprep.subr.mxu0 0.0
        %2752 = vmatpush1.msra.mxu0 0.0
        %2753 = vmatprep.subr.mxu0 0.0
        %2754 = vmatpush1.msra.mxu0 0.0
        %2755 = vmatprep.subr.mxu0 0.0
        %2756 = vmatpush1.msra.mxu0 0.0
        %2757 = vmatprep.subr.mxu0 0.0
        %2758 = vmatpush1.msra.mxu0 0.0
        %2759 = vmatprep.subr.mxu0 0.0
        %2760 = vmatpush1.msra.mxu0 0.0
        %2761 = vmatprep.subr.mxu0 0.0
        %2762 = vmatpush1.msra.mxu0 0.0
        %2763 = vmatprep.subr.mxu0 0.0
        %2764 = vmatpush1.msra.mxu0 0.0
        %2765 = vmatprep.subr.mxu0 0.0
        %2766 = vmatpush1.msra.mxu0 0.0
        %2767 = vmatprep.subr.mxu0 0.0
        %2768 = vmatpush1.msra.mxu0 0.0
        %2769 = vmatprep.subr.mxu0 0.0
        %2770 = vmatpush1.msra.mxu0 0.0
        %2771 = vmatprep.subr.mxu0 0.0
        %2772 = vmatpush1.msra.mxu0 0.0
        %2773 = vmatprep.subr.mxu0 0.0
        %2774 = vmatpush1.msra.mxu0 0.0
        %2775 = vmatprep.subr.mxu0 0.0
        %2776 = vmatpush1.msra.mxu0 0.0
        %2777 = vmatprep.subr.mxu0 0.0
        %2778 = vmatpush1.msra.mxu0 %v2182
        %2779 = vmatprep.subr.mxu0 0.0
        %2780 = vmatpush2.msra.mxu0 0.0
        %2781 = vmatprep.subr.mxu0 0.0
        %2782 = vmatpush2.msra.mxu0 0.0
        %2783 = vmatprep.subr.mxu0 0.0
        %2784 = vmatpush2.msra.mxu0 0.0
        %2785 = vmatprep.subr.mxu0 0.0
        %2786 = vmatpush2.msra.mxu0 0.0
        %2787 = vmatprep.subr.mxu0 0.0
        %2788 = vmatpush2.msra.mxu0 0.0
        %2789 = vmatprep.subr.mxu0 0.0
        %2790 = vmatpush2.msra.mxu0 0.0
        %2791 = vmatprep.subr.mxu0 0.0
        %2792 = vmatpush2.msra.mxu0 0.0
        %2793 = vmatprep.subr.mxu0 0.0
        %2794 = vmatpush2.msra.mxu0 0.0
        %2795 = vmatprep.subr.mxu0 0.0
        %2796 = vmatpush2.msra.mxu0 0.0
        %2797 = vmatprep.subr.mxu0 0.0
        %2798 = vmatpush2.msra.mxu0 0.0
        %2799 = vmatprep.subr.mxu0 0.0
        %2800 = vmatpush2.msra.mxu0 0.0
        %2801 = vmatprep.subr.mxu0 0.0
        %2802 = vmatpush2.msra.mxu0 0.0
        %2803 = vmatprep.subr.mxu0 0.0
        %2804 = vmatpush2.msra.mxu0 0.0
        %2805 = vmatprep.subr.mxu0 0.0
        %2806 = vmatpush2.msra.mxu0 0.0
        %2807 = vmatprep.subr.mxu0 0.0
        %2808 = vmatpush2.msra.mxu0 0.0
        %2809 = vmatprep.subr.mxu0 0.0
        %2810 = vmatpush2.msra.mxu0 0.0
        %2811 = vmatprep.mubr.f32.mxu0 0.0
        %2812 = vmatmul.mubr.f32.gmra.mxu0 %v2745
        %v2813 = vpop.f32.mrf.mxu0
        %v2814 = vadd.f32 0.0, %v2813
        %v2815 = vpop.f32.mrf.mxu0
        %2816 = vdwg.mxu0
        %2818 = vrot.lane.b32.xlu0 %v2668, 8
        %v2819 = vpop.permute.xlu0 %2818
        %2822 = vrot.lane.b32.xlu0 %v2741, 16
        %v2823 = vpop.permute.xlu0 %2822
        %2826 = vrot.lane.b32.xlu0 %v2814, 24
        %v2827 = vpop.permute.xlu0 %2826
        %v2829 = vsel %vm2184, %v2595, %v2819
        %v2830 = vsel %vm1231, %v2829, %v2823
        %vm2831 = vcmask 195584
        %v2832 = vsel %vm2831, %v2830, %v2827
        %v2833 = vld [vmem:[#allocation25] sm:$0xff]
        %v2834 = vld [vmem:[#allocation25 + $0x8] sm:$0xff]
        %v2835 = vld [vmem:[#allocation25 + $0x10] sm:$0xff]
        %v2836 = vld [vmem:[#allocation25 + $0x18] sm:$0xff]
        %v2837 = vld [vmem:[%s57] sm:$0x1]
        %v2839 = vlaneseq
        %v2840 = vshrl.u32 %v2839, 7
        %v2841 = vsub.s32 0, %v2840
        %v2842 = vrot.slane %v2837, %v2841
        %v2845 = vsel %vm1896, %v2832, 0
        %2847 = vmatprep.subr.mxu0 0.0
        %2848 = vmatpush1.msra.mxu0 0.0
        %2849 = vmatprep.subr.mxu0 0.0
        %2850 = vmatpush1.msra.mxu0 0.0
        %2851 = vmatprep.subr.mxu0 0.0
        %2852 = vmatpush1.msra.mxu0 0.0
        %2853 = vmatprep.subr.mxu0 0.0
        %2854 = vmatpush1.msra.mxu0 0.0
        %2855 = vmatprep.subr.mxu0 0.0
        %2856 = vmatpush1.msra.mxu0 0.0
        %2857 = vmatprep.subr.mxu0 0.0
        %2858 = vmatpush1.msra.mxu0 0.0
        %2859 = vmatprep.subr.mxu0 0.0
        %2860 = vmatpush1.msra.mxu0 0.0
        %2861 = vmatprep.subr.mxu0 0.0
        %2862 = vmatpush1.msra.mxu0 0.0
        %2863 = vmatprep.subr.mxu0 0.0
        %2864 = vmatpush1.msra.mxu0 0.0
        %2865 = vmatprep.subr.mxu0 0.0
        %2866 = vmatpush1.msra.mxu0 0.0
        %2867 = vmatprep.subr.mxu0 0.0
        %2868 = vmatpush1.msra.mxu0 0.0
        %2869 = vmatprep.subr.mxu0 0.0
        %2870 = vmatpush1.msra.mxu0 0.0
        %2871 = vmatprep.subr.mxu0 0.0
        %2872 = vmatpush1.msra.mxu0 %v2836
        %2873 = vmatprep.subr.mxu0 0.0
        %2874 = vmatpush1.msra.mxu0 %v2835
        %2875 = vmatprep.subr.mxu0 0.0
        %2876 = vmatpush1.msra.mxu0 %v2834
        %2877 = vmatprep.subr.mxu0 0.0
        %2878 = vmatpush1.msra.mxu0 %v2833
        %2879 = vmatprep.subr.mxu0 0.0
        %2880 = vmatpush2.msra.mxu0 0.0
        %2881 = vmatprep.subr.mxu0 0.0
        %2882 = vmatpush2.msra.mxu0 0.0
        %2883 = vmatprep.subr.mxu0 0.0
        %2884 = vmatpush2.msra.mxu0 0.0
        %2885 = vmatprep.subr.mxu0 0.0
        %2886 = vmatpush2.msra.mxu0 0.0
        %2887 = vmatprep.subr.mxu0 0.0
        %2888 = vmatpush2.msra.mxu0 0.0
        %2889 = vmatprep.subr.mxu0 0.0
        %2890 = vmatpush2.msra.mxu0 0.0
        %2891 = vmatprep.subr.mxu0 0.0
        %2892 = vmatpush2.msra.mxu0 0.0
        %2893 = vmatprep.subr.mxu0 0.0
        %2894 = vmatpush2.msra.mxu0 0.0
        %2895 = vmatprep.subr.mxu0 0.0
        %2896 = vmatpush2.msra.mxu0 0.0
        %2897 = vmatprep.subr.mxu0 0.0
        %2898 = vmatpush2.msra.mxu0 0.0
        %2899 = vmatprep.subr.mxu0 0.0
        %2900 = vmatpush2.msra.mxu0 0.0
        %2901 = vmatprep.subr.mxu0 0.0
        %2902 = vmatpush2.msra.mxu0 0.0
        %2903 = vmatprep.subr.mxu0 0.0
        %2904 = vmatpush2.msra.mxu0 0.0
        %2905 = vmatprep.subr.mxu0 0.0
        %2906 = vmatpush2.msra.mxu0 0.0
        %2907 = vmatprep.subr.mxu0 0.0
        %2908 = vmatpush2.msra.mxu0 0.0
        %2909 = vmatprep.subr.mxu0 0.0
        %2910 = vmatpush2.msra.mxu0 0.0
        %2911 = vmatprep.mubr.f32.mxu0 0.0
        %2912 = vmatmul.mubr.f32.gmra.mxu0 %v2845
        %v2913 = vpop.f32.mrf.mxu0
        %v2914 = vadd.f32 %v2842, %v2913
        %v2915 = vpop.f32.mrf.mxu0
        %2916 = vdwg.mxu0
        %2917 = vst.msk [vmem:[%s1121] sm:$0xff] %vm1896, %v2914
        %s2918 = sand.u32 %s713, 1
        %s2919 = scalar_lea.sflag [#allocation4], %s2918
        %s2920 = sand.u32 %s713, 1
        %s2921 = smul.addr %s2920, 8
        %s2922 = scalar_lea.vmem [#allocation26], %s2921
        // Predicated region
        $region197: #{tpu_custom_call.1} parent=135 // pred_check
          %p2923 = pneg %p723
        $region198: #{tpu_custom_call.1} parent=135 // pred_check_branch
          %2925 = sbr.rel (%p2923) target = $region200
        $region199: #{tpu_custom_call.1} parent=135 // pred_region
          %s2927 = ssub.s32 128, 128
          %2928 = vsyncadd %s2919, %s2927
          %s2929 = smul.addr %s81, 128
          %s2930 = scalar_lea.hbm %s59, %s2929
          %s2932 = sshll.u32 %s2922, 4
          %s2933 = int_to_ptr.vmem [resolvable:$true] %s2932
          %2935 = dma.vmem_to_hbm [thread:$0]  %s2933, 128, %s2930, %s2919
        $region200: #{tpu_custom_call.1} parent=135 // pred_fallthru
          _
      $region136: #{tpu_custom_call.1} parent=5 // pred_fallthru
        _
      %p2936 = scmp.le.s32.totalorder 2, %s76
      // Predicated region
      $region201: #{tpu_custom_call.1} parent=5 // pred_check
        %p2937 = pneg %p2936
      $region202: #{tpu_custom_call.1} parent=5 // pred_check_branch
        %2939 = sbr.rel (%p2937) target = $region204
      $region203: #{tpu_custom_call.1} parent=5 // pred_region
        %s2940 = ssub.s32 %s76, 2
        // Predicated region
        $region205: #{tpu_custom_call.1} parent=203 // pred_check
          %p2941 = pneg %p729
        $region206: #{tpu_custom_call.1} parent=203 // pred_check_branch
          %2943 = sbr.rel (%p2941) target = $region208
        $region207: #{tpu_custom_call.1} parent=203 // pred_region
          %s2944 = sand.u32 %s714, 1
          %s2945 = scalar_lea.sflag [#allocation4], %s2944
          %s2946 = sand.u32 %s714, 1
          %s2947 = smul.addr %s2946, 8
          %s2948 = scalar_lea.vmem [#allocation26], %s2947
          %2949 = dma.done %s2945, 128
        $region208: #{tpu_custom_call.1} parent=203 // pred_fallthru
          _
      $region204: #{tpu_custom_call.1} parent=5 // pred_fallthru
        _
    $region6: #{tpu_custom_call.1} parent=1 // loop_footer
      %s80 = sadd.s32 1, %s76
    $region7: #{tpu_custom_call.1} parent=1 // loop_footer_branch
      %75 = sbr.rel target = $region3
    $region8: #{tpu_custom_call.1} parent=1 // loop_exit
      _
    %2950 = vsyncpa [#allocation3], 1
    %s2951 = scalar_lea.sflag [#allocation3], 1
    %2952 = vsyncpa %s2951, 1
    %2953 = vsyncpa [#allocation6], 1
    %2954 = vsyncpa [#allocation9], 1
    %2955 = vsyncpa [#allocation12], 1
    %2956 = vsyncpa [#allocation15], 1
    %2957 = vsyncpa [#allocation18], 1
    %2958 = vsyncpa [#allocation21], 1
    %2959 = vsyncpa [#allocation24], 1
    %2960 = vsyncpa [#allocation4], 1
    %s2961 = scalar_lea.sflag [#allocation4], 1
    %2962 = vsyncpa %s2961, 1

</llo_original>
